<compile_context>
chip_gen: v5e
topology: v5e:2x2
jax: 0.10.0
libtpu: 0.0.40
codegen_flags: <defaults>
</compile_context>

<pallas_src>
from functools import partial

import jax
import jax.numpy as jnp
from jax.experimental import pallas as pl
from jax.experimental.pallas import tpu as pltpu

_HALO_BLOCK = 8  # row-block size used to fetch the 2 halo rows (multiple of 8)


def _skip_conv_kernel(a_ref, h_ref, w_ref, b_ref, out_ref, *,
                      c_in, c_out, tile_h, width):
    """One (batch, row-chunk) tile: fused 3x3 conv + bias + ReLU + channel concat.

    a_ref   : (1, C_in, TILE_H, W+2)  padded rows [i*TILE_H, (i+1)*TILE_H)
    h_ref   : (1, C_in, 8,      W+2)  next 8 padded rows (only rows 0,1 used)
    w_ref   : (9, C_out, C_in)        w_ref[3*kh+kw] == torch weight[:, :, kh, kw]
    b_ref   : (C_out, 1)
    out_ref : (1, C_in+C_out, TILE_H*W)  channels-first, spatially flattened
    """

    def padded_row(rho):                        # rho in [0, tile_h+2), static
        if rho < tile_h:
            return a_ref[0, :, rho, :]          # (C_in, W+2)
        return h_ref[0, :, rho - tile_h, :]     # halo rows below the tile

    for r in range(tile_h):                     # static unroll over output rows
        rows = (padded_row(r), padded_row(r + 1), padded_row(r + 2))

        # Skip-connection passthrough: x is the centre of the conv window that
        # is already in VMEM, so it is never re-read from HBM just to be copied.
        out_ref[0, :c_in, r * width:(r + 1) * width] = (
            rows[1][:, 1:width + 1].astype(out_ref.dtype))

        acc = jnp.zeros((c_out, width), jnp.float32)
        for kh in range(3):
            for kw in range(3):
                xs = rows[kh][:, kw:kw + width]              # (C_in, W)
                acc = acc + jnp.dot(w_ref[3 * kh + kw], xs,
                                    preferred_element_type=jnp.float32)
        y = jnp.maximum(acc + b_ref[...], 0.0)               # (C_out, W)
        out_ref[0, c_in:, r * width:(r + 1) * width] = y.astype(out_ref.dtype)


def _pick_tile_h(H, W):
    """Smallest row-tile that is a multiple of 8 and gives a 128-lane-dense
    output block (TILE_H*W % 128 == 0); falls back to the full height."""
    for th in (8, 16, 32, 64, 128):
        if th > H:
            break
        if H % th == 0 and (th * W) % 128 == 0:
            return th
    if H % 8 == 0:
        return H  # single row tile per image: out block last dim == H*W (always legal)
    raise ValueError(f"Unsupported spatial shape for this kernel: H={H}, W={W}")


@partial(jax.jit, static_argnames=("tile_h",))
def pass2nd_skip_connection(x_nchw, passed, weight, bias, *, tile_h=None):
    """Forward of Pass2ndSkipConnection(Pass2nd(Conv3x3+ReLU)), cat_dim=1 (NCHW)."""
    N, C, H, W = x_nchw.shape
    C_out = weight.shape[0]
    C_total = C + C_out

    TH = _pick_tile_h(H, W) if tile_h is None else tile_h
    if H % TH or TH % 8 or not ((TH * W) % 128 == 0 or TH == H):
        raise ValueError(f"Invalid tile_h={TH} for H={H}, W={W}")
    n_row_tiles = H // TH
    Wp = W + 2

    # Zero-pad spatially; layout stays NCHW (no transpose of the big activation).
    xp = jnp.pad(x_nchw, ((0, 0), (0, 0), (1, 1), (1, 1)))        # (N, C, H+2, W+2)

    # torch weight (C_out, C_in, 3, 3) -> (9, C_out, C_in): one small GEMM per tap.
    w_taps = jnp.transpose(weight, (2, 3, 0, 1)).reshape(9, C_out, C)
    b_col = bias.reshape(C_out, 1).astype(jnp.float32)

    kernel = partial(_skip_conv_kernel, c_in=C, c_out=C_out, tile_h=TH, width=W)

    out_flat = pl.pallas_call(
        kernel,
        out_shape=jax.ShapeDtypeStruct((N, C_total, H * W), x_nchw.dtype),
        grid=(N, n_row_tiles),
        in_specs=[
            # TILE_H padded rows of this tile.
            pl.BlockSpec((1, C, TH, Wp), lambda n, i: (n, 0, i, 0)),
            # The following 8-row block of the same padded image; only its first
            # 2 rows are used (bottom halo).  Partial edge block at the image
            # bottom is fine (those extra rows are never read in-kernel).
            pl.BlockSpec((1, C, _HALO_BLOCK, Wp),
                         lambda n, i: (n, 0, (i + 1) * (TH // _HALO_BLOCK), 0)),
            # Weights / bias: constant block index -> stay resident in VMEM.
            pl.BlockSpec((9, C_out, C), lambda n, i: (0, 0, 0)),
            pl.BlockSpec((C_out, 1), lambda n, i: (0, 0)),
        ],
        out_specs=pl.BlockSpec((1, C_total, TH * W), lambda n, i: (n, 0, i)),
        compiler_params=pltpu.CompilerParams(
            dimension_semantics=("parallel", "parallel")),
    )(xp, xp, w_taps, b_col)

    # Free (metadata-only) reshape: already channels-first == torch.cat([x, y], dim=1).
    skip_nchw = out_flat.reshape(N, C_total, H, W)
    return skip_nchw, passed


def _reference(x_nchw, passed, weight, bias):
    y = jax.lax.conv_general_dilated(
        x_nchw, weight, window_strides=(1, 1), padding=((1, 1), (1, 1)),
        dimension_numbers=("NCHW", "OIHW", "NCHW"))
    y = jax.nn.relu(y + bias.reshape(1, -1, 1, 1))
    return jnp.concatenate([x_nchw, y], axis=1), passed


if __name__ == "__main__":
    key = jax.random.PRNGKey(0)
    k_x, k_p, k_w, k_b = jax.random.split(key, 4)

    N, C, H, W = 2, 4, 16, 16
    x = jax.random.normal(k_x, (N, C, H, W), dtype=jnp.float32)
    passed = jax.random.normal(k_p, (N, C, H, W), dtype=jnp.float32)

    # Deterministic synthetic Conv2d(C, C, 3, padding=1) parameters.
    weight = jax.random.normal(k_w, (C, C, 3, 3), dtype=jnp.float32) * 0.1
    bias = jax.random.normal(k_b, (C,), dtype=jnp.float32) * 0.1

    skip_out, passed_out = pass2nd_skip_connection(x, passed, weight, bias)
    jax.block_until_ready((skip_out, passed_out))

    ref_skip, ref_passed = _reference(x, passed, weight, bias)
    assert skip_out.shape == (N, 2 * C, H, W)
    assert jnp.allclose(skip_out, ref_skip, atol=1e-5, rtol=1e-5)
    assert jnp.allclose(passed_out, ref_passed)

    print("KERNEL_OK")
</pallas_src>

<mosaic_0001>
module attributes {stable_mosaic.version = 11 : i64} {
  func.func @_skip_conv_kernel(%arg0: i32, %arg1: i32, %arg2: memref<1x4x8x18xf32, #tpu.memory_space<vmem>>, %arg3: memref<1x4x8x18xf32, #tpu.memory_space<vmem>>, %arg4: memref<9x4x4xf32, #tpu.memory_space<vmem>>, %arg5: memref<4x1xf32, #tpu.memory_space<vmem>>, %arg6: memref<1x8x128xf32, #tpu.memory_space<vmem>>) attributes {dimension_semantics = [#tpu.dimension_semantics<parallel>, #tpu.dimension_semantics<parallel>], iteration_bounds = array<i64: 2, 2>, scalar_prefetch = 0 : i64, scratch_operands = 0 : i64, tpu.core_type = #tpu.core_type<tc>, window_params = [{transform_indices = @transform_0, window_bounds = array<i64: 1, 4, 8, 18>}, {transform_indices = @transform_1, window_bounds = array<i64: 1, 4, 8, 18>}, {pipeline_mode = #tpu.pipeline_mode<synchronous>, transform_indices = @transform_2, window_bounds = array<i64: 9, 4, 4>}, {pipeline_mode = #tpu.pipeline_mode<synchronous>, transform_indices = @transform_3, window_bounds = array<i64: 4, 1>}, {transform_indices = @transform_4, window_bounds = array<i64: 1, 8, 128>}]} {
    %c0 = arith.constant 0 : index
    %c0_0 = arith.constant 0 : index
    %c0_1 = arith.constant 0 : index
    %c0_2 = arith.constant 0 : index
    %0 = vector.load %arg2[%c0, %c0_0, %c0_1, %c0_2] : memref<1x4x8x18xf32, #tpu.memory_space<vmem>>, vector<1x4x1x18xf32>
    %1 = vector.shape_cast %0 : vector<1x4x1x18xf32> to vector<4x18xf32>
    %c0_3 = arith.constant 0 : index
    %c0_4 = arith.constant 0 : index
    %c1 = arith.constant 1 : index
    %c0_5 = arith.constant 0 : index
    %2 = vector.load %arg2[%c0_3, %c0_4, %c1, %c0_5] : memref<1x4x8x18xf32, #tpu.memory_space<vmem>>, vector<1x4x1x18xf32>
    %3 = vector.shape_cast %2 : vector<1x4x1x18xf32> to vector<4x18xf32>
    %c0_6 = arith.constant 0 : index
    %c0_7 = arith.constant 0 : index
    %c2 = arith.constant 2 : index
    %c0_8 = arith.constant 0 : index
    %4 = vector.load %arg2[%c0_6, %c0_7, %c2, %c0_8] : memref<1x4x8x18xf32, #tpu.memory_space<vmem>>, vector<1x4x1x18xf32>
    %5 = vector.shape_cast %4 : vector<1x4x1x18xf32> to vector<4x18xf32>
    %6 = vector.extract_strided_slice %3 {offsets = [0, 1], sizes = [4, 16], strides = [1, 1]} : vector<4x18xf32> to vector<4x16xf32>
    %c0_9 = arith.constant 0 : index
    %c0_10 = arith.constant 0 : index
    %c0_11 = arith.constant 0 : index
    %7 = vector.load %arg6[%c0_9, %c0_10, %c0_11] : memref<1x8x128xf32, #tpu.memory_space<vmem>>, vector<1x4x16xf32>
    %8 = vector.shape_cast %7 : vector<1x4x16xf32> to vector<4x16xf32>
    %9 = vector.shape_cast %6 : vector<4x16xf32> to vector<1x4x16xf32>
    tpu.vector_store %arg6[%c0_9, %c0_10, %c0_11], %9 {strides = array<i32>} : memref<1x8x128xf32, #tpu.memory_space<vmem>>, vector<1x4x16xf32>,
    %cst = arith.constant 0.000000e+00 : f32
    %10 = vector.broadcast %cst : f32 to vector<4x16xf32>
    %11 = vector.extract_strided_slice %1 {offsets = [0, 0], sizes = [4, 16], strides = [1, 1]} : vector<4x18xf32> to vector<4x16xf32>
    %c0_12 = arith.constant 0 : index
    %c0_13 = arith.constant 0 : index
    %c0_14 = arith.constant 0 : index
    %12 = vector.load %arg4[%c0_12, %c0_13, %c0_14] : memref<9x4x4xf32, #tpu.memory_space<vmem>>, vector<1x4x4xf32>
    %13 = vector.shape_cast %12 : vector<1x4x4xf32> to vector<4x4xf32>
    %cst_15 = arith.constant dense<0.000000e+00> : vector<4x16xf32>
    %14 = tpu.matmul %13, %11, %cst_15 {dimension_numbers = #tpu.dot_dimension_numbers<[1], [0], [0], [1], [0, 0, 1, 1], [], []>} : vector<4x4xf32>, vector<4x16xf32>, vector<4x16xf32> -> vector<4x16xf32>
    %15 = arith.addf %10, %14 : vector<4x16xf32>
    %16 = vector.extract_strided_slice %1 {offsets = [0, 1], sizes = [4, 16], strides = [1, 1]} : vector<4x18xf32> to vector<4x16xf32>
    %c1_16 = arith.constant 1 : index
    %c0_17 = arith.constant 0 : index
    %c0_18 = arith.constant 0 : index
    %17 = vector.load %arg4[%c1_16, %c0_17, %c0_18] : memref<9x4x4xf32, #tpu.memory_space<vmem>>, vector<1x4x4xf32>
    %18 = vector.shape_cast %17 : vector<1x4x4xf32> to vector<4x4xf32>
    %cst_19 = arith.constant dense<0.000000e+00> : vector<4x16xf32>
    %19 = tpu.matmul %18, %16, %cst_19 {dimension_numbers = #tpu.dot_dimension_numbers<[1], [0], [0], [1], [0, 0, 1, 1], [], []>} : vector<4x4xf32>, vector<4x16xf32>, vector<4x16xf32> -> vector<4x16xf32>
    %20 = arith.addf %15, %19 : vector<4x16xf32>
    %21 = vector.extract_strided_slice %1 {offsets = [0, 2], sizes = [4, 16], strides = [1, 1]} : vector<4x18xf32> to vector<4x16xf32>
    %c2_20 = arith.constant 2 : index
    %c0_21 = arith.constant 0 : index
    %c0_22 = arith.constant 0 : index
    %22 = vector.load %arg4[%c2_20, %c0_21, %c0_22] : memref<9x4x4xf32, #tpu.memory_space<vmem>>, vector<1x4x4xf32>
    %23 = vector.shape_cast %22 : vector<1x4x4xf32> to vector<4x4xf32>
    %cst_23 = arith.constant dense<0.000000e+00> : vector<4x16xf32>
    %24 = tpu.matmul %23, %21, %cst_23 {dimension_numbers = #tpu.dot_dimension_numbers<[1], [0], [0], [1], [0, 0, 1, 1], [], []>} : vector<4x4xf32>, vector<4x16xf32>, vector<4x16xf32> -> vector<4x16xf32>
    %25 = arith.addf %20, %24 : vector<4x16xf32>
    %26 = vector.extract_strided_slice %3 {offsets = [0, 0], sizes = [4, 16], strides = [1, 1]} : vector<4x18xf32> to vector<4x16xf32>
    %c3 = arith.constant 3 : index
    %c0_24 = arith.constant 0 : index
    %c0_25 = arith.constant 0 : index
    %27 = vector.load %arg4[%c3, %c0_24, %c0_25] : memref<9x4x4xf32, #tpu.memory_space<vmem>>, vector<1x4x4xf32>
    %28 = vector.shape_cast %27 : vector<1x4x4xf32> to vector<4x4xf32>
    %cst_26 = arith.constant dense<0.000000e+00> : vector<4x16xf32>
    %29 = tpu.matmul %28, %26, %cst_26 {dimension_numbers = #tpu.dot_dimension_numbers<[1], [0], [0], [1], [0, 0, 1, 1], [], []>} : vector<4x4xf32>, vector<4x16xf32>, vector<4x16xf32> -> vector<4x16xf32>
    %30 = arith.addf %25, %29 : vector<4x16xf32>
    %31 = vector.extract_strided_slice %3 {offsets = [0, 1], sizes = [4, 16], strides = [1, 1]} : vector<4x18xf32> to vector<4x16xf32>
    %c4 = arith.constant 4 : index
    %c0_27 = arith.constant 0 : index
    %c0_28 = arith.constant 0 : index
    %32 = vector.load %arg4[%c4, %c0_27, %c0_28] : memref<9x4x4xf32, #tpu.memory_space<vmem>>, vector<1x4x4xf32>
    %33 = vector.shape_cast %32 : vector<1x4x4xf32> to vector<4x4xf32>
    %cst_29 = arith.constant dense<0.000000e+00> : vector<4x16xf32>
    %34 = tpu.matmul %33, %31, %cst_29 {dimension_numbers = #tpu.dot_dimension_numbers<[1], [0], [0], [1], [0, 0, 1, 1], [], []>} : vector<4x4xf32>, vector<4x16xf32>, vector<4x16xf32> -> vector<4x16xf32>
    %35 = arith.addf %30, %34 : vector<4x16xf32>
    %36 = vector.extract_strided_slice %3 {offsets = [0, 2], sizes = [4, 16], strides = [1, 1]} : vector<4x18xf32> to vector<4x16xf32>
    %c5 = arith.constant 5 : index
    %c0_30 = arith.constant 0 : index
    %c0_31 = arith.constant 0 : index
    %37 = vector.load %arg4[%c5, %c0_30, %c0_31] : memref<9x4x4xf32, #tpu.memory_space<vmem>>, vector<1x4x4xf32>
    %38 = vector.shape_cast %37 : vector<1x4x4xf32> to vector<4x4xf32>
    %cst_32 = arith.constant dense<0.000000e+00> : vector<4x16xf32>
    %39 = tpu.matmul %38, %36, %cst_32 {dimension_numbers = #tpu.dot_dimension_numbers<[1], [0], [0], [1], [0, 0, 1, 1], [], []>} : vector<4x4xf32>, vector<4x16xf32>, vector<4x16xf32> -> vector<4x16xf32>
    %40 = arith.addf %35, %39 : vector<4x16xf32>
    %41 = vector.extract_strided_slice %5 {offsets = [0, 0], sizes = [4, 16], strides = [1, 1]} : vector<4x18xf32> to vector<4x16xf32>
    %c6 = arith.constant 6 : index
    %c0_33 = arith.constant 0 : index
    %c0_34 = arith.constant 0 : index
    %42 = vector.load %arg4[%c6, %c0_33, %c0_34] : memref<9x4x4xf32, #tpu.memory_space<vmem>>, vector<1x4x4xf32>
    %43 = vector.shape_cast %42 : vector<1x4x4xf32> to vector<4x4xf32>
    %cst_35 = arith.constant dense<0.000000e+00> : vector<4x16xf32>
    %44 = tpu.matmul %43, %41, %cst_35 {dimension_numbers = #tpu.dot_dimension_numbers<[1], [0], [0], [1], [0, 0, 1, 1], [], []>} : vector<4x4xf32>, vector<4x16xf32>, vector<4x16xf32> -> vector<4x16xf32>
    %45 = arith.addf %40, %44 : vector<4x16xf32>
    %46 = vector.extract_strided_slice %5 {offsets = [0, 1], sizes = [4, 16], strides = [1, 1]} : vector<4x18xf32> to vector<4x16xf32>
    %c7 = arith.constant 7 : index
    %c0_36 = arith.constant 0 : index
    %c0_37 = arith.constant 0 : index
    %47 = vector.load %arg4[%c7, %c0_36, %c0_37] : memref<9x4x4xf32, #tpu.memory_space<vmem>>, vector<1x4x4xf32>
    %48 = vector.shape_cast %47 : vector<1x4x4xf32> to vector<4x4xf32>
    %cst_38 = arith.constant dense<0.000000e+00> : vector<4x16xf32>
    %49 = tpu.matmul %48, %46, %cst_38 {dimension_numbers = #tpu.dot_dimension_numbers<[1], [0], [0], [1], [0, 0, 1, 1], [], []>} : vector<4x4xf32>, vector<4x16xf32>, vector<4x16xf32> -> vector<4x16xf32>
    %50 = arith.addf %45, %49 : vector<4x16xf32>
    %51 = vector.extract_strided_slice %5 {offsets = [0, 2], sizes = [4, 16], strides = [1, 1]} : vector<4x18xf32> to vector<4x16xf32>
    %c8 = arith.constant 8 : index
    %c0_39 = arith.constant 0 : index
    %c0_40 = arith.constant 0 : index
    %52 = vector.load %arg4[%c8, %c0_39, %c0_40] : memref<9x4x4xf32, #tpu.memory_space<vmem>>, vector<1x4x4xf32>
    %53 = vector.shape_cast %52 : vector<1x4x4xf32> to vector<4x4xf32>
    %cst_41 = arith.constant dense<0.000000e+00> : vector<4x16xf32>
    %54 = tpu.matmul %53, %51, %cst_41 {dimension_numbers = #tpu.dot_dimension_numbers<[1], [0], [0], [1], [0, 0, 1, 1], [], []>} : vector<4x4xf32>, vector<4x16xf32>, vector<4x16xf32> -> vector<4x16xf32>
    %55 = arith.addf %50, %54 : vector<4x16xf32>
    %c0_42 = arith.constant 0 : index
    %c0_43 = arith.constant 0 : index
    %56 = vector.load %arg5[%c0_42, %c0_43] : memref<4x1xf32, #tpu.memory_space<vmem>>, vector<4x1xf32>
    %57 = vector.broadcast %56 : vector<4x1xf32> to vector<4x16xf32>
    %58 = arith.addf %55, %57 : vector<4x16xf32>
    %cst_44 = arith.constant 0.000000e+00 : f32
    %59 = vector.broadcast %cst_44 : f32 to vector<4x16xf32>
    %60 = arith.maximumf %58, %59 : vector<4x16xf32>
    %c0_45 = arith.constant 0 : index
    %c4_46 = arith.constant 4 : index
    %c0_47 = arith.constant 0 : index
    %61 = vector.load %arg6[%c0_45, %c4_46, %c0_47] : memref<1x8x128xf32, #tpu.memory_space<vmem>>, vector<1x4x16xf32>
    %62 = vector.shape_cast %61 : vector<1x4x16xf32> to vector<4x16xf32>
    %63 = vector.shape_cast %60 : vector<4x16xf32> to vector<1x4x16xf32>
    tpu.vector_store %arg6[%c0_45, %c4_46, %c0_47], %63 {strides = array<i32>} : memref<1x8x128xf32, #tpu.memory_space<vmem>>, vector<1x4x16xf32>,
    %c0_48 = arith.constant 0 : index
    %c0_49 = arith.constant 0 : index
    %c1_50 = arith.constant 1 : index
    %c0_51 = arith.constant 0 : index
    %64 = vector.load %arg2[%c0_48, %c0_49, %c1_50, %c0_51] : memref<1x4x8x18xf32, #tpu.memory_space<vmem>>, vector<1x4x1x18xf32>
    %65 = vector.shape_cast %64 : vector<1x4x1x18xf32> to vector<4x18xf32>
    %c0_52 = arith.constant 0 : index
    %c0_53 = arith.constant 0 : index
    %c2_54 = arith.constant 2 : index
    %c0_55 = arith.constant 0 : index
    %66 = vector.load %arg2[%c0_52, %c0_53, %c2_54, %c0_55] : memref<1x4x8x18xf32, #tpu.memory_space<vmem>>, vector<1x4x1x18xf32>
    %67 = vector.shape_cast %66 : vector<1x4x1x18xf32> to vector<4x18xf32>
    %c0_56 = arith.constant 0 : index
    %c0_57 = arith.constant 0 : index
    %c3_58 = arith.constant 3 : index
    %c0_59 = arith.constant 0 : index
    %68 = vector.load %arg2[%c0_56, %c0_57, %c3_58, %c0_59] : memref<1x4x8x18xf32, #tpu.memory_space<vmem>>, vector<1x4x1x18xf32>
    %69 = vector.shape_cast %68 : vector<1x4x1x18xf32> to vector<4x18xf32>
    %70 = vector.extract_strided_slice %67 {offsets = [0, 1], sizes = [4, 16], strides = [1, 1]} : vector<4x18xf32> to vector<4x16xf32>
    %c0_60 = arith.constant 0 : index
    %c0_61 = arith.constant 0 : index
    %c16 = arith.constant 16 : index
    %71 = vector.load %arg6[%c0_60, %c0_61, %c16] : memref<1x8x128xf32, #tpu.memory_space<vmem>>, vector<1x4x16xf32>
    %72 = vector.shape_cast %71 : vector<1x4x16xf32> to vector<4x16xf32>
    %73 = vector.shape_cast %70 : vector<4x16xf32> to vector<1x4x16xf32>
    tpu.vector_store %arg6[%c0_60, %c0_61, %c16], %73 {strides = array<i32>} : memref<1x8x128xf32, #tpu.memory_space<vmem>>, vector<1x4x16xf32>,
    %cst_62 = arith.constant 0.000000e+00 : f32
    %74 = vector.broadcast %cst_62 : f32 to vector<4x16xf32>
    %75 = vector.extract_strided_slice %65 {offsets = [0, 0], sizes = [4, 16], strides = [1, 1]} : vector<4x18xf32> to vector<4x16xf32>
    %c0_63 = arith.constant 0 : index
    %c0_64 = arith.constant 0 : index
    %c0_65 = arith.constant 0 : index
    %76 = vector.load %arg4[%c0_63, %c0_64, %c0_65] : memref<9x4x4xf32, #tpu.memory_space<vmem>>, vector<1x4x4xf32>
    %77 = vector.shape_cast %76 : vector<1x4x4xf32> to vector<4x4xf32>
    %cst_66 = arith.constant dense<0.000000e+00> : vector<4x16xf32>
    %78 = tpu.matmul %77, %75, %cst_66 {dimension_numbers = #tpu.dot_dimension_numbers<[1], [0], [0], [1], [0, 0, 1, 1], [], []>} : vector<4x4xf32>, vector<4x16xf32>, vector<4x16xf32> -> vector<4x16xf32>
    %79 = arith.addf %74, %78 : vector<4x16xf32>
    %80 = vector.extract_strided_slice %65 {offsets = [0, 1], sizes = [4, 16], strides = [1, 1]} : vector<4x18xf32> to vector<4x16xf32>
    %c1_67 = arith.constant 1 : index
    %c0_68 = arith.constant 0 : index
    %c0_69 = arith.constant 0 : index
    %81 = vector.load %arg4[%c1_67, %c0_68, %c0_69] : memref<9x4x4xf32, #tpu.memory_space<vmem>>, vector<1x4x4xf32>
    %82 = vector.shape_cast %81 : vector<1x4x4xf32> to vector<4x4xf32>
    %cst_70 = arith.constant dense<0.000000e+00> : vector<4x16xf32>
    %83 = tpu.matmul %82, %80, %cst_70 {dimension_numbers = #tpu.dot_dimension_numbers<[1], [0], [0], [1], [0, 0, 1, 1], [], []>} : vector<4x4xf32>, vector<4x16xf32>, vector<4x16xf32> -> vector<4x16xf32>
    %84 = arith.addf %79, %83 : vector<4x16xf32>
    %85 = vector.extract_strided_slice %65 {offsets = [0, 2], sizes = [4, 16], strides = [1, 1]} : vector<4x18xf32> to vector<4x16xf32>
    %c2_71 = arith.constant 2 : index
    %c0_72 = arith.constant 0 : index
    %c0_73 = arith.constant 0 : index
    %86 = vector.load %arg4[%c2_71, %c0_72, %c0_73] : memref<9x4x4xf32, #tpu.memory_space<vmem>>, vector<1x4x4xf32>
    %87 = vector.shape_cast %86 : vector<1x4x4xf32> to vector<4x4xf32>
    %cst_74 = arith.constant dense<0.000000e+00> : vector<4x16xf32>
    %88 = tpu.matmul %87, %85, %cst_74 {dimension_numbers = #tpu.dot_dimension_numbers<[1], [0], [0], [1], [0, 0, 1, 1], [], []>} : vector<4x4xf32>, vector<4x16xf32>, vector<4x16xf32> -> vector<4x16xf32>
    %89 = arith.addf %84, %88 : vector<4x16xf32>
    %90 = vector.extract_strided_slice %67 {offsets = [0, 0], sizes = [4, 16], strides = [1, 1]} : vector<4x18xf32> to vector<4x16xf32>
    %c3_75 = arith.constant 3 : index
    %c0_76 = arith.constant 0 : index
    %c0_77 = arith.constant 0 : index
    %91 = vector.load %arg4[%c3_75, %c0_76, %c0_77] : memref<9x4x4xf32, #tpu.memory_space<vmem>>, vector<1x4x4xf32>
    %92 = vector.shape_cast %91 : vector<1x4x4xf32> to vector<4x4xf32>
    %cst_78 = arith.constant dense<0.000000e+00> : vector<4x16xf32>
    %93 = tpu.matmul %92, %90, %cst_78 {dimension_numbers = #tpu.dot_dimension_numbers<[1], [0], [0], [1], [0, 0, 1, 1], [], []>} : vector<4x4xf32>, vector<4x16xf32>, vector<4x16xf32> -> vector<4x16xf32>
    %94 = arith.addf %89, %93 : vector<4x16xf32>
    %95 = vector.extract_strided_slice %67 {offsets = [0, 1], sizes = [4, 16], strides = [1, 1]} : vector<4x18xf32> to vector<4x16xf32>
    %c4_79 = arith.constant 4 : index
    %c0_80 = arith.constant 0 : index
    %c0_81 = arith.constant 0 : index
    %96 = vector.load %arg4[%c4_79, %c0_80, %c0_81] : memref<9x4x4xf32, #tpu.memory_space<vmem>>, vector<1x4x4xf32>
    %97 = vector.shape_cast %96 : vector<1x4x4xf32> to vector<4x4xf32>
    %cst_82 = arith.constant dense<0.000000e+00> : vector<4x16xf32>
    %98 = tpu.matmul %97, %95, %cst_82 {dimension_numbers = #tpu.dot_dimension_numbers<[1], [0], [0], [1], [0, 0, 1, 1], [], []>} : vector<4x4xf32>, vector<4x16xf32>, vector<4x16xf32> -> vector<4x16xf32>
    %99 = arith.addf %94, %98 : vector<4x16xf32>
    %100 = vector.extract_strided_slice %67 {offsets = [0, 2], sizes = [4, 16], strides = [1, 1]} : vector<4x18xf32> to vector<4x16xf32>
    %c5_83 = arith.constant 5 : index
    %c0_84 = arith.constant 0 : index
    %c0_85 = arith.constant 0 : index
    %101 = vector.load %arg4[%c5_83, %c0_84, %c0_85] : memref<9x4x4xf32, #tpu.memory_space<vmem>>, vector<1x4x4xf32>
    %102 = vector.shape_cast %101 : vector<1x4x4xf32> to vector<4x4xf32>
    %cst_86 = arith.constant dense<0.000000e+00> : vector<4x16xf32>
    %103 = tpu.matmul %102, %100, %cst_86 {dimension_numbers = #tpu.dot_dimension_numbers<[1], [0], [0], [1], [0, 0, 1, 1], [], []>} : vector<4x4xf32>, vector<4x16xf32>, vector<4x16xf32> -> vector<4x16xf32>
    %104 = arith.addf %99, %103 : vector<4x16xf32>
    %105 = vector.extract_strided_slice %69 {offsets = [0, 0], sizes = [4, 16], strides = [1, 1]} : vector<4x18xf32> to vector<4x16xf32>
    %c6_87 = arith.constant 6 : index
    %c0_88 = arith.constant 0 : index
    %c0_89 = arith.constant 0 : index
    %106 = vector.load %arg4[%c6_87, %c0_88, %c0_89] : memref<9x4x4xf32, #tpu.memory_space<vmem>>, vector<1x4x4xf32>
    %107 = vector.shape_cast %106 : vector<1x4x4xf32> to vector<4x4xf32>
    %cst_90 = arith.constant dense<0.000000e+00> : vector<4x16xf32>
    %108 = tpu.matmul %107, %105, %cst_90 {dimension_numbers = #tpu.dot_dimension_numbers<[1], [0], [0], [1], [0, 0, 1, 1], [], []>} : vector<4x4xf32>, vector<4x16xf32>, vector<4x16xf32> -> vector<4x16xf32>
    %109 = arith.addf %104, %108 : vector<4x16xf32>
    %110 = vector.extract_strided_slice %69 {offsets = [0, 1], sizes = [4, 16], strides = [1, 1]} : vector<4x18xf32> to vector<4x16xf32>
    %c7_91 = arith.constant 7 : index
    %c0_92 = arith.constant 0 : index
    %c0_93 = arith.constant 0 : index
    %111 = vector.load %arg4[%c7_91, %c0_92, %c0_93] : memref<9x4x4xf32, #tpu.memory_space<vmem>>, vector<1x4x4xf32>
    %112 = vector.shape_cast %111 : vector<1x4x4xf32> to vector<4x4xf32>
    %cst_94 = arith.constant dense<0.000000e+00> : vector<4x16xf32>
    %113 = tpu.matmul %112, %110, %cst_94 {dimension_numbers = #tpu.dot_dimension_numbers<[1], [0], [0], [1], [0, 0, 1, 1], [], []>} : vector<4x4xf32>, vector<4x16xf32>, vector<4x16xf32> -> vector<4x16xf32>
    %114 = arith.addf %109, %113 : vector<4x16xf32>
    %115 = vector.extract_strided_slice %69 {offsets = [0, 2], sizes = [4, 16], strides = [1, 1]} : vector<4x18xf32> to vector<4x16xf32>
    %c8_95 = arith.constant 8 : index
    %c0_96 = arith.constant 0 : index
    %c0_97 = arith.constant 0 : index
    %116 = vector.load %arg4[%c8_95, %c0_96, %c0_97] : memref<9x4x4xf32, #tpu.memory_space<vmem>>, vector<1x4x4xf32>
    %117 = vector.shape_cast %116 : vector<1x4x4xf32> to vector<4x4xf32>
    %cst_98 = arith.constant dense<0.000000e+00> : vector<4x16xf32>
    %118 = tpu.matmul %117, %115, %cst_98 {dimension_numbers = #tpu.dot_dimension_numbers<[1], [0], [0], [1], [0, 0, 1, 1], [], []>} : vector<4x4xf32>, vector<4x16xf32>, vector<4x16xf32> -> vector<4x16xf32>
    %119 = arith.addf %114, %118 : vector<4x16xf32>
    %c0_99 = arith.constant 0 : index
    %c0_100 = arith.constant 0 : index
    %120 = vector.load %arg5[%c0_99, %c0_100] : memref<4x1xf32, #tpu.memory_space<vmem>>, vector<4x1xf32>
    %121 = vector.broadcast %120 : vector<4x1xf32> to vector<4x16xf32>
    %122 = arith.addf %119, %121 : vector<4x16xf32>
    %cst_101 = arith.constant 0.000000e+00 : f32
    %123 = vector.broadcast %cst_101 : f32 to vector<4x16xf32>
    %124 = arith.maximumf %122, %123 : vector<4x16xf32>
    %c0_102 = arith.constant 0 : index
    %c4_103 = arith.constant 4 : index
    %c16_104 = arith.constant 16 : index
    %125 = vector.load %arg6[%c0_102, %c4_103, %c16_104] : memref<1x8x128xf32, #tpu.memory_space<vmem>>, vector<1x4x16xf32>
    %126 = vector.shape_cast %125 : vector<1x4x16xf32> to vector<4x16xf32>
    %127 = vector.shape_cast %124 : vector<4x16xf32> to vector<1x4x16xf32>
    tpu.vector_store %arg6[%c0_102, %c4_103, %c16_104], %127 {strides = array<i32>} : memref<1x8x128xf32, #tpu.memory_space<vmem>>, vector<1x4x16xf32>,
    %c0_105 = arith.constant 0 : index
    %c0_106 = arith.constant 0 : index
    %c2_107 = arith.constant 2 : index
    %c0_108 = arith.constant 0 : index
    %128 = vector.load %arg2[%c0_105, %c0_106, %c2_107, %c0_108] : memref<1x4x8x18xf32, #tpu.memory_space<vmem>>, vector<1x4x1x18xf32>
    %129 = vector.shape_cast %128 : vector<1x4x1x18xf32> to vector<4x18xf32>
    %c0_109 = arith.constant 0 : index
    %c0_110 = arith.constant 0 : index
    %c3_111 = arith.constant 3 : index
    %c0_112 = arith.constant 0 : index
    %130 = vector.load %arg2[%c0_109, %c0_110, %c3_111, %c0_112] : memref<1x4x8x18xf32, #tpu.memory_space<vmem>>, vector<1x4x1x18xf32>
    %131 = vector.shape_cast %130 : vector<1x4x1x18xf32> to vector<4x18xf32>
    %c0_113 = arith.constant 0 : index
    %c0_114 = arith.constant 0 : index
    %c4_115 = arith.constant 4 : index
    %c0_116 = arith.constant 0 : index
    %132 = vector.load %arg2[%c0_113, %c0_114, %c4_115, %c0_116] : memref<1x4x8x18xf32, #tpu.memory_space<vmem>>, vector<1x4x1x18xf32>
    %133 = vector.shape_cast %132 : vector<1x4x1x18xf32> to vector<4x18xf32>
    %134 = vector.extract_strided_slice %131 {offsets = [0, 1], sizes = [4, 16], strides = [1, 1]} : vector<4x18xf32> to vector<4x16xf32>
    %c0_117 = arith.constant 0 : index
    %c0_118 = arith.constant 0 : index
    %c32 = arith.constant 32 : index
    %135 = vector.load %arg6[%c0_117, %c0_118, %c32] : memref<1x8x128xf32, #tpu.memory_space<vmem>>, vector<1x4x16xf32>
    %136 = vector.shape_cast %135 : vector<1x4x16xf32> to vector<4x16xf32>
    %137 = vector.shape_cast %134 : vector<4x16xf32> to vector<1x4x16xf32>
    tpu.vector_store %arg6[%c0_117, %c0_118, %c32], %137 {strides = array<i32>} : memref<1x8x128xf32, #tpu.memory_space<vmem>>, vector<1x4x16xf32>,
    %cst_119 = arith.constant 0.000000e+00 : f32
    %138 = vector.broadcast %cst_119 : f32 to vector<4x16xf32>
    %139 = vector.extract_strided_slice %129 {offsets = [0, 0], sizes = [4, 16], strides = [1, 1]} : vector<4x18xf32> to vector<4x16xf32>
    %c0_120 = arith.constant 0 : index
    %c0_121 = arith.constant 0 : index
    %c0_122 = arith.constant 0 : index
    %140 = vector.load %arg4[%c0_120, %c0_121, %c0_122] : memref<9x4x4xf32, #tpu.memory_space<vmem>>, vector<1x4x4xf32>
    %141 = vector.shape_cast %140 : vector<1x4x4xf32> to vector<4x4xf32>
    %cst_123 = arith.constant dense<0.000000e+00> : vector<4x16xf32>
    %142 = tpu.matmul %141, %139, %cst_123 {dimension_numbers = #tpu.dot_dimension_numbers<[1], [0], [0], [1], [0, 0, 1, 1], [], []>} : vector<4x4xf32>, vector<4x16xf32>, vector<4x16xf32> -> vector<4x16xf32>
    %143 = arith.addf %138, %142 : vector<4x16xf32>
    %144 = vector.extract_strided_slice %129 {offsets = [0, 1], sizes = [4, 16], strides = [1, 1]} : vector<4x18xf32> to vector<4x16xf32>
    %c1_124 = arith.constant 1 : index
    %c0_125 = arith.constant 0 : index
    %c0_126 = arith.constant 0 : index
    %145 = vector.load %arg4[%c1_124, %c0_125, %c0_126] : memref<9x4x4xf32, #tpu.memory_space<vmem>>, vector<1x4x4xf32>
    %146 = vector.shape_cast %145 : vector<1x4x4xf32> to vector<4x4xf32>
    %cst_127 = arith.constant dense<0.000000e+00> : vector<4x16xf32>
    %147 = tpu.matmul %146, %144, %cst_127 {dimension_numbers = #tpu.dot_dimension_numbers<[1], [0], [0], [1], [0, 0, 1, 1], [], []>} : vector<4x4xf32>, vector<4x16xf32>, vector<4x16xf32> -> vector<4x16xf32>
    %148 = arith.addf %143, %147 : vector<4x16xf32>
    %149 = vector.extract_strided_slice %129 {offsets = [0, 2], sizes = [4, 16], strides = [1, 1]} : vector<4x18xf32> to vector<4x16xf32>
    %c2_128 = arith.constant 2 : index
    %c0_129 = arith.constant 0 : index
    %c0_130 = arith.constant 0 : index
    %150 = vector.load %arg4[%c2_128, %c0_129, %c0_130] : memref<9x4x4xf32, #tpu.memory_space<vmem>>, vector<1x4x4xf32>
    %151 = vector.shape_cast %150 : vector<1x4x4xf32> to vector<4x4xf32>
    %cst_131 = arith.constant dense<0.000000e+00> : vector<4x16xf32>
    %152 = tpu.matmul %151, %149, %cst_131 {dimension_numbers = #tpu.dot_dimension_numbers<[1], [0], [0], [1], [0, 0, 1, 1], [], []>} : vector<4x4xf32>, vector<4x16xf32>, vector<4x16xf32> -> vector<4x16xf32>
    %153 = arith.addf %148, %152 : vector<4x16xf32>
    %154 = vector.extract_strided_slice %131 {offsets = [0, 0], sizes = [4, 16], strides = [1, 1]} : vector<4x18xf32> to vector<4x16xf32>
    %c3_132 = arith.constant 3 : index
    %c0_133 = arith.constant 0 : index
    %c0_134 = arith.constant 0 : index
    %155 = vector.load %arg4[%c3_132, %c0_133, %c0_134] : memref<9x4x4xf32, #tpu.memory_space<vmem>>, vector<1x4x4xf32>
    %156 = vector.shape_cast %155 : vector<1x4x4xf32> to vector<4x4xf32>
    %cst_135 = arith.constant dense<0.000000e+00> : vector<4x16xf32>
    %157 = tpu.matmul %156, %154, %cst_135 {dimension_numbers = #tpu.dot_dimension_numbers<[1], [0], [0], [1], [0, 0, 1, 1], [], []>} : vector<4x4xf32>, vector<4x16xf32>, vector<4x16xf32> -> vector<4x16xf32>
    %158 = arith.addf %153, %157 : vector<4x16xf32>
    %159 = vector.extract_strided_slice %131 {offsets = [0, 1], sizes = [4, 16], strides = [1, 1]} : vector<4x18xf32> to vector<4x16xf32>
    %c4_136 = arith.constant 4 : index
    %c0_137 = arith.constant 0 : index
    %c0_138 = arith.constant 0 : index
    %160 = vector.load %arg4[%c4_136, %c0_137, %c0_138] : memref<9x4x4xf32, #tpu.memory_space<vmem>>, vector<1x4x4xf32>
    %161 = vector.shape_cast %160 : vector<1x4x4xf32> to vector<4x4xf32>
    %cst_139 = arith.constant dense<0.000000e+00> : vector<4x16xf32>
    %162 = tpu.matmul %161, %159, %cst_139 {dimension_numbers = #tpu.dot_dimension_numbers<[1], [0], [0], [1], [0, 0, 1, 1], [], []>} : vector<4x4xf32>, vector<4x16xf32>, vector<4x16xf32> -> vector<4x16xf32>
    %163 = arith.addf %158, %162 : vector<4x16xf32>
    %164 = vector.extract_strided_slice %131 {offsets = [0, 2], sizes = [4, 16], strides = [1, 1]} : vector<4x18xf32> to vector<4x16xf32>
    %c5_140 = arith.constant 5 : index
    %c0_141 = arith.constant 0 : index
    %c0_142 = arith.constant 0 : index
    %165 = vector.load %arg4[%c5_140, %c0_141, %c0_142] : memref<9x4x4xf32, #tpu.memory_space<vmem>>, vector<1x4x4xf32>
    %166 = vector.shape_cast %165 : vector<1x4x4xf32> to vector<4x4xf32>
    %cst_143 = arith.constant dense<0.000000e+00> : vector<4x16xf32>
    %167 = tpu.matmul %166, %164, %cst_143 {dimension_numbers = #tpu.dot_dimension_numbers<[1], [0], [0], [1], [0, 0, 1, 1], [], []>} : vector<4x4xf32>, vector<4x16xf32>, vector<4x16xf32> -> vector<4x16xf32>
    %168 = arith.addf %163, %167 : vector<4x16xf32>
    %169 = vector.extract_strided_slice %133 {offsets = [0, 0], sizes = [4, 16], strides = [1, 1]} : vector<4x18xf32> to vector<4x16xf32>
    %c6_144 = arith.constant 6 : index
    %c0_145 = arith.constant 0 : index
    %c0_146 = arith.constant 0 : index
    %170 = vector.load %arg4[%c6_144, %c0_145, %c0_146] : memref<9x4x4xf32, #tpu.memory_space<vmem>>, vector<1x4x4xf32>
    %171 = vector.shape_cast %170 : vector<1x4x4xf32> to vector<4x4xf32>
    %cst_147 = arith.constant dense<0.000000e+00> : vector<4x16xf32>
    %172 = tpu.matmul %171, %169, %cst_147 {dimension_numbers = #tpu.dot_dimension_numbers<[1], [0], [0], [1], [0, 0, 1, 1], [], []>} : vector<4x4xf32>, vector<4x16xf32>, vector<4x16xf32> -> vector<4x16xf32>
    %173 = arith.addf %168, %172 : vector<4x16xf32>
    %174 = vector.extract_strided_slice %133 {offsets = [0, 1], sizes = [4, 16], strides = [1, 1]} : vector<4x18xf32> to vector<4x16xf32>
    %c7_148 = arith.constant 7 : index
    %c0_149 = arith.constant 0 : index
    %c0_150 = arith.constant 0 : index
    %175 = vector.load %arg4[%c7_148, %c0_149, %c0_150] : memref<9x4x4xf32, #tpu.memory_space<vmem>>, vector<1x4x4xf32>
    %176 = vector.shape_cast %175 : vector<1x4x4xf32> to vector<4x4xf32>
    %cst_151 = arith.constant dense<0.000000e+00> : vector<4x16xf32>
    %177 = tpu.matmul %176, %174, %cst_151 {dimension_numbers = #tpu.dot_dimension_numbers<[1], [0], [0], [1], [0, 0, 1, 1], [], []>} : vector<4x4xf32>, vector<4x16xf32>, vector<4x16xf32> -> vector<4x16xf32>
    %178 = arith.addf %173, %177 : vector<4x16xf32>
    %179 = vector.extract_strided_slice %133 {offsets = [0, 2], sizes = [4, 16], strides = [1, 1]} : vector<4x18xf32> to vector<4x16xf32>
    %c8_152 = arith.constant 8 : index
    %c0_153 = arith.constant 0 : index
    %c0_154 = arith.constant 0 : index
    %180 = vector.load %arg4[%c8_152, %c0_153, %c0_154] : memref<9x4x4xf32, #tpu.memory_space<vmem>>, vector<1x4x4xf32>
    %181 = vector.shape_cast %180 : vector<1x4x4xf32> to vector<4x4xf32>
    %cst_155 = arith.constant dense<0.000000e+00> : vector<4x16xf32>
    %182 = tpu.matmul %181, %179, %cst_155 {dimension_numbers = #tpu.dot_dimension_numbers<[1], [0], [0], [1], [0, 0, 1, 1], [], []>} : vector<4x4xf32>, vector<4x16xf32>, vector<4x16xf32> -> vector<4x16xf32>
    %183 = arith.addf %178, %182 : vector<4x16xf32>
    %c0_156 = arith.constant 0 : index
    %c0_157 = arith.constant 0 : index
    %184 = vector.load %arg5[%c0_156, %c0_157] : memref<4x1xf32, #tpu.memory_space<vmem>>, vector<4x1xf32>
    %185 = vector.broadcast %184 : vector<4x1xf32> to vector<4x16xf32>
    %186 = arith.addf %183, %185 : vector<4x16xf32>
    %cst_158 = arith.constant 0.000000e+00 : f32
    %187 = vector.broadcast %cst_158 : f32 to vector<4x16xf32>
    %188 = arith.maximumf %186, %187 : vector<4x16xf32>
    %c0_159 = arith.constant 0 : index
    %c4_160 = arith.constant 4 : index
    %c32_161 = arith.constant 32 : index
    %189 = vector.load %arg6[%c0_159, %c4_160, %c32_161] : memref<1x8x128xf32, #tpu.memory_space<vmem>>, vector<1x4x16xf32>
    %190 = vector.shape_cast %189 : vector<1x4x16xf32> to vector<4x16xf32>
    %191 = vector.shape_cast %188 : vector<4x16xf32> to vector<1x4x16xf32>
    tpu.vector_store %arg6[%c0_159, %c4_160, %c32_161], %191 {strides = array<i32>} : memref<1x8x128xf32, #tpu.memory_space<vmem>>, vector<1x4x16xf32>,
    %c0_162 = arith.constant 0 : index
    %c0_163 = arith.constant 0 : index
    %c3_164 = arith.constant 3 : index
    %c0_165 = arith.constant 0 : index
    %192 = vector.load %arg2[%c0_162, %c0_163, %c3_164, %c0_165] : memref<1x4x8x18xf32, #tpu.memory_space<vmem>>, vector<1x4x1x18xf32>
    %193 = vector.shape_cast %192 : vector<1x4x1x18xf32> to vector<4x18xf32>
    %c0_166 = arith.constant 0 : index
    %c0_167 = arith.constant 0 : index
    %c4_168 = arith.constant 4 : index
    %c0_169 = arith.constant 0 : index
    %194 = vector.load %arg2[%c0_166, %c0_167, %c4_168, %c0_169] : memref<1x4x8x18xf32, #tpu.memory_space<vmem>>, vector<1x4x1x18xf32>
    %195 = vector.shape_cast %194 : vector<1x4x1x18xf32> to vector<4x18xf32>
    %c0_170 = arith.constant 0 : index
    %c0_171 = arith.constant 0 : index
    %c5_172 = arith.constant 5 : index
    %c0_173 = arith.constant 0 : index
    %196 = vector.load %arg2[%c0_170, %c0_171, %c5_172, %c0_173] : memref<1x4x8x18xf32, #tpu.memory_space<vmem>>, vector<1x4x1x18xf32>
    %197 = vector.shape_cast %196 : vector<1x4x1x18xf32> to vector<4x18xf32>
    %198 = vector.extract_strided_slice %195 {offsets = [0, 1], sizes = [4, 16], strides = [1, 1]} : vector<4x18xf32> to vector<4x16xf32>
    %c0_174 = arith.constant 0 : index
    %c0_175 = arith.constant 0 : index
    %c48 = arith.constant 48 : index
    %199 = vector.load %arg6[%c0_174, %c0_175, %c48] : memref<1x8x128xf32, #tpu.memory_space<vmem>>, vector<1x4x16xf32>
    %200 = vector.shape_cast %199 : vector<1x4x16xf32> to vector<4x16xf32>
    %201 = vector.shape_cast %198 : vector<4x16xf32> to vector<1x4x16xf32>
    tpu.vector_store %arg6[%c0_174, %c0_175, %c48], %201 {strides = array<i32>} : memref<1x8x128xf32, #tpu.memory_space<vmem>>, vector<1x4x16xf32>,
    %cst_176 = arith.constant 0.000000e+00 : f32
    %202 = vector.broadcast %cst_176 : f32 to vector<4x16xf32>
    %203 = vector.extract_strided_slice %193 {offsets = [0, 0], sizes = [4, 16], strides = [1, 1]} : vector<4x18xf32> to vector<4x16xf32>
    %c0_177 = arith.constant 0 : index
    %c0_178 = arith.constant 0 : index
    %c0_179 = arith.constant 0 : index
    %204 = vector.load %arg4[%c0_177, %c0_178, %c0_179] : memref<9x4x4xf32, #tpu.memory_space<vmem>>, vector<1x4x4xf32>
    %205 = vector.shape_cast %204 : vector<1x4x4xf32> to vector<4x4xf32>
    %cst_180 = arith.constant dense<0.000000e+00> : vector<4x16xf32>
    %206 = tpu.matmul %205, %203, %cst_180 {dimension_numbers = #tpu.dot_dimension_numbers<[1], [0], [0], [1], [0, 0, 1, 1], [], []>} : vector<4x4xf32>, vector<4x16xf32>, vector<4x16xf32> -> vector<4x16xf32>
    %207 = arith.addf %202, %206 : vector<4x16xf32>
    %208 = vector.extract_strided_slice %193 {offsets = [0, 1], sizes = [4, 16], strides = [1, 1]} : vector<4x18xf32> to vector<4x16xf32>
    %c1_181 = arith.constant 1 : index
    %c0_182 = arith.constant 0 : index
    %c0_183 = arith.constant 0 : index
    %209 = vector.load %arg4[%c1_181, %c0_182, %c0_183] : memref<9x4x4xf32, #tpu.memory_space<vmem>>, vector<1x4x4xf32>
    %210 = vector.shape_cast %209 : vector<1x4x4xf32> to vector<4x4xf32>
    %cst_184 = arith.constant dense<0.000000e+00> : vector<4x16xf32>
    %211 = tpu.matmul %210, %208, %cst_184 {dimension_numbers = #tpu.dot_dimension_numbers<[1], [0], [0], [1], [0, 0, 1, 1], [], []>} : vector<4x4xf32>, vector<4x16xf32>, vector<4x16xf32> -> vector<4x16xf32>
    %212 = arith.addf %207, %211 : vector<4x16xf32>
    %213 = vector.extract_strided_slice %193 {offsets = [0, 2], sizes = [4, 16], strides = [1, 1]} : vector<4x18xf32> to vector<4x16xf32>
    %c2_185 = arith.constant 2 : index
    %c0_186 = arith.constant 0 : index
    %c0_187 = arith.constant 0 : index
    %214 = vector.load %arg4[%c2_185, %c0_186, %c0_187] : memref<9x4x4xf32, #tpu.memory_space<vmem>>, vector<1x4x4xf32>
    %215 = vector.shape_cast %214 : vector<1x4x4xf32> to vector<4x4xf32>
    %cst_188 = arith.constant dense<0.000000e+00> : vector<4x16xf32>
    %216 = tpu.matmul %215, %213, %cst_188 {dimension_numbers = #tpu.dot_dimension_numbers<[1], [0], [0], [1], [0, 0, 1, 1], [], []>} : vector<4x4xf32>, vector<4x16xf32>, vector<4x16xf32> -> vector<4x16xf32>
    %217 = arith.addf %212, %216 : vector<4x16xf32>
    %218 = vector.extract_strided_slice %195 {offsets = [0, 0], sizes = [4, 16], strides = [1, 1]} : vector<4x18xf32> to vector<4x16xf32>
    %c3_189 = arith.constant 3 : index
    %c0_190 = arith.constant 0 : index
    %c0_191 = arith.constant 0 : index
    %219 = vector.load %arg4[%c3_189, %c0_190, %c0_191] : memref<9x4x4xf32, #tpu.memory_space<vmem>>, vector<1x4x4xf32>
    %220 = vector.shape_cast %219 : vector<1x4x4xf32> to vector<4x4xf32>
    %cst_192 = arith.constant dense<0.000000e+00> : vector<4x16xf32>
    %221 = tpu.matmul %220, %218, %cst_192 {dimension_numbers = #tpu.dot_dimension_numbers<[1], [0], [0], [1], [0, 0, 1, 1], [], []>} : vector<4x4xf32>, vector<4x16xf32>, vector<4x16xf32> -> vector<4x16xf32>
    %222 = arith.addf %217, %221 : vector<4x16xf32>
    %223 = vector.extract_strided_slice %195 {offsets = [0, 1], sizes = [4, 16], strides = [1, 1]} : vector<4x18xf32> to vector<4x16xf32>
    %c4_193 = arith.constant 4 : index
    %c0_194 = arith.constant 0 : index
    %c0_195 = arith.constant 0 : index
    %224 = vector.load %arg4[%c4_193, %c0_194, %c0_195] : memref<9x4x4xf32, #tpu.memory_space<vmem>>, vector<1x4x4xf32>
    %225 = vector.shape_cast %224 : vector<1x4x4xf32> to vector<4x4xf32>
    %cst_196 = arith.constant dense<0.000000e+00> : vector<4x16xf32>
    %226 = tpu.matmul %225, %223, %cst_196 {dimension_numbers = #tpu.dot_dimension_numbers<[1], [0], [0], [1], [0, 0, 1, 1], [], []>} : vector<4x4xf32>, vector<4x16xf32>, vector<4x16xf32> -> vector<4x16xf32>
    %227 = arith.addf %222, %226 : vector<4x16xf32>
    %228 = vector.extract_strided_slice %195 {offsets = [0, 2], sizes = [4, 16], strides = [1, 1]} : vector<4x18xf32> to vector<4x16xf32>
    %c5_197 = arith.constant 5 : index
    %c0_198 = arith.constant 0 : index
    %c0_199 = arith.constant 0 : index
    %229 = vector.load %arg4[%c5_197, %c0_198, %c0_199] : memref<9x4x4xf32, #tpu.memory_space<vmem>>, vector<1x4x4xf32>
    %230 = vector.shape_cast %229 : vector<1x4x4xf32> to vector<4x4xf32>
    %cst_200 = arith.constant dense<0.000000e+00> : vector<4x16xf32>
    %231 = tpu.matmul %230, %228, %cst_200 {dimension_numbers = #tpu.dot_dimension_numbers<[1], [0], [0], [1], [0, 0, 1, 1], [], []>} : vector<4x4xf32>, vector<4x16xf32>, vector<4x16xf32> -> vector<4x16xf32>
    %232 = arith.addf %227, %231 : vector<4x16xf32>
    %233 = vector.extract_strided_slice %197 {offsets = [0, 0], sizes = [4, 16], strides = [1, 1]} : vector<4x18xf32> to vector<4x16xf32>
    %c6_201 = arith.constant 6 : index
    %c0_202 = arith.constant 0 : index
    %c0_203 = arith.constant 0 : index
    %234 = vector.load %arg4[%c6_201, %c0_202, %c0_203] : memref<9x4x4xf32, #tpu.memory_space<vmem>>, vector<1x4x4xf32>
    %235 = vector.shape_cast %234 : vector<1x4x4xf32> to vector<4x4xf32>
    %cst_204 = arith.constant dense<0.000000e+00> : vector<4x16xf32>
    %236 = tpu.matmul %235, %233, %cst_204 {dimension_numbers = #tpu.dot_dimension_numbers<[1], [0], [0], [1], [0, 0, 1, 1], [], []>} : vector<4x4xf32>, vector<4x16xf32>, vector<4x16xf32> -> vector<4x16xf32>
    %237 = arith.addf %232, %236 : vector<4x16xf32>
    %238 = vector.extract_strided_slice %197 {offsets = [0, 1], sizes = [4, 16], strides = [1, 1]} : vector<4x18xf32> to vector<4x16xf32>
    %c7_205 = arith.constant 7 : index
    %c0_206 = arith.constant 0 : index
    %c0_207 = arith.constant 0 : index
    %239 = vector.load %arg4[%c7_205, %c0_206, %c0_207] : memref<9x4x4xf32, #tpu.memory_space<vmem>>, vector<1x4x4xf32>
    %240 = vector.shape_cast %239 : vector<1x4x4xf32> to vector<4x4xf32>
    %cst_208 = arith.constant dense<0.000000e+00> : vector<4x16xf32>
    %241 = tpu.matmul %240, %238, %cst_208 {dimension_numbers = #tpu.dot_dimension_numbers<[1], [0], [0], [1], [0, 0, 1, 1], [], []>} : vector<4x4xf32>, vector<4x16xf32>, vector<4x16xf32> -> vector<4x16xf32>
    %242 = arith.addf %237, %241 : vector<4x16xf32>
    %243 = vector.extract_strided_slice %197 {offsets = [0, 2], sizes = [4, 16], strides = [1, 1]} : vector<4x18xf32> to vector<4x16xf32>
    %c8_209 = arith.constant 8 : index
    %c0_210 = arith.constant 0 : index
    %c0_211 = arith.constant 0 : index
    %244 = vector.load %arg4[%c8_209, %c0_210, %c0_211] : memref<9x4x4xf32, #tpu.memory_space<vmem>>, vector<1x4x4xf32>
    %245 = vector.shape_cast %244 : vector<1x4x4xf32> to vector<4x4xf32>
    %cst_212 = arith.constant dense<0.000000e+00> : vector<4x16xf32>
    %246 = tpu.matmul %245, %243, %cst_212 {dimension_numbers = #tpu.dot_dimension_numbers<[1], [0], [0], [1], [0, 0, 1, 1], [], []>} : vector<4x4xf32>, vector<4x16xf32>, vector<4x16xf32> -> vector<4x16xf32>
    %247 = arith.addf %242, %246 : vector<4x16xf32>
    %c0_213 = arith.constant 0 : index
    %c0_214 = arith.constant 0 : index
    %248 = vector.load %arg5[%c0_213, %c0_214] : memref<4x1xf32, #tpu.memory_space<vmem>>, vector<4x1xf32>
    %249 = vector.broadcast %248 : vector<4x1xf32> to vector<4x16xf32>
    %250 = arith.addf %247, %249 : vector<4x16xf32>
    %cst_215 = arith.constant 0.000000e+00 : f32
    %251 = vector.broadcast %cst_215 : f32 to vector<4x16xf32>
    %252 = arith.maximumf %250, %251 : vector<4x16xf32>
    %c0_216 = arith.constant 0 : index
    %c4_217 = arith.constant 4 : index
    %c48_218 = arith.constant 48 : index
    %253 = vector.load %arg6[%c0_216, %c4_217, %c48_218] : memref<1x8x128xf32, #tpu.memory_space<vmem>>, vector<1x4x16xf32>
    %254 = vector.shape_cast %253 : vector<1x4x16xf32> to vector<4x16xf32>
    %255 = vector.shape_cast %252 : vector<4x16xf32> to vector<1x4x16xf32>
    tpu.vector_store %arg6[%c0_216, %c4_217, %c48_218], %255 {strides = array<i32>} : memref<1x8x128xf32, #tpu.memory_space<vmem>>, vector<1x4x16xf32>,
    %c0_219 = arith.constant 0 : index
    %c0_220 = arith.constant 0 : index
    %c4_221 = arith.constant 4 : index
    %c0_222 = arith.constant 0 : index
    %256 = vector.load %arg2[%c0_219, %c0_220, %c4_221, %c0_222] : memref<1x4x8x18xf32, #tpu.memory_space<vmem>>, vector<1x4x1x18xf32>
    %257 = vector.shape_cast %256 : vector<1x4x1x18xf32> to vector<4x18xf32>
    %c0_223 = arith.constant 0 : index
    %c0_224 = arith.constant 0 : index
    %c5_225 = arith.constant 5 : index
    %c0_226 = arith.constant 0 : index
    %258 = vector.load %arg2[%c0_223, %c0_224, %c5_225, %c0_226] : memref<1x4x8x18xf32, #tpu.memory_space<vmem>>, vector<1x4x1x18xf32>
    %259 = vector.shape_cast %258 : vector<1x4x1x18xf32> to vector<4x18xf32>
    %c0_227 = arith.constant 0 : index
    %c0_228 = arith.constant 0 : index
    %c6_229 = arith.constant 6 : index
    %c0_230 = arith.constant 0 : index
    %260 = vector.load %arg2[%c0_227, %c0_228, %c6_229, %c0_230] : memref<1x4x8x18xf32, #tpu.memory_space<vmem>>, vector<1x4x1x18xf32>
    %261 = vector.shape_cast %260 : vector<1x4x1x18xf32> to vector<4x18xf32>
    %262 = vector.extract_strided_slice %259 {offsets = [0, 1], sizes = [4, 16], strides = [1, 1]} : vector<4x18xf32> to vector<4x16xf32>
    %c0_231 = arith.constant 0 : index
    %c0_232 = arith.constant 0 : index
    %c64 = arith.constant 64 : index
    %263 = vector.load %arg6[%c0_231, %c0_232, %c64] : memref<1x8x128xf32, #tpu.memory_space<vmem>>, vector<1x4x16xf32>
    %264 = vector.shape_cast %263 : vector<1x4x16xf32> to vector<4x16xf32>
    %265 = vector.shape_cast %262 : vector<4x16xf32> to vector<1x4x16xf32>
    tpu.vector_store %arg6[%c0_231, %c0_232, %c64], %265 {strides = array<i32>} : memref<1x8x128xf32, #tpu.memory_space<vmem>>, vector<1x4x16xf32>,
    %cst_233 = arith.constant 0.000000e+00 : f32
    %266 = vector.broadcast %cst_233 : f32 to vector<4x16xf32>
    %267 = vector.extract_strided_slice %257 {offsets = [0, 0], sizes = [4, 16], strides = [1, 1]} : vector<4x18xf32> to vector<4x16xf32>
    %c0_234 = arith.constant 0 : index
    %c0_235 = arith.constant 0 : index
    %c0_236 = arith.constant 0 : index
    %268 = vector.load %arg4[%c0_234, %c0_235, %c0_236] : memref<9x4x4xf32, #tpu.memory_space<vmem>>, vector<1x4x4xf32>
    %269 = vector.shape_cast %268 : vector<1x4x4xf32> to vector<4x4xf32>
    %cst_237 = arith.constant dense<0.000000e+00> : vector<4x16xf32>
    %270 = tpu.matmul %269, %267, %cst_237 {dimension_numbers = #tpu.dot_dimension_numbers<[1], [0], [0], [1], [0, 0, 1, 1], [], []>} : vector<4x4xf32>, vector<4x16xf32>, vector<4x16xf32> -> vector<4x16xf32>
    %271 = arith.addf %266, %270 : vector<4x16xf32>
    %272 = vector.extract_strided_slice %257 {offsets = [0, 1], sizes = [4, 16], strides = [1, 1]} : vector<4x18xf32> to vector<4x16xf32>
    %c1_238 = arith.constant 1 : index
    %c0_239 = arith.constant 0 : index
    %c0_240 = arith.constant 0 : index
    %273 = vector.load %arg4[%c1_238, %c0_239, %c0_240] : memref<9x4x4xf32, #tpu.memory_space<vmem>>, vector<1x4x4xf32>
    %274 = vector.shape_cast %273 : vector<1x4x4xf32> to vector<4x4xf32>
    %cst_241 = arith.constant dense<0.000000e+00> : vector<4x16xf32>
    %275 = tpu.matmul %274, %272, %cst_241 {dimension_numbers = #tpu.dot_dimension_numbers<[1], [0], [0], [1], [0, 0, 1, 1], [], []>} : vector<4x4xf32>, vector<4x16xf32>, vector<4x16xf32> -> vector<4x16xf32>
    %276 = arith.addf %271, %275 : vector<4x16xf32>
    %277 = vector.extract_strided_slice %257 {offsets = [0, 2], sizes = [4, 16], strides = [1, 1]} : vector<4x18xf32> to vector<4x16xf32>
    %c2_242 = arith.constant 2 : index
    %c0_243 = arith.constant 0 : index
    %c0_244 = arith.constant 0 : index
    %278 = vector.load %arg4[%c2_242, %c0_243, %c0_244] : memref<9x4x4xf32, #tpu.memory_space<vmem>>, vector<1x4x4xf32>
    %279 = vector.shape_cast %278 : vector<1x4x4xf32> to vector<4x4xf32>
    %cst_245 = arith.constant dense<0.000000e+00> : vector<4x16xf32>
    %280 = tpu.matmul %279, %277, %cst_245 {dimension_numbers = #tpu.dot_dimension_numbers<[1], [0], [0], [1], [0, 0, 1, 1], [], []>} : vector<4x4xf32>, vector<4x16xf32>, vector<4x16xf32> -> vector<4x16xf32>
    %281 = arith.addf %276, %280 : vector<4x16xf32>
    %282 = vector.extract_strided_slice %259 {offsets = [0, 0], sizes = [4, 16], strides = [1, 1]} : vector<4x18xf32> to vector<4x16xf32>
    %c3_246 = arith.constant 3 : index
    %c0_247 = arith.constant 0 : index
    %c0_248 = arith.constant 0 : index
    %283 = vector.load %arg4[%c3_246, %c0_247, %c0_248] : memref<9x4x4xf32, #tpu.memory_space<vmem>>, vector<1x4x4xf32>
    %284 = vector.shape_cast %283 : vector<1x4x4xf32> to vector<4x4xf32>
    %cst_249 = arith.constant dense<0.000000e+00> : vector<4x16xf32>
    %285 = tpu.matmul %284, %282, %cst_249 {dimension_numbers = #tpu.dot_dimension_numbers<[1], [0], [0], [1], [0, 0, 1, 1], [], []>} : vector<4x4xf32>, vector<4x16xf32>, vector<4x16xf32> -> vector<4x16xf32>
    %286 = arith.addf %281, %285 : vector<4x16xf32>
    %287 = vector.extract_strided_slice %259 {offsets = [0, 1], sizes = [4, 16], strides = [1, 1]} : vector<4x18xf32> to vector<4x16xf32>
    %c4_250 = arith.constant 4 : index
    %c0_251 = arith.constant 0 : index
    %c0_252 = arith.constant 0 : index
    %288 = vector.load %arg4[%c4_250, %c0_251, %c0_252] : memref<9x4x4xf32, #tpu.memory_space<vmem>>, vector<1x4x4xf32>
    %289 = vector.shape_cast %288 : vector<1x4x4xf32> to vector<4x4xf32>
    %cst_253 = arith.constant dense<0.000000e+00> : vector<4x16xf32>
    %290 = tpu.matmul %289, %287, %cst_253 {dimension_numbers = #tpu.dot_dimension_numbers<[1], [0], [0], [1], [0, 0, 1, 1], [], []>} : vector<4x4xf32>, vector<4x16xf32>, vector<4x16xf32> -> vector<4x16xf32>
    %291 = arith.addf %286, %290 : vector<4x16xf32>
    %292 = vector.extract_strided_slice %259 {offsets = [0, 2], sizes = [4, 16], strides = [1, 1]} : vector<4x18xf32> to vector<4x16xf32>
    %c5_254 = arith.constant 5 : index
    %c0_255 = arith.constant 0 : index
    %c0_256 = arith.constant 0 : index
    %293 = vector.load %arg4[%c5_254, %c0_255, %c0_256] : memref<9x4x4xf32, #tpu.memory_space<vmem>>, vector<1x4x4xf32>
    %294 = vector.shape_cast %293 : vector<1x4x4xf32> to vector<4x4xf32>
    %cst_257 = arith.constant dense<0.000000e+00> : vector<4x16xf32>
    %295 = tpu.matmul %294, %292, %cst_257 {dimension_numbers = #tpu.dot_dimension_numbers<[1], [0], [0], [1], [0, 0, 1, 1], [], []>} : vector<4x4xf32>, vector<4x16xf32>, vector<4x16xf32> -> vector<4x16xf32>
    %296 = arith.addf %291, %295 : vector<4x16xf32>
    %297 = vector.extract_strided_slice %261 {offsets = [0, 0], sizes = [4, 16], strides = [1, 1]} : vector<4x18xf32> to vector<4x16xf32>
    %c6_258 = arith.constant 6 : index
    %c0_259 = arith.constant 0 : index
    %c0_260 = arith.constant 0 : index
    %298 = vector.load %arg4[%c6_258, %c0_259, %c0_260] : memref<9x4x4xf32, #tpu.memory_space<vmem>>, vector<1x4x4xf32>
    %299 = vector.shape_cast %298 : vector<1x4x4xf32> to vector<4x4xf32>
    %cst_261 = arith.constant dense<0.000000e+00> : vector<4x16xf32>
    %300 = tpu.matmul %299, %297, %cst_261 {dimension_numbers = #tpu.dot_dimension_numbers<[1], [0], [0], [1], [0, 0, 1, 1], [], []>} : vector<4x4xf32>, vector<4x16xf32>, vector<4x16xf32> -> vector<4x16xf32>
    %301 = arith.addf %296, %300 : vector<4x16xf32>
    %302 = vector.extract_strided_slice %261 {offsets = [0, 1], sizes = [4, 16], strides = [1, 1]} : vector<4x18xf32> to vector<4x16xf32>
    %c7_262 = arith.constant 7 : index
    %c0_263 = arith.constant 0 : index
    %c0_264 = arith.constant 0 : index
    %303 = vector.load %arg4[%c7_262, %c0_263, %c0_264] : memref<9x4x4xf32, #tpu.memory_space<vmem>>, vector<1x4x4xf32>
    %304 = vector.shape_cast %303 : vector<1x4x4xf32> to vector<4x4xf32>
    %cst_265 = arith.constant dense<0.000000e+00> : vector<4x16xf32>
    %305 = tpu.matmul %304, %302, %cst_265 {dimension_numbers = #tpu.dot_dimension_numbers<[1], [0], [0], [1], [0, 0, 1, 1], [], []>} : vector<4x4xf32>, vector<4x16xf32>, vector<4x16xf32> -> vector<4x16xf32>
    %306 = arith.addf %301, %305 : vector<4x16xf32>
    %307 = vector.extract_strided_slice %261 {offsets = [0, 2], sizes = [4, 16], strides = [1, 1]} : vector<4x18xf32> to vector<4x16xf32>
    %c8_266 = arith.constant 8 : index
    %c0_267 = arith.constant 0 : index
    %c0_268 = arith.constant 0 : index
    %308 = vector.load %arg4[%c8_266, %c0_267, %c0_268] : memref<9x4x4xf32, #tpu.memory_space<vmem>>, vector<1x4x4xf32>
    %309 = vector.shape_cast %308 : vector<1x4x4xf32> to vector<4x4xf32>
    %cst_269 = arith.constant dense<0.000000e+00> : vector<4x16xf32>
    %310 = tpu.matmul %309, %307, %cst_269 {dimension_numbers = #tpu.dot_dimension_numbers<[1], [0], [0], [1], [0, 0, 1, 1], [], []>} : vector<4x4xf32>, vector<4x16xf32>, vector<4x16xf32> -> vector<4x16xf32>
    %311 = arith.addf %306, %310 : vector<4x16xf32>
    %c0_270 = arith.constant 0 : index
    %c0_271 = arith.constant 0 : index
    %312 = vector.load %arg5[%c0_270, %c0_271] : memref<4x1xf32, #tpu.memory_space<vmem>>, vector<4x1xf32>
    %313 = vector.broadcast %312 : vector<4x1xf32> to vector<4x16xf32>
    %314 = arith.addf %311, %313 : vector<4x16xf32>
    %cst_272 = arith.constant 0.000000e+00 : f32
    %315 = vector.broadcast %cst_272 : f32 to vector<4x16xf32>
    %316 = arith.maximumf %314, %315 : vector<4x16xf32>
    %c0_273 = arith.constant 0 : index
    %c4_274 = arith.constant 4 : index
    %c64_275 = arith.constant 64 : index
    %317 = vector.load %arg6[%c0_273, %c4_274, %c64_275] : memref<1x8x128xf32, #tpu.memory_space<vmem>>, vector<1x4x16xf32>
    %318 = vector.shape_cast %317 : vector<1x4x16xf32> to vector<4x16xf32>
    %319 = vector.shape_cast %316 : vector<4x16xf32> to vector<1x4x16xf32>
    tpu.vector_store %arg6[%c0_273, %c4_274, %c64_275], %319 {strides = array<i32>} : memref<1x8x128xf32, #tpu.memory_space<vmem>>, vector<1x4x16xf32>,
    %c0_276 = arith.constant 0 : index
    %c0_277 = arith.constant 0 : index
    %c5_278 = arith.constant 5 : index
    %c0_279 = arith.constant 0 : index
    %320 = vector.load %arg2[%c0_276, %c0_277, %c5_278, %c0_279] : memref<1x4x8x18xf32, #tpu.memory_space<vmem>>, vector<1x4x1x18xf32>
    %321 = vector.shape_cast %320 : vector<1x4x1x18xf32> to vector<4x18xf32>
    %c0_280 = arith.constant 0 : index
    %c0_281 = arith.constant 0 : index
    %c6_282 = arith.constant 6 : index
    %c0_283 = arith.constant 0 : index
    %322 = vector.load %arg2[%c0_280, %c0_281, %c6_282, %c0_283] : memref<1x4x8x18xf32, #tpu.memory_space<vmem>>, vector<1x4x1x18xf32>
    %323 = vector.shape_cast %322 : vector<1x4x1x18xf32> to vector<4x18xf32>
    %c0_284 = arith.constant 0 : index
    %c0_285 = arith.constant 0 : index
    %c7_286 = arith.constant 7 : index
    %c0_287 = arith.constant 0 : index
    %324 = vector.load %arg2[%c0_284, %c0_285, %c7_286, %c0_287] : memref<1x4x8x18xf32, #tpu.memory_space<vmem>>, vector<1x4x1x18xf32>
    %325 = vector.shape_cast %324 : vector<1x4x1x18xf32> to vector<4x18xf32>
    %326 = vector.extract_strided_slice %323 {offsets = [0, 1], sizes = [4, 16], strides = [1, 1]} : vector<4x18xf32> to vector<4x16xf32>
    %c0_288 = arith.constant 0 : index
    %c0_289 = arith.constant 0 : index
    %c80 = arith.constant 80 : index
    %327 = vector.load %arg6[%c0_288, %c0_289, %c80] : memref<1x8x128xf32, #tpu.memory_space<vmem>>, vector<1x4x16xf32>
    %328 = vector.shape_cast %327 : vector<1x4x16xf32> to vector<4x16xf32>
    %329 = vector.shape_cast %326 : vector<4x16xf32> to vector<1x4x16xf32>
    tpu.vector_store %arg6[%c0_288, %c0_289, %c80], %329 {strides = array<i32>} : memref<1x8x128xf32, #tpu.memory_space<vmem>>, vector<1x4x16xf32>,
    %cst_290 = arith.constant 0.000000e+00 : f32
    %330 = vector.broadcast %cst_290 : f32 to vector<4x16xf32>
    %331 = vector.extract_strided_slice %321 {offsets = [0, 0], sizes = [4, 16], strides = [1, 1]} : vector<4x18xf32> to vector<4x16xf32>
    %c0_291 = arith.constant 0 : index
    %c0_292 = arith.constant 0 : index
    %c0_293 = arith.constant 0 : index
    %332 = vector.load %arg4[%c0_291, %c0_292, %c0_293] : memref<9x4x4xf32, #tpu.memory_space<vmem>>, vector<1x4x4xf32>
    %333 = vector.shape_cast %332 : vector<1x4x4xf32> to vector<4x4xf32>
    %cst_294 = arith.constant dense<0.000000e+00> : vector<4x16xf32>
    %334 = tpu.matmul %333, %331, %cst_294 {dimension_numbers = #tpu.dot_dimension_numbers<[1], [0], [0], [1], [0, 0, 1, 1], [], []>} : vector<4x4xf32>, vector<4x16xf32>, vector<4x16xf32> -> vector<4x16xf32>
    %335 = arith.addf %330, %334 : vector<4x16xf32>
    %336 = vector.extract_strided_slice %321 {offsets = [0, 1], sizes = [4, 16], strides = [1, 1]} : vector<4x18xf32> to vector<4x16xf32>
    %c1_295 = arith.constant 1 : index
    %c0_296 = arith.constant 0 : index
    %c0_297 = arith.constant 0 : index
    %337 = vector.load %arg4[%c1_295, %c0_296, %c0_297] : memref<9x4x4xf32, #tpu.memory_space<vmem>>, vector<1x4x4xf32>
    %338 = vector.shape_cast %337 : vector<1x4x4xf32> to vector<4x4xf32>
    %cst_298 = arith.constant dense<0.000000e+00> : vector<4x16xf32>
    %339 = tpu.matmul %338, %336, %cst_298 {dimension_numbers = #tpu.dot_dimension_numbers<[1], [0], [0], [1], [0, 0, 1, 1], [], []>} : vector<4x4xf32>, vector<4x16xf32>, vector<4x16xf32> -> vector<4x16xf32>
    %340 = arith.addf %335, %339 : vector<4x16xf32>
    %341 = vector.extract_strided_slice %321 {offsets = [0, 2], sizes = [4, 16], strides = [1, 1]} : vector<4x18xf32> to vector<4x16xf32>
    %c2_299 = arith.constant 2 : index
    %c0_300 = arith.constant 0 : index
    %c0_301 = arith.constant 0 : index
    %342 = vector.load %arg4[%c2_299, %c0_300, %c0_301] : memref<9x4x4xf32, #tpu.memory_space<vmem>>, vector<1x4x4xf32>
    %343 = vector.shape_cast %342 : vector<1x4x4xf32> to vector<4x4xf32>
    %cst_302 = arith.constant dense<0.000000e+00> : vector<4x16xf32>
    %344 = tpu.matmul %343, %341, %cst_302 {dimension_numbers = #tpu.dot_dimension_numbers<[1], [0], [0], [1], [0, 0, 1, 1], [], []>} : vector<4x4xf32>, vector<4x16xf32>, vector<4x16xf32> -> vector<4x16xf32>
    %345 = arith.addf %340, %344 : vector<4x16xf32>
    %346 = vector.extract_strided_slice %323 {offsets = [0, 0], sizes = [4, 16], strides = [1, 1]} : vector<4x18xf32> to vector<4x16xf32>
    %c3_303 = arith.constant 3 : index
    %c0_304 = arith.constant 0 : index
    %c0_305 = arith.constant 0 : index
    %347 = vector.load %arg4[%c3_303, %c0_304, %c0_305] : memref<9x4x4xf32, #tpu.memory_space<vmem>>, vector<1x4x4xf32>
    %348 = vector.shape_cast %347 : vector<1x4x4xf32> to vector<4x4xf32>
    %cst_306 = arith.constant dense<0.000000e+00> : vector<4x16xf32>
    %349 = tpu.matmul %348, %346, %cst_306 {dimension_numbers = #tpu.dot_dimension_numbers<[1], [0], [0], [1], [0, 0, 1, 1], [], []>} : vector<4x4xf32>, vector<4x16xf32>, vector<4x16xf32> -> vector<4x16xf32>
    %350 = arith.addf %345, %349 : vector<4x16xf32>
    %351 = vector.extract_strided_slice %323 {offsets = [0, 1], sizes = [4, 16], strides = [1, 1]} : vector<4x18xf32> to vector<4x16xf32>
    %c4_307 = arith.constant 4 : index
    %c0_308 = arith.constant 0 : index
    %c0_309 = arith.constant 0 : index
    %352 = vector.load %arg4[%c4_307, %c0_308, %c0_309] : memref<9x4x4xf32, #tpu.memory_space<vmem>>, vector<1x4x4xf32>
    %353 = vector.shape_cast %352 : vector<1x4x4xf32> to vector<4x4xf32>
    %cst_310 = arith.constant dense<0.000000e+00> : vector<4x16xf32>
    %354 = tpu.matmul %353, %351, %cst_310 {dimension_numbers = #tpu.dot_dimension_numbers<[1], [0], [0], [1], [0, 0, 1, 1], [], []>} : vector<4x4xf32>, vector<4x16xf32>, vector<4x16xf32> -> vector<4x16xf32>
    %355 = arith.addf %350, %354 : vector<4x16xf32>
    %356 = vector.extract_strided_slice %323 {offsets = [0, 2], sizes = [4, 16], strides = [1, 1]} : vector<4x18xf32> to vector<4x16xf32>
    %c5_311 = arith.constant 5 : index
    %c0_312 = arith.constant 0 : index
    %c0_313 = arith.constant 0 : index
    %357 = vector.load %arg4[%c5_311, %c0_312, %c0_313] : memref<9x4x4xf32, #tpu.memory_space<vmem>>, vector<1x4x4xf32>
    %358 = vector.shape_cast %357 : vector<1x4x4xf32> to vector<4x4xf32>
    %cst_314 = arith.constant dense<0.000000e+00> : vector<4x16xf32>
    %359 = tpu.matmul %358, %356, %cst_314 {dimension_numbers = #tpu.dot_dimension_numbers<[1], [0], [0], [1], [0, 0, 1, 1], [], []>} : vector<4x4xf32>, vector<4x16xf32>, vector<4x16xf32> -> vector<4x16xf32>
    %360 = arith.addf %355, %359 : vector<4x16xf32>
    %361 = vector.extract_strided_slice %325 {offsets = [0, 0], sizes = [4, 16], strides = [1, 1]} : vector<4x18xf32> to vector<4x16xf32>
    %c6_315 = arith.constant 6 : index
    %c0_316 = arith.constant 0 : index
    %c0_317 = arith.constant 0 : index
    %362 = vector.load %arg4[%c6_315, %c0_316, %c0_317] : memref<9x4x4xf32, #tpu.memory_space<vmem>>, vector<1x4x4xf32>
    %363 = vector.shape_cast %362 : vector<1x4x4xf32> to vector<4x4xf32>
    %cst_318 = arith.constant dense<0.000000e+00> : vector<4x16xf32>
    %364 = tpu.matmul %363, %361, %cst_318 {dimension_numbers = #tpu.dot_dimension_numbers<[1], [0], [0], [1], [0, 0, 1, 1], [], []>} : vector<4x4xf32>, vector<4x16xf32>, vector<4x16xf32> -> vector<4x16xf32>
    %365 = arith.addf %360, %364 : vector<4x16xf32>
    %366 = vector.extract_strided_slice %325 {offsets = [0, 1], sizes = [4, 16], strides = [1, 1]} : vector<4x18xf32> to vector<4x16xf32>
    %c7_319 = arith.constant 7 : index
    %c0_320 = arith.constant 0 : index
    %c0_321 = arith.constant 0 : index
    %367 = vector.load %arg4[%c7_319, %c0_320, %c0_321] : memref<9x4x4xf32, #tpu.memory_space<vmem>>, vector<1x4x4xf32>
    %368 = vector.shape_cast %367 : vector<1x4x4xf32> to vector<4x4xf32>
    %cst_322 = arith.constant dense<0.000000e+00> : vector<4x16xf32>
    %369 = tpu.matmul %368, %366, %cst_322 {dimension_numbers = #tpu.dot_dimension_numbers<[1], [0], [0], [1], [0, 0, 1, 1], [], []>} : vector<4x4xf32>, vector<4x16xf32>, vector<4x16xf32> -> vector<4x16xf32>
    %370 = arith.addf %365, %369 : vector<4x16xf32>
    %371 = vector.extract_strided_slice %325 {offsets = [0, 2], sizes = [4, 16], strides = [1, 1]} : vector<4x18xf32> to vector<4x16xf32>
    %c8_323 = arith.constant 8 : index
    %c0_324 = arith.constant 0 : index
    %c0_325 = arith.constant 0 : index
    %372 = vector.load %arg4[%c8_323, %c0_324, %c0_325] : memref<9x4x4xf32, #tpu.memory_space<vmem>>, vector<1x4x4xf32>
    %373 = vector.shape_cast %372 : vector<1x4x4xf32> to vector<4x4xf32>
    %cst_326 = arith.constant dense<0.000000e+00> : vector<4x16xf32>
    %374 = tpu.matmul %373, %371, %cst_326 {dimension_numbers = #tpu.dot_dimension_numbers<[1], [0], [0], [1], [0, 0, 1, 1], [], []>} : vector<4x4xf32>, vector<4x16xf32>, vector<4x16xf32> -> vector<4x16xf32>
    %375 = arith.addf %370, %374 : vector<4x16xf32>
    %c0_327 = arith.constant 0 : index
    %c0_328 = arith.constant 0 : index
    %376 = vector.load %arg5[%c0_327, %c0_328] : memref<4x1xf32, #tpu.memory_space<vmem>>, vector<4x1xf32>
    %377 = vector.broadcast %376 : vector<4x1xf32> to vector<4x16xf32>
    %378 = arith.addf %375, %377 : vector<4x16xf32>
    %cst_329 = arith.constant 0.000000e+00 : f32
    %379 = vector.broadcast %cst_329 : f32 to vector<4x16xf32>
    %380 = arith.maximumf %378, %379 : vector<4x16xf32>
    %c0_330 = arith.constant 0 : index
    %c4_331 = arith.constant 4 : index
    %c80_332 = arith.constant 80 : index
    %381 = vector.load %arg6[%c0_330, %c4_331, %c80_332] : memref<1x8x128xf32, #tpu.memory_space<vmem>>, vector<1x4x16xf32>
    %382 = vector.shape_cast %381 : vector<1x4x16xf32> to vector<4x16xf32>
    %383 = vector.shape_cast %380 : vector<4x16xf32> to vector<1x4x16xf32>
    tpu.vector_store %arg6[%c0_330, %c4_331, %c80_332], %383 {strides = array<i32>} : memref<1x8x128xf32, #tpu.memory_space<vmem>>, vector<1x4x16xf32>,
    %c0_333 = arith.constant 0 : index
    %c0_334 = arith.constant 0 : index
    %c6_335 = arith.constant 6 : index
    %c0_336 = arith.constant 0 : index
    %384 = vector.load %arg2[%c0_333, %c0_334, %c6_335, %c0_336] : memref<1x4x8x18xf32, #tpu.memory_space<vmem>>, vector<1x4x1x18xf32>
    %385 = vector.shape_cast %384 : vector<1x4x1x18xf32> to vector<4x18xf32>
    %c0_337 = arith.constant 0 : index
    %c0_338 = arith.constant 0 : index
    %c7_339 = arith.constant 7 : index
    %c0_340 = arith.constant 0 : index
    %386 = vector.load %arg2[%c0_337, %c0_338, %c7_339, %c0_340] : memref<1x4x8x18xf32, #tpu.memory_space<vmem>>, vector<1x4x1x18xf32>
    %387 = vector.shape_cast %386 : vector<1x4x1x18xf32> to vector<4x18xf32>
    %c0_341 = arith.constant 0 : index
    %c0_342 = arith.constant 0 : index
    %c0_343 = arith.constant 0 : index
    %c0_344 = arith.constant 0 : index
    %388 = vector.load %arg3[%c0_341, %c0_342, %c0_343, %c0_344] : memref<1x4x8x18xf32, #tpu.memory_space<vmem>>, vector<1x4x1x18xf32>
    %389 = vector.shape_cast %388 : vector<1x4x1x18xf32> to vector<4x18xf32>
    %390 = vector.extract_strided_slice %387 {offsets = [0, 1], sizes = [4, 16], strides = [1, 1]} : vector<4x18xf32> to vector<4x16xf32>
    %c0_345 = arith.constant 0 : index
    %c0_346 = arith.constant 0 : index
    %c96 = arith.constant 96 : index
    %391 = vector.load %arg6[%c0_345, %c0_346, %c96] : memref<1x8x128xf32, #tpu.memory_space<vmem>>, vector<1x4x16xf32>
    %392 = vector.shape_cast %391 : vector<1x4x16xf32> to vector<4x16xf32>
    %393 = vector.shape_cast %390 : vector<4x16xf32> to vector<1x4x16xf32>
    tpu.vector_store %arg6[%c0_345, %c0_346, %c96], %393 {strides = array<i32>} : memref<1x8x128xf32, #tpu.memory_space<vmem>>, vector<1x4x16xf32>,
    %cst_347 = arith.constant 0.000000e+00 : f32
    %394 = vector.broadcast %cst_347 : f32 to vector<4x16xf32>
    %395 = vector.extract_strided_slice %385 {offsets = [0, 0], sizes = [4, 16], strides = [1, 1]} : vector<4x18xf32> to vector<4x16xf32>
    %c0_348 = arith.constant 0 : index
    %c0_349 = arith.constant 0 : index
    %c0_350 = arith.constant 0 : index
    %396 = vector.load %arg4[%c0_348, %c0_349, %c0_350] : memref<9x4x4xf32, #tpu.memory_space<vmem>>, vector<1x4x4xf32>
    %397 = vector.shape_cast %396 : vector<1x4x4xf32> to vector<4x4xf32>
    %cst_351 = arith.constant dense<0.000000e+00> : vector<4x16xf32>
    %398 = tpu.matmul %397, %395, %cst_351 {dimension_numbers = #tpu.dot_dimension_numbers<[1], [0], [0], [1], [0, 0, 1, 1], [], []>} : vector<4x4xf32>, vector<4x16xf32>, vector<4x16xf32> -> vector<4x16xf32>
    %399 = arith.addf %394, %398 : vector<4x16xf32>
    %400 = vector.extract_strided_slice %385 {offsets = [0, 1], sizes = [4, 16], strides = [1, 1]} : vector<4x18xf32> to vector<4x16xf32>
    %c1_352 = arith.constant 1 : index
    %c0_353 = arith.constant 0 : index
    %c0_354 = arith.constant 0 : index
    %401 = vector.load %arg4[%c1_352, %c0_353, %c0_354] : memref<9x4x4xf32, #tpu.memory_space<vmem>>, vector<1x4x4xf32>
    %402 = vector.shape_cast %401 : vector<1x4x4xf32> to vector<4x4xf32>
    %cst_355 = arith.constant dense<0.000000e+00> : vector<4x16xf32>
    %403 = tpu.matmul %402, %400, %cst_355 {dimension_numbers = #tpu.dot_dimension_numbers<[1], [0], [0], [1], [0, 0, 1, 1], [], []>} : vector<4x4xf32>, vector<4x16xf32>, vector<4x16xf32> -> vector<4x16xf32>
    %404 = arith.addf %399, %403 : vector<4x16xf32>
    %405 = vector.extract_strided_slice %385 {offsets = [0, 2], sizes = [4, 16], strides = [1, 1]} : vector<4x18xf32> to vector<4x16xf32>
    %c2_356 = arith.constant 2 : index
    %c0_357 = arith.constant 0 : index
    %c0_358 = arith.constant 0 : index
    %406 = vector.load %arg4[%c2_356, %c0_357, %c0_358] : memref<9x4x4xf32, #tpu.memory_space<vmem>>, vector<1x4x4xf32>
    %407 = vector.shape_cast %406 : vector<1x4x4xf32> to vector<4x4xf32>
    %cst_359 = arith.constant dense<0.000000e+00> : vector<4x16xf32>
    %408 = tpu.matmul %407, %405, %cst_359 {dimension_numbers = #tpu.dot_dimension_numbers<[1], [0], [0], [1], [0, 0, 1, 1], [], []>} : vector<4x4xf32>, vector<4x16xf32>, vector<4x16xf32> -> vector<4x16xf32>
    %409 = arith.addf %404, %408 : vector<4x16xf32>
    %410 = vector.extract_strided_slice %387 {offsets = [0, 0], sizes = [4, 16], strides = [1, 1]} : vector<4x18xf32> to vector<4x16xf32>
    %c3_360 = arith.constant 3 : index
    %c0_361 = arith.constant 0 : index
    %c0_362 = arith.constant 0 : index
    %411 = vector.load %arg4[%c3_360, %c0_361, %c0_362] : memref<9x4x4xf32, #tpu.memory_space<vmem>>, vector<1x4x4xf32>
    %412 = vector.shape_cast %411 : vector<1x4x4xf32> to vector<4x4xf32>
    %cst_363 = arith.constant dense<0.000000e+00> : vector<4x16xf32>
    %413 = tpu.matmul %412, %410, %cst_363 {dimension_numbers = #tpu.dot_dimension_numbers<[1], [0], [0], [1], [0, 0, 1, 1], [], []>} : vector<4x4xf32>, vector<4x16xf32>, vector<4x16xf32> -> vector<4x16xf32>
    %414 = arith.addf %409, %413 : vector<4x16xf32>
    %415 = vector.extract_strided_slice %387 {offsets = [0, 1], sizes = [4, 16], strides = [1, 1]} : vector<4x18xf32> to vector<4x16xf32>
    %c4_364 = arith.constant 4 : index
    %c0_365 = arith.constant 0 : index
    %c0_366 = arith.constant 0 : index
    %416 = vector.load %arg4[%c4_364, %c0_365, %c0_366] : memref<9x4x4xf32, #tpu.memory_space<vmem>>, vector<1x4x4xf32>
    %417 = vector.shape_cast %416 : vector<1x4x4xf32> to vector<4x4xf32>
    %cst_367 = arith.constant dense<0.000000e+00> : vector<4x16xf32>
    %418 = tpu.matmul %417, %415, %cst_367 {dimension_numbers = #tpu.dot_dimension_numbers<[1], [0], [0], [1], [0, 0, 1, 1], [], []>} : vector<4x4xf32>, vector<4x16xf32>, vector<4x16xf32> -> vector<4x16xf32>
    %419 = arith.addf %414, %418 : vector<4x16xf32>
    %420 = vector.extract_strided_slice %387 {offsets = [0, 2], sizes = [4, 16], strides = [1, 1]} : vector<4x18xf32> to vector<4x16xf32>
    %c5_368 = arith.constant 5 : index
    %c0_369 = arith.constant 0 : index
    %c0_370 = arith.constant 0 : index
    %421 = vector.load %arg4[%c5_368, %c0_369, %c0_370] : memref<9x4x4xf32, #tpu.memory_space<vmem>>, vector<1x4x4xf32>
    %422 = vector.shape_cast %421 : vector<1x4x4xf32> to vector<4x4xf32>
    %cst_371 = arith.constant dense<0.000000e+00> : vector<4x16xf32>
    %423 = tpu.matmul %422, %420, %cst_371 {dimension_numbers = #tpu.dot_dimension_numbers<[1], [0], [0], [1], [0, 0, 1, 1], [], []>} : vector<4x4xf32>, vector<4x16xf32>, vector<4x16xf32> -> vector<4x16xf32>
    %424 = arith.addf %419, %423 : vector<4x16xf32>
    %425 = vector.extract_strided_slice %389 {offsets = [0, 0], sizes = [4, 16], strides = [1, 1]} : vector<4x18xf32> to vector<4x16xf32>
    %c6_372 = arith.constant 6 : index
    %c0_373 = arith.constant 0 : index
    %c0_374 = arith.constant 0 : index
    %426 = vector.load %arg4[%c6_372, %c0_373, %c0_374] : memref<9x4x4xf32, #tpu.memory_space<vmem>>, vector<1x4x4xf32>
    %427 = vector.shape_cast %426 : vector<1x4x4xf32> to vector<4x4xf32>
    %cst_375 = arith.constant dense<0.000000e+00> : vector<4x16xf32>
    %428 = tpu.matmul %427, %425, %cst_375 {dimension_numbers = #tpu.dot_dimension_numbers<[1], [0], [0], [1], [0, 0, 1, 1], [], []>} : vector<4x4xf32>, vector<4x16xf32>, vector<4x16xf32> -> vector<4x16xf32>
    %429 = arith.addf %424, %428 : vector<4x16xf32>
    %430 = vector.extract_strided_slice %389 {offsets = [0, 1], sizes = [4, 16], strides = [1, 1]} : vector<4x18xf32> to vector<4x16xf32>
    %c7_376 = arith.constant 7 : index
    %c0_377 = arith.constant 0 : index
    %c0_378 = arith.constant 0 : index
    %431 = vector.load %arg4[%c7_376, %c0_377, %c0_378] : memref<9x4x4xf32, #tpu.memory_space<vmem>>, vector<1x4x4xf32>
    %432 = vector.shape_cast %431 : vector<1x4x4xf32> to vector<4x4xf32>
    %cst_379 = arith.constant dense<0.000000e+00> : vector<4x16xf32>
    %433 = tpu.matmul %432, %430, %cst_379 {dimension_numbers = #tpu.dot_dimension_numbers<[1], [0], [0], [1], [0, 0, 1, 1], [], []>} : vector<4x4xf32>, vector<4x16xf32>, vector<4x16xf32> -> vector<4x16xf32>
    %434 = arith.addf %429, %433 : vector<4x16xf32>
    %435 = vector.extract_strided_slice %389 {offsets = [0, 2], sizes = [4, 16], strides = [1, 1]} : vector<4x18xf32> to vector<4x16xf32>
    %c8_380 = arith.constant 8 : index
    %c0_381 = arith.constant 0 : index
    %c0_382 = arith.constant 0 : index
    %436 = vector.load %arg4[%c8_380, %c0_381, %c0_382] : memref<9x4x4xf32, #tpu.memory_space<vmem>>, vector<1x4x4xf32>
    %437 = vector.shape_cast %436 : vector<1x4x4xf32> to vector<4x4xf32>
    %cst_383 = arith.constant dense<0.000000e+00> : vector<4x16xf32>
    %438 = tpu.matmul %437, %435, %cst_383 {dimension_numbers = #tpu.dot_dimension_numbers<[1], [0], [0], [1], [0, 0, 1, 1], [], []>} : vector<4x4xf32>, vector<4x16xf32>, vector<4x16xf32> -> vector<4x16xf32>
    %439 = arith.addf %434, %438 : vector<4x16xf32>
    %c0_384 = arith.constant 0 : index
    %c0_385 = arith.constant 0 : index
    %440 = vector.load %arg5[%c0_384, %c0_385] : memref<4x1xf32, #tpu.memory_space<vmem>>, vector<4x1xf32>
    %441 = vector.broadcast %440 : vector<4x1xf32> to vector<4x16xf32>
    %442 = arith.addf %439, %441 : vector<4x16xf32>
    %cst_386 = arith.constant 0.000000e+00 : f32
    %443 = vector.broadcast %cst_386 : f32 to vector<4x16xf32>
    %444 = arith.maximumf %442, %443 : vector<4x16xf32>
    %c0_387 = arith.constant 0 : index
    %c4_388 = arith.constant 4 : index
    %c96_389 = arith.constant 96 : index
    %445 = vector.load %arg6[%c0_387, %c4_388, %c96_389] : memref<1x8x128xf32, #tpu.memory_space<vmem>>, vector<1x4x16xf32>
    %446 = vector.shape_cast %445 : vector<1x4x16xf32> to vector<4x16xf32>
    %447 = vector.shape_cast %444 : vector<4x16xf32> to vector<1x4x16xf32>
    tpu.vector_store %arg6[%c0_387, %c4_388, %c96_389], %447 {strides = array<i32>} : memref<1x8x128xf32, #tpu.memory_space<vmem>>, vector<1x4x16xf32>,
    %c0_390 = arith.constant 0 : index
    %c0_391 = arith.constant 0 : index
    %c7_392 = arith.constant 7 : index
    %c0_393 = arith.constant 0 : index
    %448 = vector.load %arg2[%c0_390, %c0_391, %c7_392, %c0_393] : memref<1x4x8x18xf32, #tpu.memory_space<vmem>>, vector<1x4x1x18xf32>
    %449 = vector.shape_cast %448 : vector<1x4x1x18xf32> to vector<4x18xf32>
    %c0_394 = arith.constant 0 : index
    %c0_395 = arith.constant 0 : index
    %c0_396 = arith.constant 0 : index
    %c0_397 = arith.constant 0 : index
    %450 = vector.load %arg3[%c0_394, %c0_395, %c0_396, %c0_397] : memref<1x4x8x18xf32, #tpu.memory_space<vmem>>, vector<1x4x1x18xf32>
    %451 = vector.shape_cast %450 : vector<1x4x1x18xf32> to vector<4x18xf32>
    %c0_398 = arith.constant 0 : index
    %c0_399 = arith.constant 0 : index
    %c1_400 = arith.constant 1 : index
    %c0_401 = arith.constant 0 : index
    %452 = vector.load %arg3[%c0_398, %c0_399, %c1_400, %c0_401] : memref<1x4x8x18xf32, #tpu.memory_space<vmem>>, vector<1x4x1x18xf32>
    %453 = vector.shape_cast %452 : vector<1x4x1x18xf32> to vector<4x18xf32>
    %454 = vector.extract_strided_slice %451 {offsets = [0, 1], sizes = [4, 16], strides = [1, 1]} : vector<4x18xf32> to vector<4x16xf32>
    %c0_402 = arith.constant 0 : index
    %c0_403 = arith.constant 0 : index
    %c112 = arith.constant 112 : index
    %455 = vector.load %arg6[%c0_402, %c0_403, %c112] : memref<1x8x128xf32, #tpu.memory_space<vmem>>, vector<1x4x16xf32>
    %456 = vector.shape_cast %455 : vector<1x4x16xf32> to vector<4x16xf32>
    %457 = vector.shape_cast %454 : vector<4x16xf32> to vector<1x4x16xf32>
    tpu.vector_store %arg6[%c0_402, %c0_403, %c112], %457 {strides = array<i32>} : memref<1x8x128xf32, #tpu.memory_space<vmem>>, vector<1x4x16xf32>,
    %cst_404 = arith.constant 0.000000e+00 : f32
    %458 = vector.broadcast %cst_404 : f32 to vector<4x16xf32>
    %459 = vector.extract_strided_slice %449 {offsets = [0, 0], sizes = [4, 16], strides = [1, 1]} : vector<4x18xf32> to vector<4x16xf32>
    %c0_405 = arith.constant 0 : index
    %c0_406 = arith.constant 0 : index
    %c0_407 = arith.constant 0 : index
    %460 = vector.load %arg4[%c0_405, %c0_406, %c0_407] : memref<9x4x4xf32, #tpu.memory_space<vmem>>, vector<1x4x4xf32>
    %461 = vector.shape_cast %460 : vector<1x4x4xf32> to vector<4x4xf32>
    %cst_408 = arith.constant dense<0.000000e+00> : vector<4x16xf32>
    %462 = tpu.matmul %461, %459, %cst_408 {dimension_numbers = #tpu.dot_dimension_numbers<[1], [0], [0], [1], [0, 0, 1, 1], [], []>} : vector<4x4xf32>, vector<4x16xf32>, vector<4x16xf32> -> vector<4x16xf32>
    %463 = arith.addf %458, %462 : vector<4x16xf32>
    %464 = vector.extract_strided_slice %449 {offsets = [0, 1], sizes = [4, 16], strides = [1, 1]} : vector<4x18xf32> to vector<4x16xf32>
    %c1_409 = arith.constant 1 : index
    %c0_410 = arith.constant 0 : index
    %c0_411 = arith.constant 0 : index
    %465 = vector.load %arg4[%c1_409, %c0_410, %c0_411] : memref<9x4x4xf32, #tpu.memory_space<vmem>>, vector<1x4x4xf32>
    %466 = vector.shape_cast %465 : vector<1x4x4xf32> to vector<4x4xf32>
    %cst_412 = arith.constant dense<0.000000e+00> : vector<4x16xf32>
    %467 = tpu.matmul %466, %464, %cst_412 {dimension_numbers = #tpu.dot_dimension_numbers<[1], [0], [0], [1], [0, 0, 1, 1], [], []>} : vector<4x4xf32>, vector<4x16xf32>, vector<4x16xf32> -> vector<4x16xf32>
    %468 = arith.addf %463, %467 : vector<4x16xf32>
    %469 = vector.extract_strided_slice %449 {offsets = [0, 2], sizes = [4, 16], strides = [1, 1]} : vector<4x18xf32> to vector<4x16xf32>
    %c2_413 = arith.constant 2 : index
    %c0_414 = arith.constant 0 : index
    %c0_415 = arith.constant 0 : index
    %470 = vector.load %arg4[%c2_413, %c0_414, %c0_415] : memref<9x4x4xf32, #tpu.memory_space<vmem>>, vector<1x4x4xf32>
    %471 = vector.shape_cast %470 : vector<1x4x4xf32> to vector<4x4xf32>
    %cst_416 = arith.constant dense<0.000000e+00> : vector<4x16xf32>
    %472 = tpu.matmul %471, %469, %cst_416 {dimension_numbers = #tpu.dot_dimension_numbers<[1], [0], [0], [1], [0, 0, 1, 1], [], []>} : vector<4x4xf32>, vector<4x16xf32>, vector<4x16xf32> -> vector<4x16xf32>
    %473 = arith.addf %468, %472 : vector<4x16xf32>
    %474 = vector.extract_strided_slice %451 {offsets = [0, 0], sizes = [4, 16], strides = [1, 1]} : vector<4x18xf32> to vector<4x16xf32>
    %c3_417 = arith.constant 3 : index
    %c0_418 = arith.constant 0 : index
    %c0_419 = arith.constant 0 : index
    %475 = vector.load %arg4[%c3_417, %c0_418, %c0_419] : memref<9x4x4xf32, #tpu.memory_space<vmem>>, vector<1x4x4xf32>
    %476 = vector.shape_cast %475 : vector<1x4x4xf32> to vector<4x4xf32>
    %cst_420 = arith.constant dense<0.000000e+00> : vector<4x16xf32>
    %477 = tpu.matmul %476, %474, %cst_420 {dimension_numbers = #tpu.dot_dimension_numbers<[1], [0], [0], [1], [0, 0, 1, 1], [], []>} : vector<4x4xf32>, vector<4x16xf32>, vector<4x16xf32> -> vector<4x16xf32>
    %478 = arith.addf %473, %477 : vector<4x16xf32>
    %479 = vector.extract_strided_slice %451 {offsets = [0, 1], sizes = [4, 16], strides = [1, 1]} : vector<4x18xf32> to vector<4x16xf32>
    %c4_421 = arith.constant 4 : index
    %c0_422 = arith.constant 0 : index
    %c0_423 = arith.constant 0 : index
    %480 = vector.load %arg4[%c4_421, %c0_422, %c0_423] : memref<9x4x4xf32, #tpu.memory_space<vmem>>, vector<1x4x4xf32>
    %481 = vector.shape_cast %480 : vector<1x4x4xf32> to vector<4x4xf32>
    %cst_424 = arith.constant dense<0.000000e+00> : vector<4x16xf32>
    %482 = tpu.matmul %481, %479, %cst_424 {dimension_numbers = #tpu.dot_dimension_numbers<[1], [0], [0], [1], [0, 0, 1, 1], [], []>} : vector<4x4xf32>, vector<4x16xf32>, vector<4x16xf32> -> vector<4x16xf32>
    %483 = arith.addf %478, %482 : vector<4x16xf32>
    %484 = vector.extract_strided_slice %451 {offsets = [0, 2], sizes = [4, 16], strides = [1, 1]} : vector<4x18xf32> to vector<4x16xf32>
    %c5_425 = arith.constant 5 : index
    %c0_426 = arith.constant 0 : index
    %c0_427 = arith.constant 0 : index
    %485 = vector.load %arg4[%c5_425, %c0_426, %c0_427] : memref<9x4x4xf32, #tpu.memory_space<vmem>>, vector<1x4x4xf32>
    %486 = vector.shape_cast %485 : vector<1x4x4xf32> to vector<4x4xf32>
    %cst_428 = arith.constant dense<0.000000e+00> : vector<4x16xf32>
    %487 = tpu.matmul %486, %484, %cst_428 {dimension_numbers = #tpu.dot_dimension_numbers<[1], [0], [0], [1], [0, 0, 1, 1], [], []>} : vector<4x4xf32>, vector<4x16xf32>, vector<4x16xf32> -> vector<4x16xf32>
    %488 = arith.addf %483, %487 : vector<4x16xf32>
    %489 = vector.extract_strided_slice %453 {offsets = [0, 0], sizes = [4, 16], strides = [1, 1]} : vector<4x18xf32> to vector<4x16xf32>
    %c6_429 = arith.constant 6 : index
    %c0_430 = arith.constant 0 : index
    %c0_431 = arith.constant 0 : index
    %490 = vector.load %arg4[%c6_429, %c0_430, %c0_431] : memref<9x4x4xf32, #tpu.memory_space<vmem>>, vector<1x4x4xf32>
    %491 = vector.shape_cast %490 : vector<1x4x4xf32> to vector<4x4xf32>
    %cst_432 = arith.constant dense<0.000000e+00> : vector<4x16xf32>
    %492 = tpu.matmul %491, %489, %cst_432 {dimension_numbers = #tpu.dot_dimension_numbers<[1], [0], [0], [1], [0, 0, 1, 1], [], []>} : vector<4x4xf32>, vector<4x16xf32>, vector<4x16xf32> -> vector<4x16xf32>
    %493 = arith.addf %488, %492 : vector<4x16xf32>
    %494 = vector.extract_strided_slice %453 {offsets = [0, 1], sizes = [4, 16], strides = [1, 1]} : vector<4x18xf32> to vector<4x16xf32>
    %c7_433 = arith.constant 7 : index
    %c0_434 = arith.constant 0 : index
    %c0_435 = arith.constant 0 : index
    %495 = vector.load %arg4[%c7_433, %c0_434, %c0_435] : memref<9x4x4xf32, #tpu.memory_space<vmem>>, vector<1x4x4xf32>
    %496 = vector.shape_cast %495 : vector<1x4x4xf32> to vector<4x4xf32>
    %cst_436 = arith.constant dense<0.000000e+00> : vector<4x16xf32>
    %497 = tpu.matmul %496, %494, %cst_436 {dimension_numbers = #tpu.dot_dimension_numbers<[1], [0], [0], [1], [0, 0, 1, 1], [], []>} : vector<4x4xf32>, vector<4x16xf32>, vector<4x16xf32> -> vector<4x16xf32>
    %498 = arith.addf %493, %497 : vector<4x16xf32>
    %499 = vector.extract_strided_slice %453 {offsets = [0, 2], sizes = [4, 16], strides = [1, 1]} : vector<4x18xf32> to vector<4x16xf32>
    %c8_437 = arith.constant 8 : index
    %c0_438 = arith.constant 0 : index
    %c0_439 = arith.constant 0 : index
    %500 = vector.load %arg4[%c8_437, %c0_438, %c0_439] : memref<9x4x4xf32, #tpu.memory_space<vmem>>, vector<1x4x4xf32>
    %501 = vector.shape_cast %500 : vector<1x4x4xf32> to vector<4x4xf32>
    %cst_440 = arith.constant dense<0.000000e+00> : vector<4x16xf32>
    %502 = tpu.matmul %501, %499, %cst_440 {dimension_numbers = #tpu.dot_dimension_numbers<[1], [0], [0], [1], [0, 0, 1, 1], [], []>} : vector<4x4xf32>, vector<4x16xf32>, vector<4x16xf32> -> vector<4x16xf32>
    %503 = arith.addf %498, %502 : vector<4x16xf32>
    %c0_441 = arith.constant 0 : index
    %c0_442 = arith.constant 0 : index
    %504 = vector.load %arg5[%c0_441, %c0_442] : memref<4x1xf32, #tpu.memory_space<vmem>>, vector<4x1xf32>
    %505 = vector.broadcast %504 : vector<4x1xf32> to vector<4x16xf32>
    %506 = arith.addf %503, %505 : vector<4x16xf32>
    %cst_443 = arith.constant 0.000000e+00 : f32
    %507 = vector.broadcast %cst_443 : f32 to vector<4x16xf32>
    %508 = arith.maximumf %506, %507 : vector<4x16xf32>
    %c0_444 = arith.constant 0 : index
    %c4_445 = arith.constant 4 : index
    %c112_446 = arith.constant 112 : index
    %509 = vector.load %arg6[%c0_444, %c4_445, %c112_446] : memref<1x8x128xf32, #tpu.memory_space<vmem>>, vector<1x4x16xf32>
    %510 = vector.shape_cast %509 : vector<1x4x16xf32> to vector<4x16xf32>
    %511 = vector.shape_cast %508 : vector<4x16xf32> to vector<1x4x16xf32>
    tpu.vector_store %arg6[%c0_444, %c4_445, %c112_446], %511 {strides = array<i32>} : memref<1x8x128xf32, #tpu.memory_space<vmem>>, vector<1x4x16xf32>,
    return
  }
  func.func @transform_0(%arg0: i32, %arg1: i32) -> (i32, i32, i32, i32) {
    %c0_i32 = arith.constant 0 : i32
    %c0_i32_0 = arith.constant 0 : i32
    %c0_i32_1 = arith.constant 0 : i32
    return %arg0, %c0_i32, %arg1, %c0_i32_0 : i32, i32, i32, i32
  }
  func.func @transform_1(%arg0: i32, %arg1: i32) -> (i32, i32, i32, i32) {
    %c1_i32 = arith.constant 1 : i32
    %0 = arith.addi %arg1, %c1_i32 : i32
    %c1_i32_0 = arith.constant 1 : i32
    %1 = arith.muli %0, %c1_i32_0 : i32
    %c0_i32 = arith.constant 0 : i32
    %c0_i32_1 = arith.constant 0 : i32
    %c0_i32_2 = arith.constant 0 : i32
    return %arg0, %c0_i32, %1, %c0_i32_1 : i32, i32, i32, i32
  }
  func.func @transform_2(%arg0: i32, %arg1: i32) -> (i32, i32, i32) {
    %c0_i32 = arith.constant 0 : i32
    %c0_i32_0 = arith.constant 0 : i32
    %c0_i32_1 = arith.constant 0 : i32
    %c0_i32_2 = arith.constant 0 : i32
    return %c0_i32, %c0_i32_0, %c0_i32_1 : i32, i32, i32
  }
  func.func @transform_3(%arg0: i32, %arg1: i32) -> (i32, i32) {
    %c0_i32 = arith.constant 0 : i32
    %c0_i32_0 = arith.constant 0 : i32
    %c0_i32_1 = arith.constant 0 : i32
    return %c0_i32, %c0_i32_0 : i32, i32
  }
  func.func @transform_4(%arg0: i32, %arg1: i32) -> (i32, i32, i32) {
    %c0_i32 = arith.constant 0 : i32
    %c0_i32_0 = arith.constant 0 : i32
    return %arg0, %c0_i32, %arg1 : i32, i32, i32
  }
}

</mosaic_0001>

<llo_original>
// kernel: pass2nd_skip_connection.1
$region0: #{pass2nd_skip_connection.1}
  #allocation0 [shape = 'u32[]', space=smem, size = 0x4, offset = 0x4, fixed_abs, tag = 'smem constant byte address 0x4 - core index']
  #allocation1 [shape = 'u32[72,128]{1,0:T(1,128)}', space=vmem, size = 0x9000, scoped, tag = 'internal scratch']
  %s0 = inlined_call_operand.vmem [shape: f32[2,4,18,18], index: 0, kind: input, shape index: {}, may-alias: {0,1}]
  %s1 = inlined_call_operand.vmem [shape: f32[2,4,18,18], index: 1, kind: input, shape index: {}, may-alias: {0,1}]
  %s2 = inlined_call_operand.vmem [shape: f32[9,4,4], index: 2, kind: input, shape index: {}]
  %s3 = inlined_call_operand.vmem [shape: f32[4,1], index: 3, kind: input, shape index: {}]
  %s4 = inlined_call_operand.vmem [shape: f32[2,8,256], index: 4, kind: output, shape index: {}]
  %s5 = sld [smem:[#allocation0]]
  $region125: #{pass2nd_skip_connection.1} parent=0
    _
  %s7 = ssub.s32 1, %s5
  %s8 = scalar_select 0, %s7, %s5
  $region1: #{pass2nd_skip_connection.1} parent=0
    #allocation2 [shape = 'u8[32768]{0}', space=vmem, size = 0x8000, scoped, tag = 'input window, operand 0']
    #allocation3 [shape = 'u8[32768]{0}', space=vmem, size = 0x8000, scoped, tag = 'input window, operand 1']
    loop: start=0, step=1, limit=6
    $region2: #{pass2nd_skip_connection.1} parent=1 // loop_pre_header
      _
    $region3: #{pass2nd_skip_connection.1} parent=1 // loop_header
      %s10 = sphi 0, %s14
      %p11 = scmp.ge.s32.totalorder %s10, 6
      %s17 = sphi 0, %s29
      %s18 = sphi 0, %s25
      %s19 = sphi 0, %s17
      %s20 = sphi 0, %s18
      %s21 = sphi 0, %s19
      %s22 = sphi 0, %s20
      %s34 = sphi 0, %s36
      %s37 = sphi 0, %s34
      %s38 = sphi 0, %s37
      %s54 = sphi 0, %s38
      %s64 = sphi 0, %s66
      %s67 = sphi 0, %s64
      %s68 = sphi 0, %s67
      %s84 = sphi 0, %s68
      %s88 = sphi 0, %s88
      %s90 = sphi 0, %s88
      %s91 = sphi 0, %s90
      %s105 = sphi 0, %s91
      %s109 = sphi 0, %s109
      %s111 = sphi 0, %s109
      %s112 = sphi 0, %s111
      %s126 = sphi 0, %s112
      %s134 = sphi 0, %s136
      %s137 = sphi 0, %s134
      %s138 = sphi 0, %s137
      %s154 = sphi 0, %s138
    $region4: #{pass2nd_skip_connection.1} parent=1 // loop_header_branch
      %13 = sbr.rel (%p11) target = $region8
    $region5: #{pass2nd_skip_connection.1} parent=1 // loop_body
      %s15 = ssub.s32 %s10, 1
      %s16 = ssub.s32 %s10, 2
      %s23 = sadd.s32 1, %s18
      %p24 = scmp.ge.s32.totalorder %s23, 2
      %s25 = scalar_select %p24, 0, %s23
      %s26 = sadd.s32 1, %s17
      %s27 = scalar_select %p24, %s26, %s17
      %p28 = scmp.ge.s32.totalorder %s27, 2
      %s29 = scalar_select %p28, 0, %s27
      %s30 = ssub.s32 %s17, %s29
      %s31 = ssub.s32 %s18, %s25
      %s32 = sor.u32 %s30, %s31
      %p33 = scmp.eq.s32.totalorder %s32, 0
      %s35 = sadd.s32 %s34, 1
      %s36 = scalar_select %p33, %s34, %s35
      %p39 = pneg %p33
      %p40 = scmp.eq.s32.totalorder %s10, 3
      %p41 = por %p39, %p40
      %p42 = scmp.ne.s32.totalorder %s34, %s37
      %p43 = scmp.eq.s32.totalorder %s10, 0
      %p44 = por %p42, %p43
      %p45 = scmp.ne.s32.totalorder %s34, %s37
      %p46 = scmp.eq.s32.totalorder %s15, 3
      %p47 = por %p45, %p46
      %p48 = scmp.ne.s32.totalorder %s37, %s38
      %p49 = scmp.eq.s32.totalorder %s15, 0
      %p50 = por %p48, %p49
      %p51 = scmp.ne.s32.totalorder %s37, %s38
      %p52 = scmp.eq.s32.totalorder %s16, 3
      %p53 = por %p51, %p52
      %p55 = scmp.ne.s32.totalorder %s38, %s54
      %p56 = scmp.eq.s32.totalorder %s16, 0
      %p57 = por %p55, %p56
      %s58 = sadd.s32 %s18, 1
      %s59 = sadd.s32 %s25, 1
      %s60 = ssub.s32 %s17, %s29
      %s61 = ssub.s32 %s58, %s59
      %s62 = sor.u32 %s60, %s61
      %p63 = scmp.eq.s32.totalorder %s62, 0
      %s65 = sadd.s32 %s64, 1
      %s66 = scalar_select %p63, %s64, %s65
      %p69 = pneg %p63
      %p70 = scmp.eq.s32.totalorder %s10, 3
      %p71 = por %p69, %p70
      %p72 = scmp.ne.s32.totalorder %s64, %s67
      %p73 = scmp.eq.s32.totalorder %s10, 0
      %p74 = por %p72, %p73
      %p75 = scmp.ne.s32.totalorder %s64, %s67
      %p76 = scmp.eq.s32.totalorder %s15, 3
      %p77 = por %p75, %p76
      %p78 = scmp.ne.s32.totalorder %s67, %s68
      %p79 = scmp.eq.s32.totalorder %s15, 0
      %p80 = por %p78, %p79
      %p81 = scmp.ne.s32.totalorder %s67, %s68
      %p82 = scmp.eq.s32.totalorder %s16, 3
      %p83 = por %p81, %p82
      %p85 = scmp.ne.s32.totalorder %s68, %s84
      %p86 = scmp.eq.s32.totalorder %s16, 0
      %p87 = por %p85, %p86
      %s89 = sadd.s32 %s88, 1
      %p92 = scmp.eq.s32.totalorder %s10, 3
      %p93 = scmp.ne.s32.totalorder %s88, %s90
      %p94 = scmp.eq.s32.totalorder %s10, 0
      %p95 = por %p93, %p94
      %p96 = scmp.ne.s32.totalorder %s88, %s90
      %p97 = scmp.eq.s32.totalorder %s15, 3
      %p98 = por %p96, %p97
      %p99 = scmp.ne.s32.totalorder %s90, %s91
      %p100 = scmp.eq.s32.totalorder %s15, 0
      %p101 = por %p99, %p100
      %p102 = scmp.ne.s32.totalorder %s90, %s91
      %p103 = scmp.eq.s32.totalorder %s16, 3
      %p104 = por %p102, %p103
      %p106 = scmp.ne.s32.totalorder %s91, %s105
      %p107 = scmp.eq.s32.totalorder %s16, 0
      %p108 = por %p106, %p107
      %s110 = sadd.s32 %s109, 1
      %p113 = scmp.eq.s32.totalorder %s10, 3
      %p114 = scmp.ne.s32.totalorder %s109, %s111
      %p115 = scmp.eq.s32.totalorder %s10, 0
      %p116 = por %p114, %p115
      %p117 = scmp.ne.s32.totalorder %s109, %s111
      %p118 = scmp.eq.s32.totalorder %s15, 3
      %p119 = por %p117, %p118
      %p120 = scmp.ne.s32.totalorder %s111, %s112
      %p121 = scmp.eq.s32.totalorder %s15, 0
      %p122 = por %p120, %p121
      %p123 = scmp.ne.s32.totalorder %s111, %s112
      %p124 = scmp.eq.s32.totalorder %s16, 3
      %p125 = por %p123, %p124
      %p127 = scmp.ne.s32.totalorder %s112, %s126
      %p128 = scmp.eq.s32.totalorder %s16, 0
      %p129 = por %p127, %p128
      %s130 = ssub.s32 %s17, %s29
      %s131 = ssub.s32 %s18, %s25
      %s132 = sor.u32 %s130, %s131
      %p133 = scmp.eq.s32.totalorder %s132, 0
      %s135 = sadd.s32 %s134, 1
      %s136 = scalar_select %p133, %s134, %s135
      %p139 = pneg %p133
      %p140 = scmp.eq.s32.totalorder %s10, 3
      %p141 = por %p139, %p140
      %p142 = scmp.ne.s32.totalorder %s134, %s137
      %p143 = scmp.eq.s32.totalorder %s10, 0
      %p144 = por %p142, %p143
      %p145 = scmp.ne.s32.totalorder %s134, %s137
      %p146 = scmp.eq.s32.totalorder %s15, 3
      %p147 = por %p145, %p146
      %p148 = scmp.ne.s32.totalorder %s137, %s138
      %p149 = scmp.eq.s32.totalorder %s15, 0
      %p150 = por %p148, %p149
      %p151 = scmp.ne.s32.totalorder %s137, %s138
      %p152 = scmp.eq.s32.totalorder %s16, 3
      %p153 = por %p151, %p152
      %p155 = scmp.ne.s32.totalorder %s138, %s154
      %p156 = scmp.eq.s32.totalorder %s16, 0
      %p157 = por %p155, %p156
      %p158 = scmp.le.s32.totalorder 1, %s10
      %p159 = scmp.lt.s32.totalorder %s10, 5
      %p160 = pnand %p158, %p159
      %p161 = pneg %p160
      // Predicated region
      $region9: #{pass2nd_skip_connection.1} parent=5 // pred_check
        _
      $region10: #{pass2nd_skip_connection.1} parent=5 // pred_check_branch
        %163 = sbr.rel (%p160) target = $region12
      $region11: #{pass2nd_skip_connection.1} parent=5 // pred_region
        %s164 = ssub.s32 %s10, 1
        // Predicated region
        $region13: #{pass2nd_skip_connection.1} parent=11 // pred_check
          %p165 = pneg %p101
        $region14: #{pass2nd_skip_connection.1} parent=11 // pred_check_branch
          %167 = sbr.rel (%p165) target = $region16
        $region15: #{pass2nd_skip_connection.1} parent=11 // pred_region
          _
        $region16: #{pass2nd_skip_connection.1} parent=11 // pred_fallthru
          _
        // Predicated region
        $region17: #{pass2nd_skip_connection.1} parent=11 // pred_check
          %p168 = pneg %p122
        $region18: #{pass2nd_skip_connection.1} parent=11 // pred_check_branch
          %170 = sbr.rel (%p168) target = $region20
        $region19: #{pass2nd_skip_connection.1} parent=11 // pred_region
          _
        $region20: #{pass2nd_skip_connection.1} parent=11 // pred_fallthru
          _
      $region12: #{pass2nd_skip_connection.1} parent=5 // pred_fallthru
        _
      %p171 = scmp.lt.s32.totalorder %s10, 4
      // Predicated region
      $region21: #{pass2nd_skip_connection.1} parent=5 // pred_check
        %p172 = pneg %p171
      $region22: #{pass2nd_skip_connection.1} parent=5 // pred_check_branch
        %174 = sbr.rel (%p172) target = $region24
      $region23: #{pass2nd_skip_connection.1} parent=5 // pred_region
        // Predicated region
        $region25: #{pass2nd_skip_connection.1} parent=23 // pred_check
          %p175 = pneg %p44
        $region26: #{pass2nd_skip_connection.1} parent=23 // pred_check_branch
          %177 = sbr.rel (%p175) target = $region28
        $region27: #{pass2nd_skip_connection.1} parent=23 // pred_region
          %s178 = sand.u32 %s34, 1
          %s179 = sand.u32 %s34, 1
          %s180 = smul.addr %s179, 32
          %s181 = scalar_lea.vmem [#allocation2], %s180
          %s182 = smul.addr %s17, 12
          %s183 = sadd.s32 %s18, %s182
          %s184 = smul.addr %s183, 8
          %s185 = scalar_lea.vmem %s0, %s184
          // Predicated region
          $region29: #{pass2nd_skip_connection.1} parent=27 // pred_check
            _
          $region30: #{pass2nd_skip_connection.1} parent=27 // pred_check_branch
            %187 = sbr.rel (0) target = $region32
          $region31: #{pass2nd_skip_connection.1} parent=27 // pred_region
            // Predicated region
            $region33: #{pass2nd_skip_connection.1} parent=31 // pred_check
              _
            $region34: #{pass2nd_skip_connection.1} parent=31 // pred_check_branch
              %189 = sbr.rel (0) target = $region36
            $region35: #{pass2nd_skip_connection.1} parent=31 // pred_region
              // Predicated region
              $region48: #{pass2nd_skip_connection.1} parent=35 // pred_check
                _
              $region49: #{pass2nd_skip_connection.1} parent=35 // pred_check_branch
                %211 = sbr.rel (0) target = $region51
              $region50: #{pass2nd_skip_connection.1} parent=35 // pred_region
                loop: start=0, step=1, limit=1
                $region52: #{pass2nd_skip_connection.1} parent=50 // loop_pre_header
                  _
                $region53: #{pass2nd_skip_connection.1} parent=50 // loop_header
                  %s213 = sphi 0, %s217
                  %p214 = scmp.ge.s32.totalorder %s213, 1
                  %s218 = sphi %s185, %s185
                  %s219 = sphi %s181, %s181
                $region54: #{pass2nd_skip_connection.1} parent=50 // loop_header_branch
                  %216 = sbr.rel (%p214) target = $region58
                $region55: #{pass2nd_skip_connection.1} parent=50 // loop_body
                  %v220 = vld [vmem:[%s218] sm:$0xff]
                  %221 = vst [vmem:[%s219] sm:$0xff] %v220
                  %v222 = vld [vmem:[%s218 + $0x18] sm:$0xff]
                  %223 = vst [vmem:[%s219 + $0x8] sm:$0xff] %v222
                  %v224 = vld [vmem:[%s218 + $0x30] sm:$0xff]
                  %225 = vst [vmem:[%s219 + $0x10] sm:$0xff] %v224
                  %v226 = vld [vmem:[%s218 + $0x48] sm:$0xff]
                  %227 = vst [vmem:[%s219 + $0x18] sm:$0xff] %v226
                $region56: #{pass2nd_skip_connection.1} parent=50 // loop_footer
                  %s217 = sadd.s32 1, %s213
                $region57: #{pass2nd_skip_connection.1} parent=50 // loop_footer_branch
                  %212 = sbr.rel target = $region53
                $region58: #{pass2nd_skip_connection.1} parent=50 // loop_exit
                  _
              $region51: #{pass2nd_skip_connection.1} parent=35 // pred_fallthru
                _
              // Predicated region
              $region59: #{pass2nd_skip_connection.1} parent=35 // pred_check
                _
              $region60: #{pass2nd_skip_connection.1} parent=35 // pred_check_branch
                %229 = sbr.rel target = $region62
              $region61: #{pass2nd_skip_connection.1} parent=35 // pred_region
                _
              $region62: #{pass2nd_skip_connection.1} parent=35 // pred_fallthru
                _
            $region36: #{pass2nd_skip_connection.1} parent=31 // pred_fallthru
              _
            // Predicated region
            $region37: #{pass2nd_skip_connection.1} parent=31 // pred_check
              _
            $region38: #{pass2nd_skip_connection.1} parent=31 // pred_check_branch
              %191 = sbr.rel target = $region40
            $region39: #{pass2nd_skip_connection.1} parent=31 // pred_region
              %s193 = ssub.s32 256, 1
              loop: start=0, step=1, limit=1
              $region41: #{pass2nd_skip_connection.1} parent=39 // loop_pre_header
                _
              $region42: #{pass2nd_skip_connection.1} parent=39 // loop_header
                %s195 = sphi 0, %s199
                %p196 = scmp.ge.s32.totalorder %s195, 1
                %s200 = sphi %s185, %s185
                %s201 = sphi %s181, %s181
              $region43: #{pass2nd_skip_connection.1} parent=39 // loop_header_branch
                %198 = sbr.rel (%p196) target = $region47
              $region44: #{pass2nd_skip_connection.1} parent=39 // loop_body
                %v202 = vld [vmem:[%s200] sm:%s193]
                %203 = vst [vmem:[%s201] sm:%s193] %v202
                %v204 = vld [vmem:[%s200 + $0x18] sm:%s193]
                %205 = vst [vmem:[%s201 + $0x8] sm:%s193] %v204
                %v206 = vld [vmem:[%s200 + $0x30] sm:%s193]
                %207 = vst [vmem:[%s201 + $0x10] sm:%s193] %v206
                %v208 = vld [vmem:[%s200 + $0x48] sm:%s193]
                %209 = vst [vmem:[%s201 + $0x18] sm:%s193] %v208
              $region45: #{pass2nd_skip_connection.1} parent=39 // loop_footer
                %s199 = sadd.s32 1, %s195
              $region46: #{pass2nd_skip_connection.1} parent=39 // loop_footer_branch
                %194 = sbr.rel target = $region42
              $region47: #{pass2nd_skip_connection.1} parent=39 // loop_exit
                _
            $region40: #{pass2nd_skip_connection.1} parent=31 // pred_fallthru
              _
          $region32: #{pass2nd_skip_connection.1} parent=27 // pred_fallthru
            _
          %230 = vnop
        $region28: #{pass2nd_skip_connection.1} parent=23 // pred_fallthru
          _
        // Predicated region
        $region63: #{pass2nd_skip_connection.1} parent=23 // pred_check
          %p231 = pneg %p74
        $region64: #{pass2nd_skip_connection.1} parent=23 // pred_check_branch
          %233 = sbr.rel (%p231) target = $region66
        $region65: #{pass2nd_skip_connection.1} parent=23 // pred_region
          %s234 = sand.u32 %s64, 1
          %s235 = sand.u32 %s64, 1
          %s236 = smul.addr %s235, 32
          %s237 = scalar_lea.vmem [#allocation3], %s236
          %s238 = sadd.s32 %s18, 1
          %s239 = smul.addr %s17, 12
          %s240 = sadd.s32 %s238, %s239
          %s241 = smul.addr %s240, 8
          %s242 = scalar_lea.vmem %s1, %s241
          // Predicated region
          $region67: #{pass2nd_skip_connection.1} parent=65 // pred_check
            _
          $region68: #{pass2nd_skip_connection.1} parent=65 // pred_check_branch
            %244 = sbr.rel (0) target = $region70
          $region69: #{pass2nd_skip_connection.1} parent=65 // pred_region
            // Predicated region
            $region71: #{pass2nd_skip_connection.1} parent=69 // pred_check
              _
            $region72: #{pass2nd_skip_connection.1} parent=69 // pred_check_branch
              %246 = sbr.rel (0) target = $region74
            $region73: #{pass2nd_skip_connection.1} parent=69 // pred_region
              // Predicated region
              $region86: #{pass2nd_skip_connection.1} parent=73 // pred_check
                _
              $region87: #{pass2nd_skip_connection.1} parent=73 // pred_check_branch
                %268 = sbr.rel (0) target = $region89
              $region88: #{pass2nd_skip_connection.1} parent=73 // pred_region
                loop: start=0, step=1, limit=1
                $region90: #{pass2nd_skip_connection.1} parent=88 // loop_pre_header
                  _
                $region91: #{pass2nd_skip_connection.1} parent=88 // loop_header
                  %s270 = sphi 0, %s274
                  %p271 = scmp.ge.s32.totalorder %s270, 1
                  %s275 = sphi %s242, %s242
                  %s276 = sphi %s237, %s237
                $region92: #{pass2nd_skip_connection.1} parent=88 // loop_header_branch
                  %273 = sbr.rel (%p271) target = $region96
                $region93: #{pass2nd_skip_connection.1} parent=88 // loop_body
                  %v277 = vld [vmem:[%s275] sm:$0xff]
                  %278 = vst [vmem:[%s276] sm:$0xff] %v277
                  %v279 = vld [vmem:[%s275 + $0x18] sm:$0xff]
                  %280 = vst [vmem:[%s276 + $0x8] sm:$0xff] %v279
                  %v281 = vld [vmem:[%s275 + $0x30] sm:$0xff]
                  %282 = vst [vmem:[%s276 + $0x10] sm:$0xff] %v281
                  %v283 = vld [vmem:[%s275 + $0x48] sm:$0xff]
                  %284 = vst [vmem:[%s276 + $0x18] sm:$0xff] %v283
                $region94: #{pass2nd_skip_connection.1} parent=88 // loop_footer
                  %s274 = sadd.s32 1, %s270
                $region95: #{pass2nd_skip_connection.1} parent=88 // loop_footer_branch
                  %269 = sbr.rel target = $region91
                $region96: #{pass2nd_skip_connection.1} parent=88 // loop_exit
                  _
              $region89: #{pass2nd_skip_connection.1} parent=73 // pred_fallthru
                _
              // Predicated region
              $region97: #{pass2nd_skip_connection.1} parent=73 // pred_check
                _
              $region98: #{pass2nd_skip_connection.1} parent=73 // pred_check_branch
                %286 = sbr.rel target = $region100
              $region99: #{pass2nd_skip_connection.1} parent=73 // pred_region
                _
              $region100: #{pass2nd_skip_connection.1} parent=73 // pred_fallthru
                _
            $region74: #{pass2nd_skip_connection.1} parent=69 // pred_fallthru
              _
            // Predicated region
            $region75: #{pass2nd_skip_connection.1} parent=69 // pred_check
              _
            $region76: #{pass2nd_skip_connection.1} parent=69 // pred_check_branch
              %248 = sbr.rel target = $region78
            $region77: #{pass2nd_skip_connection.1} parent=69 // pred_region
              %s250 = ssub.s32 256, 1
              loop: start=0, step=1, limit=1
              $region79: #{pass2nd_skip_connection.1} parent=77 // loop_pre_header
                _
              $region80: #{pass2nd_skip_connection.1} parent=77 // loop_header
                %s252 = sphi 0, %s256
                %p253 = scmp.ge.s32.totalorder %s252, 1
                %s257 = sphi %s242, %s242
                %s258 = sphi %s237, %s237
              $region81: #{pass2nd_skip_connection.1} parent=77 // loop_header_branch
                %255 = sbr.rel (%p253) target = $region85
              $region82: #{pass2nd_skip_connection.1} parent=77 // loop_body
                %v259 = vld [vmem:[%s257] sm:%s250]
                %260 = vst [vmem:[%s258] sm:%s250] %v259
                %v261 = vld [vmem:[%s257 + $0x18] sm:%s250]
                %262 = vst [vmem:[%s258 + $0x8] sm:%s250] %v261
                %v263 = vld [vmem:[%s257 + $0x30] sm:%s250]
                %264 = vst [vmem:[%s258 + $0x10] sm:%s250] %v263
                %v265 = vld [vmem:[%s257 + $0x48] sm:%s250]
                %266 = vst [vmem:[%s258 + $0x18] sm:%s250] %v265
              $region83: #{pass2nd_skip_connection.1} parent=77 // loop_footer
                %s256 = sadd.s32 1, %s252
              $region84: #{pass2nd_skip_connection.1} parent=77 // loop_footer_branch
                %251 = sbr.rel target = $region80
              $region85: #{pass2nd_skip_connection.1} parent=77 // loop_exit
                _
            $region78: #{pass2nd_skip_connection.1} parent=69 // pred_fallthru
              _
          $region70: #{pass2nd_skip_connection.1} parent=65 // pred_fallthru
            _
          %287 = vnop
        $region66: #{pass2nd_skip_connection.1} parent=23 // pred_fallthru
          _
      $region24: #{pass2nd_skip_connection.1} parent=5 // pred_fallthru
        _
      %p288 = scmp.le.s32.totalorder 1, %s10
      %p289 = scmp.lt.s32.totalorder %s10, 5
      %p290 = pnand %p288, %p289
      %p291 = pneg %p290
      // Predicated region
      $region101: #{pass2nd_skip_connection.1} parent=5 // pred_check
        _
      $region102: #{pass2nd_skip_connection.1} parent=5 // pred_check_branch
        %293 = sbr.rel (%p290) target = $region104
      $region103: #{pass2nd_skip_connection.1} parent=5 // pred_region
        %s294 = ssub.s32 %s10, 1
        %s295 = sand.u32 %s37, 1
        %s296 = sand.u32 %s37, 1
        %s297 = smul.addr %s296, 32
        %s298 = scalar_lea.vmem [#allocation2], %s297
        // Predicated region
        $region105: #{pass2nd_skip_connection.1} parent=103 // pred_check
          %p299 = pneg %p50
        $region106: #{pass2nd_skip_connection.1} parent=103 // pred_check_branch
          %301 = sbr.rel (%p299) target = $region108
        $region107: #{pass2nd_skip_connection.1} parent=103 // pred_region
          _
        $region108: #{pass2nd_skip_connection.1} parent=103 // pred_fallthru
          _
        %s302 = sand.u32 %s67, 1
        %s303 = sand.u32 %s67, 1
        %s304 = smul.addr %s303, 32
        %s305 = scalar_lea.vmem [#allocation3], %s304
        // Predicated region
        $region109: #{pass2nd_skip_connection.1} parent=103 // pred_check
          %p306 = pneg %p80
        $region110: #{pass2nd_skip_connection.1} parent=103 // pred_check_branch
          %308 = sbr.rel (%p306) target = $region112
        $region111: #{pass2nd_skip_connection.1} parent=103 // pred_region
          _
        $region112: #{pass2nd_skip_connection.1} parent=103 // pred_fallthru
          _
        %s309 = sand.u32 %s37, 1
        %s310 = sand.u32 %s37, 1
        %s311 = smul.addr %s310, 32
        %s312 = scalar_lea.vmem [#allocation2], %s311
        %p313 = pneg %p50
        %p314 = pneg %p47
        %s315 = sand.u32 %s67, 1
        %s316 = sand.u32 %s67, 1
        %s317 = smul.addr %s316, 32
        %s318 = scalar_lea.vmem [#allocation3], %s317
        %p319 = pneg %p80
        %p320 = pneg %p77
        %p321 = pneg %p101
        %p322 = pneg %p98
        %p323 = pneg %p122
        %p324 = pneg %p119
        %p325 = pneg %p150
        %p326 = pneg %p147
        %p327 = scmp.lt.s32.totalorder %s19, 1
        %s328 = scalar_select %p327, %s19, 1
        %p329 = scmp.lt.s32.totalorder %s20, 1
        %s330 = scalar_select %p329, %s20, 1
        %s331 = smul.addr %s328, 2
        %s332 = sadd.s32 %s330, %s331
        %s333 = smul.addr %s332, 8
        %s334 = scalar_lea.vmem %s4, %s333
        %s335 = sadd.s32 %s20, 1
        %p336 = scmp.lt.s32.totalorder %s19, 1
        %s337 = scalar_select %p336, %s19, 1
        %p338 = scmp.lt.s32.totalorder %s20, 1
        %s339 = scalar_select %p338, %s20, 1
        %s340 = smul.addr %s337, 2
        %s341 = sadd.s32 %s339, %s340
        %s342 = smul.addr %s341, 8
        %s343 = scalar_lea.vmem %s4, %s342
        %v344 = vld [vmem:[%s298] sm:$0x1]
        %v345 = vld [vmem:[%s298 + $0x8] sm:$0x1]
        %v346 = vld [vmem:[%s298 + $0x10] sm:$0x1]
        %v347 = vld [vmem:[%s298 + $0x18] sm:$0x1]
        %v348 = vld [vmem:[%s298 + $0x1] sm:$0x1]
        %v349 = vld [vmem:[%s298 + $0x9] sm:$0x1]
        %v350 = vld [vmem:[%s298 + $0x11] sm:$0x1]
        %v351 = vld [vmem:[%s298 + $0x19] sm:$0x1]
        %v352 = vld [vmem:[%s298 + $0x2] sm:$0x1]
        %v353 = vld [vmem:[%s298 + $0xa] sm:$0x1]
        %v354 = vld [vmem:[%s298 + $0x12] sm:$0x1]
        %v355 = vld [vmem:[%s298 + $0x1a] sm:$0x1]
        %v360 = vrot.slane %v349, 7
        %vm361 = vcmask 1041409
        %v362 = vsel %vm361, %v360, %v348
        %v363 = vrot.slane %v350, 6
        %vm364 = vcmask 1042434
        %v365 = vsel %vm364, %v363, %v362
        %v366 = vrot.slane %v351, 5
        %vm367 = vcmask 1043459
        %v368 = vsel %vm367, %v366, %v365
        %369 = vrot.lane.b32.xlu0 %v368, 127
        %v370 = vpop.permute.xlu0 %369
        %vm372 = vcmask 125952
        %373 = vst.msk [vmem:[%s343] sm:$0xf] %vm372, %v370
        %v374 = vld [vmem:[%s2] sm:$0xf]
        %s375 = scalar_lea.vmem %s2, 4
        %v376 = vld [vmem:[%s375] sm:$0xf]
        %v381 = vrot.slane %v345, 7
        %v382 = vsel %vm361, %v381, %v344
        %v383 = vrot.slane %v346, 6
        %v384 = vsel %vm364, %v383, %v382
        %v385 = vrot.slane %v347, 5
        %v386 = vsel %vm367, %v385, %v384
        %387 = vrot.lane.b32.xlu0 %v386, 127
        %v388 = vpop.permute.xlu0 %387
        %vm389 = vcmask 31744
        %v391 = vsel %vm389, %v376, 0
        %vm393 = vcmask 1043456
        %v394 = vsel %vm393, %v388, 0
        %396 = vmatpush.msra.mxu0 0.0
        %397 = vmatpush.msra.mxu0 0.0
        %398 = vmatpush.msra.mxu0 0.0
        %399 = vmatpush.msra.mxu0 0.0
        %400 = vmatpush.msra.mxu0 0.0
        %401 = vmatpush.msra.mxu0 0.0
        %402 = vmatpush.msra.mxu0 0.0
        %403 = vmatpush.msra.mxu0 0.0
        %404 = vmatpush.msra.mxu0 0.0
        %405 = vmatpush.msra.mxu0 0.0
        %406 = vmatpush.msra.mxu0 0.0
        %407 = vmatpush.msra.mxu0 0.0
        %408 = vmatpush.msra.mxu0 0.0
        %409 = vmatpush.msra.mxu0 0.0
        %410 = vmatpush.msra.mxu0 0.0
        %411 = vmatpush.msra.mxu0 %v394
        %412 = vmatmul.f32.gmra.mxu0 %v391
        %v413 = vpop.f32.mrf.mxu0
        %v414 = vadd.f32 0.0, %v413
        %415 = vdwg.mxu0
        %v417 = vsel %vm389, %v374, 0
        %v419 = vsel %vm393, %v386, 0
        %421 = vmatpush.msra.mxu0 0.0
        %422 = vmatpush.msra.mxu0 0.0
        %423 = vmatpush.msra.mxu0 0.0
        %424 = vmatpush.msra.mxu0 0.0
        %425 = vmatpush.msra.mxu0 0.0
        %426 = vmatpush.msra.mxu0 0.0
        %427 = vmatpush.msra.mxu0 0.0
        %428 = vmatpush.msra.mxu0 0.0
        %429 = vmatpush.msra.mxu0 0.0
        %430 = vmatpush.msra.mxu0 0.0
        %431 = vmatpush.msra.mxu0 0.0
        %432 = vmatpush.msra.mxu0 0.0
        %433 = vmatpush.msra.mxu0 0.0
        %434 = vmatpush.msra.mxu0 0.0
        %435 = vmatpush.msra.mxu0 0.0
        %436 = vmatpush.msra.mxu0 %v419
        %437 = vmatmul.f32.gmra.mxu0 %v417
        %v438 = vpop.f32.mrf.mxu0
        %v439 = vadd.f32 %v414, %v438
        %440 = vdwg.mxu0
        %s441 = scalar_lea.vmem %s2, 8
        %v442 = vld [vmem:[%s441] sm:$0xf]
        %443 = vrot.lane.b32.xlu0 %v386, 126
        %v444 = vpop.permute.xlu0 %443
        %v446 = vsel %vm389, %v442, 0
        %v448 = vsel %vm393, %v444, 0
        %450 = vmatpush.msra.mxu0 0.0
        %451 = vmatpush.msra.mxu0 0.0
        %452 = vmatpush.msra.mxu0 0.0
        %453 = vmatpush.msra.mxu0 0.0
        %454 = vmatpush.msra.mxu0 0.0
        %455 = vmatpush.msra.mxu0 0.0
        %456 = vmatpush.msra.mxu0 0.0
        %457 = vmatpush.msra.mxu0 0.0
        %458 = vmatpush.msra.mxu0 0.0
        %459 = vmatpush.msra.mxu0 0.0
        %460 = vmatpush.msra.mxu0 0.0
        %461 = vmatpush.msra.mxu0 0.0
        %462 = vmatpush.msra.mxu0 0.0
        %463 = vmatpush.msra.mxu0 0.0
        %464 = vmatpush.msra.mxu0 0.0
        %465 = vmatpush.msra.mxu0 %v448
        %466 = vmatmul.f32.gmra.mxu0 %v446
        %v467 = vpop.f32.mrf.mxu0
        %v468 = vadd.f32 0.0, %v467
        %469 = vdwg.mxu0
        %v470 = vadd.f32 %v439, %v468
        %s471 = scalar_lea.vmem %s2, 12
        %v472 = vld [vmem:[%s471] sm:$0xf]
        %v474 = vsel %vm389, %v472, 0
        %v476 = vsel %vm393, %v368, 0
        %478 = vmatpush.msra.mxu0 0.0
        %479 = vmatpush.msra.mxu0 0.0
        %480 = vmatpush.msra.mxu0 0.0
        %481 = vmatpush.msra.mxu0 0.0
        %482 = vmatpush.msra.mxu0 0.0
        %483 = vmatpush.msra.mxu0 0.0
        %484 = vmatpush.msra.mxu0 0.0
        %485 = vmatpush.msra.mxu0 0.0
        %486 = vmatpush.msra.mxu0 0.0
        %487 = vmatpush.msra.mxu0 0.0
        %488 = vmatpush.msra.mxu0 0.0
        %489 = vmatpush.msra.mxu0 0.0
        %490 = vmatpush.msra.mxu0 0.0
        %491 = vmatpush.msra.mxu0 0.0
        %492 = vmatpush.msra.mxu0 0.0
        %493 = vmatpush.msra.mxu0 %v476
        %494 = vmatmul.f32.gmra.mxu0 %v474
        %v495 = vpop.f32.mrf.mxu0
        %v496 = vadd.f32 0.0, %v495
        %497 = vdwg.mxu0
        %v498 = vadd.f32 %v470, %v496
        %s499 = scalar_lea.vmem %s2, 16
        %v500 = vld [vmem:[%s499] sm:$0xf]
        %v502 = vsel %vm389, %v500, 0
        %v504 = vsel %vm393, %v370, 0
        %506 = vmatpush.msra.mxu0 0.0
        %507 = vmatpush.msra.mxu0 0.0
        %508 = vmatpush.msra.mxu0 0.0
        %509 = vmatpush.msra.mxu0 0.0
        %510 = vmatpush.msra.mxu0 0.0
        %511 = vmatpush.msra.mxu0 0.0
        %512 = vmatpush.msra.mxu0 0.0
        %513 = vmatpush.msra.mxu0 0.0
        %514 = vmatpush.msra.mxu0 0.0
        %515 = vmatpush.msra.mxu0 0.0
        %516 = vmatpush.msra.mxu0 0.0
        %517 = vmatpush.msra.mxu0 0.0
        %518 = vmatpush.msra.mxu0 0.0
        %519 = vmatpush.msra.mxu0 0.0
        %520 = vmatpush.msra.mxu0 0.0
        %521 = vmatpush.msra.mxu0 %v504
        %522 = vmatmul.f32.gmra.mxu0 %v502
        %v523 = vpop.f32.mrf.mxu0
        %v524 = vadd.f32 0.0, %v523
        %525 = vdwg.mxu0
        %v526 = vadd.f32 %v498, %v524
        %s527 = scalar_lea.vmem %s2, 20
        %v528 = vld [vmem:[%s527] sm:$0xf]
        %529 = vrot.lane.b32.xlu0 %v368, 126
        %v530 = vpop.permute.xlu0 %529
        %v532 = vsel %vm389, %v528, 0
        %v534 = vsel %vm393, %v530, 0
        %536 = vmatpush.msra.mxu0 0.0
        %537 = vmatpush.msra.mxu0 0.0
        %538 = vmatpush.msra.mxu0 0.0
        %539 = vmatpush.msra.mxu0 0.0
        %540 = vmatpush.msra.mxu0 0.0
        %541 = vmatpush.msra.mxu0 0.0
        %542 = vmatpush.msra.mxu0 0.0
        %543 = vmatpush.msra.mxu0 0.0
        %544 = vmatpush.msra.mxu0 0.0
        %545 = vmatpush.msra.mxu0 0.0
        %546 = vmatpush.msra.mxu0 0.0
        %547 = vmatpush.msra.mxu0 0.0
        %548 = vmatpush.msra.mxu0 0.0
        %549 = vmatpush.msra.mxu0 0.0
        %550 = vmatpush.msra.mxu0 0.0
        %551 = vmatpush.msra.mxu0 %v534
        %552 = vmatmul.f32.gmra.mxu0 %v532
        %v553 = vpop.f32.mrf.mxu0
        %v554 = vadd.f32 0.0, %v553
        %555 = vdwg.mxu0
        %v556 = vadd.f32 %v526, %v554
        %s557 = scalar_lea.vmem %s2, 24
        %v558 = vld [vmem:[%s557] sm:$0xf]
        %v563 = vrot.slane %v353, 7
        %v564 = vsel %vm361, %v563, %v352
        %v565 = vrot.slane %v354, 6
        %v566 = vsel %vm364, %v565, %v564
        %v567 = vrot.slane %v355, 5
        %v568 = vsel %vm367, %v567, %v566
        %v570 = vsel %vm389, %v558, 0
        %v572 = vsel %vm393, %v568, 0
        %574 = vmatpush.msra.mxu0 0.0
        %575 = vmatpush.msra.mxu0 0.0
        %576 = vmatpush.msra.mxu0 0.0
        %577 = vmatpush.msra.mxu0 0.0
        %578 = vmatpush.msra.mxu0 0.0
        %579 = vmatpush.msra.mxu0 0.0
        %580 = vmatpush.msra.mxu0 0.0
        %581 = vmatpush.msra.mxu0 0.0
        %582 = vmatpush.msra.mxu0 0.0
        %583 = vmatpush.msra.mxu0 0.0
        %584 = vmatpush.msra.mxu0 0.0
        %585 = vmatpush.msra.mxu0 0.0
        %586 = vmatpush.msra.mxu0 0.0
        %587 = vmatpush.msra.mxu0 0.0
        %588 = vmatpush.msra.mxu0 0.0
        %589 = vmatpush.msra.mxu0 %v572
        %590 = vmatmul.f32.gmra.mxu0 %v570
        %v591 = vpop.f32.mrf.mxu0
        %v592 = vadd.f32 0.0, %v591
        %593 = vdwg.mxu0
        %v594 = vadd.f32 %v556, %v592
        %s595 = scalar_lea.vmem %s2, 28
        %v596 = vld [vmem:[%s595] sm:$0xf]
        %597 = vrot.lane.b32.xlu0 %v568, 127
        %v598 = vpop.permute.xlu0 %597
        %v600 = vsel %vm389, %v596, 0
        %v602 = vsel %vm393, %v598, 0
        %604 = vmatpush.msra.mxu0 0.0
        %605 = vmatpush.msra.mxu0 0.0
        %606 = vmatpush.msra.mxu0 0.0
        %607 = vmatpush.msra.mxu0 0.0
        %608 = vmatpush.msra.mxu0 0.0
        %609 = vmatpush.msra.mxu0 0.0
        %610 = vmatpush.msra.mxu0 0.0
        %611 = vmatpush.msra.mxu0 0.0
        %612 = vmatpush.msra.mxu0 0.0
        %613 = vmatpush.msra.mxu0 0.0
        %614 = vmatpush.msra.mxu0 0.0
        %615 = vmatpush.msra.mxu0 0.0
        %616 = vmatpush.msra.mxu0 0.0
        %617 = vmatpush.msra.mxu0 0.0
        %618 = vmatpush.msra.mxu0 0.0
        %619 = vmatpush.msra.mxu0 %v602
        %620 = vmatmul.f32.gmra.mxu0 %v600
        %v621 = vpop.f32.mrf.mxu0
        %v622 = vadd.f32 0.0, %v621
        %623 = vdwg.mxu0
        %v624 = vadd.f32 %v594, %v622
        %s625 = scalar_lea.vmem %s2, 32
        %v626 = vld [vmem:[%s625] sm:$0xf]
        %627 = vrot.lane.b32.xlu0 %v568, 126
        %v628 = vpop.permute.xlu0 %627
        %v630 = vsel %vm389, %v626, 0
        %v632 = vsel %vm393, %v628, 0
        %634 = vmatpush.msra.mxu0 0.0
        %635 = vmatpush.msra.mxu0 0.0
        %636 = vmatpush.msra.mxu0 0.0
        %637 = vmatpush.msra.mxu0 0.0
        %638 = vmatpush.msra.mxu0 0.0
        %639 = vmatpush.msra.mxu0 0.0
        %640 = vmatpush.msra.mxu0 0.0
        %641 = vmatpush.msra.mxu0 0.0
        %642 = vmatpush.msra.mxu0 0.0
        %643 = vmatpush.msra.mxu0 0.0
        %644 = vmatpush.msra.mxu0 0.0
        %645 = vmatpush.msra.mxu0 0.0
        %646 = vmatpush.msra.mxu0 0.0
        %647 = vmatpush.msra.mxu0 0.0
        %648 = vmatpush.msra.mxu0 0.0
        %649 = vmatpush.msra.mxu0 %v632
        %650 = vmatmul.f32.gmra.mxu0 %v630
        %v651 = vpop.f32.mrf.mxu0
        %v652 = vadd.f32 0.0, %v651
        %653 = vdwg.mxu0
        %v654 = vadd.f32 %v624, %v652
        %v655 = vld [vmem:[%s3] sm:$0xf]
        %657 = vset.pattern.permute.xlu0 0
        %658 = vperm.xlu0 %657, %v655
        %v659 = vpop.permute.xlu0 %658
        %v661 = vadd.f32 %v654, %v659
        %v662 = vmax.f32 %v661, 0.0
        %663 = vst.msk [vmem:[%s343 + $0x4] sm:$0xf] %vm372, %v662
        %v664 = vld [vmem:[%s298 + $0x1] sm:$0x1]
        %v665 = vld [vmem:[%s298 + $0x9] sm:$0x1]
        %v666 = vld [vmem:[%s298 + $0x11] sm:$0x1]
        %v667 = vld [vmem:[%s298 + $0x19] sm:$0x1]
        %v668 = vld [vmem:[%s298 + $0x2] sm:$0x1]
        %v669 = vld [vmem:[%s298 + $0xa] sm:$0x1]
        %v670 = vld [vmem:[%s298 + $0x12] sm:$0x1]
        %v671 = vld [vmem:[%s298 + $0x1a] sm:$0x1]
        %v672 = vld [vmem:[%s298 + $0x3] sm:$0x1]
        %v673 = vld [vmem:[%s298 + $0xb] sm:$0x1]
        %v674 = vld [vmem:[%s298 + $0x13] sm:$0x1]
        %v675 = vld [vmem:[%s298 + $0x1b] sm:$0x1]
        %v680 = vrot.slane %v669, 7
        %v681 = vsel %vm361, %v680, %v668
        %v682 = vrot.slane %v670, 6
        %v683 = vsel %vm364, %v682, %v681
        %v684 = vrot.slane %v671, 5
        %v685 = vsel %vm367, %v684, %v683
        %686 = vrot.lane.b32.xlu0 %v685, 15
        %v687 = vpop.permute.xlu0 %686
        %vm689 = vcmask 257152
        %690 = vst.msk [vmem:[%s343] sm:$0xf] %vm689, %v687
        %v691 = vld [vmem:[%s2] sm:$0xf]
        %v692 = vld [vmem:[%s375] sm:$0xf]
        %v697 = vrot.slane %v665, 7
        %v698 = vsel %vm361, %v697, %v664
        %v699 = vrot.slane %v666, 6
        %v700 = vsel %vm364, %v699, %v698
        %v701 = vrot.slane %v667, 5
        %v702 = vsel %vm367, %v701, %v700
        %703 = vrot.lane.b32.xlu0 %v702, 127
        %v704 = vpop.permute.xlu0 %703
        %v706 = vsel %vm389, %v692, 0
        %v708 = vsel %vm393, %v704, 0
        %710 = vmatpush.msra.mxu0 0.0
        %711 = vmatpush.msra.mxu0 0.0
        %712 = vmatpush.msra.mxu0 0.0
        %713 = vmatpush.msra.mxu0 0.0
        %714 = vmatpush.msra.mxu0 0.0
        %715 = vmatpush.msra.mxu0 0.0
        %716 = vmatpush.msra.mxu0 0.0
        %717 = vmatpush.msra.mxu0 0.0
        %718 = vmatpush.msra.mxu0 0.0
        %719 = vmatpush.msra.mxu0 0.0
        %720 = vmatpush.msra.mxu0 0.0
        %721 = vmatpush.msra.mxu0 0.0
        %722 = vmatpush.msra.mxu0 0.0
        %723 = vmatpush.msra.mxu0 0.0
        %724 = vmatpush.msra.mxu0 0.0
        %725 = vmatpush.msra.mxu0 %v708
        %726 = vmatmul.f32.gmra.mxu0 %v706
        %v727 = vpop.f32.mrf.mxu0
        %v728 = vadd.f32 0.0, %v727
        %729 = vdwg.mxu0
        %v731 = vsel %vm389, %v691, 0
        %v733 = vsel %vm393, %v702, 0
        %735 = vmatpush.msra.mxu0 0.0
        %736 = vmatpush.msra.mxu0 0.0
        %737 = vmatpush.msra.mxu0 0.0
        %738 = vmatpush.msra.mxu0 0.0
        %739 = vmatpush.msra.mxu0 0.0
        %740 = vmatpush.msra.mxu0 0.0
        %741 = vmatpush.msra.mxu0 0.0
        %742 = vmatpush.msra.mxu0 0.0
        %743 = vmatpush.msra.mxu0 0.0
        %744 = vmatpush.msra.mxu0 0.0
        %745 = vmatpush.msra.mxu0 0.0
        %746 = vmatpush.msra.mxu0 0.0
        %747 = vmatpush.msra.mxu0 0.0
        %748 = vmatpush.msra.mxu0 0.0
        %749 = vmatpush.msra.mxu0 0.0
        %750 = vmatpush.msra.mxu0 %v733
        %751 = vmatmul.f32.gmra.mxu0 %v731
        %v752 = vpop.f32.mrf.mxu0
        %v753 = vadd.f32 %v728, %v752
        %754 = vdwg.mxu0
        %v755 = vld [vmem:[%s441] sm:$0xf]
        %756 = vrot.lane.b32.xlu0 %v702, 126
        %v757 = vpop.permute.xlu0 %756
        %v759 = vsel %vm389, %v755, 0
        %v761 = vsel %vm393, %v757, 0
        %763 = vmatpush.msra.mxu0 0.0
        %764 = vmatpush.msra.mxu0 0.0
        %765 = vmatpush.msra.mxu0 0.0
        %766 = vmatpush.msra.mxu0 0.0
        %767 = vmatpush.msra.mxu0 0.0
        %768 = vmatpush.msra.mxu0 0.0
        %769 = vmatpush.msra.mxu0 0.0
        %770 = vmatpush.msra.mxu0 0.0
        %771 = vmatpush.msra.mxu0 0.0
        %772 = vmatpush.msra.mxu0 0.0
        %773 = vmatpush.msra.mxu0 0.0
        %774 = vmatpush.msra.mxu0 0.0
        %775 = vmatpush.msra.mxu0 0.0
        %776 = vmatpush.msra.mxu0 0.0
        %777 = vmatpush.msra.mxu0 0.0
        %778 = vmatpush.msra.mxu0 %v761
        %779 = vmatmul.f32.gmra.mxu0 %v759
        %v780 = vpop.f32.mrf.mxu0
        %v781 = vadd.f32 0.0, %v780
        %782 = vdwg.mxu0
        %v783 = vadd.f32 %v753, %v781
        %v784 = vld [vmem:[%s471] sm:$0xf]
        %v786 = vsel %vm389, %v784, 0
        %v788 = vsel %vm393, %v685, 0
        %790 = vmatpush.msra.mxu0 0.0
        %791 = vmatpush.msra.mxu0 0.0
        %792 = vmatpush.msra.mxu0 0.0
        %793 = vmatpush.msra.mxu0 0.0
        %794 = vmatpush.msra.mxu0 0.0
        %795 = vmatpush.msra.mxu0 0.0
        %796 = vmatpush.msra.mxu0 0.0
        %797 = vmatpush.msra.mxu0 0.0
        %798 = vmatpush.msra.mxu0 0.0
        %799 = vmatpush.msra.mxu0 0.0
        %800 = vmatpush.msra.mxu0 0.0
        %801 = vmatpush.msra.mxu0 0.0
        %802 = vmatpush.msra.mxu0 0.0
        %803 = vmatpush.msra.mxu0 0.0
        %804 = vmatpush.msra.mxu0 0.0
        %805 = vmatpush.msra.mxu0 %v788
        %806 = vmatmul.f32.gmra.mxu0 %v786
        %v807 = vpop.f32.mrf.mxu0
        %v808 = vadd.f32 0.0, %v807
        %809 = vdwg.mxu0
        %v810 = vadd.f32 %v783, %v808
        %v811 = vld [vmem:[%s499] sm:$0xf]
        %812 = vrot.lane.b32.xlu0 %v685, 127
        %v813 = vpop.permute.xlu0 %812
        %v815 = vsel %vm389, %v811, 0
        %v817 = vsel %vm393, %v813, 0
        %819 = vmatpush.msra.mxu0 0.0
        %820 = vmatpush.msra.mxu0 0.0
        %821 = vmatpush.msra.mxu0 0.0
        %822 = vmatpush.msra.mxu0 0.0
        %823 = vmatpush.msra.mxu0 0.0
        %824 = vmatpush.msra.mxu0 0.0
        %825 = vmatpush.msra.mxu0 0.0
        %826 = vmatpush.msra.mxu0 0.0
        %827 = vmatpush.msra.mxu0 0.0
        %828 = vmatpush.msra.mxu0 0.0
        %829 = vmatpush.msra.mxu0 0.0
        %830 = vmatpush.msra.mxu0 0.0
        %831 = vmatpush.msra.mxu0 0.0
        %832 = vmatpush.msra.mxu0 0.0
        %833 = vmatpush.msra.mxu0 0.0
        %834 = vmatpush.msra.mxu0 %v817
        %835 = vmatmul.f32.gmra.mxu0 %v815
        %v836 = vpop.f32.mrf.mxu0
        %v837 = vadd.f32 0.0, %v836
        %838 = vdwg.mxu0
        %v839 = vadd.f32 %v810, %v837
        %v840 = vld [vmem:[%s527] sm:$0xf]
        %841 = vrot.lane.b32.xlu0 %v685, 126
        %v842 = vpop.permute.xlu0 %841
        %v844 = vsel %vm389, %v840, 0
        %v846 = vsel %vm393, %v842, 0
        %848 = vmatpush.msra.mxu0 0.0
        %849 = vmatpush.msra.mxu0 0.0
        %850 = vmatpush.msra.mxu0 0.0
        %851 = vmatpush.msra.mxu0 0.0
        %852 = vmatpush.msra.mxu0 0.0
        %853 = vmatpush.msra.mxu0 0.0
        %854 = vmatpush.msra.mxu0 0.0
        %855 = vmatpush.msra.mxu0 0.0
        %856 = vmatpush.msra.mxu0 0.0
        %857 = vmatpush.msra.mxu0 0.0
        %858 = vmatpush.msra.mxu0 0.0
        %859 = vmatpush.msra.mxu0 0.0
        %860 = vmatpush.msra.mxu0 0.0
        %861 = vmatpush.msra.mxu0 0.0
        %862 = vmatpush.msra.mxu0 0.0
        %863 = vmatpush.msra.mxu0 %v846
        %864 = vmatmul.f32.gmra.mxu0 %v844
        %v865 = vpop.f32.mrf.mxu0
        %v866 = vadd.f32 0.0, %v865
        %867 = vdwg.mxu0
        %v868 = vadd.f32 %v839, %v866
        %v869 = vld [vmem:[%s557] sm:$0xf]
        %v874 = vrot.slane %v673, 7
        %v875 = vsel %vm361, %v874, %v672
        %v876 = vrot.slane %v674, 6
        %v877 = vsel %vm364, %v876, %v875
        %v878 = vrot.slane %v675, 5
        %v879 = vsel %vm367, %v878, %v877
        %v881 = vsel %vm389, %v869, 0
        %v883 = vsel %vm393, %v879, 0
        %885 = vmatpush.msra.mxu0 0.0
        %886 = vmatpush.msra.mxu0 0.0
        %887 = vmatpush.msra.mxu0 0.0
        %888 = vmatpush.msra.mxu0 0.0
        %889 = vmatpush.msra.mxu0 0.0
        %890 = vmatpush.msra.mxu0 0.0
        %891 = vmatpush.msra.mxu0 0.0
        %892 = vmatpush.msra.mxu0 0.0
        %893 = vmatpush.msra.mxu0 0.0
        %894 = vmatpush.msra.mxu0 0.0
        %895 = vmatpush.msra.mxu0 0.0
        %896 = vmatpush.msra.mxu0 0.0
        %897 = vmatpush.msra.mxu0 0.0
        %898 = vmatpush.msra.mxu0 0.0
        %899 = vmatpush.msra.mxu0 0.0
        %900 = vmatpush.msra.mxu0 %v883
        %901 = vmatmul.f32.gmra.mxu0 %v881
        %v902 = vpop.f32.mrf.mxu0
        %v903 = vadd.f32 0.0, %v902
        %904 = vdwg.mxu0
        %v905 = vadd.f32 %v868, %v903
        %v906 = vld [vmem:[%s595] sm:$0xf]
        %907 = vrot.lane.b32.xlu0 %v879, 127
        %v908 = vpop.permute.xlu0 %907
        %v910 = vsel %vm389, %v906, 0
        %v912 = vsel %vm393, %v908, 0
        %914 = vmatpush.msra.mxu0 0.0
        %915 = vmatpush.msra.mxu0 0.0
        %916 = vmatpush.msra.mxu0 0.0
        %917 = vmatpush.msra.mxu0 0.0
        %918 = vmatpush.msra.mxu0 0.0
        %919 = vmatpush.msra.mxu0 0.0
        %920 = vmatpush.msra.mxu0 0.0
        %921 = vmatpush.msra.mxu0 0.0
        %922 = vmatpush.msra.mxu0 0.0
        %923 = vmatpush.msra.mxu0 0.0
        %924 = vmatpush.msra.mxu0 0.0
        %925 = vmatpush.msra.mxu0 0.0
        %926 = vmatpush.msra.mxu0 0.0
        %927 = vmatpush.msra.mxu0 0.0
        %928 = vmatpush.msra.mxu0 0.0
        %929 = vmatpush.msra.mxu0 %v912
        %930 = vmatmul.f32.gmra.mxu0 %v910
        %v931 = vpop.f32.mrf.mxu0
        %v932 = vadd.f32 0.0, %v931
        %933 = vdwg.mxu0
        %v934 = vadd.f32 %v905, %v932
        %v935 = vld [vmem:[%s625] sm:$0xf]
        %936 = vrot.lane.b32.xlu0 %v879, 126
        %v937 = vpop.permute.xlu0 %936
        %v939 = vsel %vm389, %v935, 0
        %v941 = vsel %vm393, %v937, 0
        %943 = vmatpush.msra.mxu0 0.0
        %944 = vmatpush.msra.mxu0 0.0
        %945 = vmatpush.msra.mxu0 0.0
        %946 = vmatpush.msra.mxu0 0.0
        %947 = vmatpush.msra.mxu0 0.0
        %948 = vmatpush.msra.mxu0 0.0
        %949 = vmatpush.msra.mxu0 0.0
        %950 = vmatpush.msra.mxu0 0.0
        %951 = vmatpush.msra.mxu0 0.0
        %952 = vmatpush.msra.mxu0 0.0
        %953 = vmatpush.msra.mxu0 0.0
        %954 = vmatpush.msra.mxu0 0.0
        %955 = vmatpush.msra.mxu0 0.0
        %956 = vmatpush.msra.mxu0 0.0
        %957 = vmatpush.msra.mxu0 0.0
        %958 = vmatpush.msra.mxu0 %v941
        %959 = vmatmul.f32.gmra.mxu0 %v939
        %v960 = vpop.f32.mrf.mxu0
        %v961 = vadd.f32 0.0, %v960
        %962 = vdwg.mxu0
        %v963 = vadd.f32 %v934, %v961
        %v964 = vld [vmem:[%s3] sm:$0xf]
        %966 = vset.pattern.permute.xlu0 0
        %967 = vperm.xlu0 %966, %v964
        %v968 = vpop.permute.xlu0 %967
        %v970 = vadd.f32 %v963, %v968
        %v971 = vmax.f32 %v970, 0.0
        %973 = vrot.lane.b32.xlu0 %v971, 16
        %v974 = vpop.permute.xlu0 %973
        %976 = vst.msk [vmem:[%s343 + $0x4] sm:$0xf] %vm689, %v974
        %v977 = vld [vmem:[%s298 + $0x2] sm:$0x1]
        %v978 = vld [vmem:[%s298 + $0xa] sm:$0x1]
        %v979 = vld [vmem:[%s298 + $0x12] sm:$0x1]
        %v980 = vld [vmem:[%s298 + $0x1a] sm:$0x1]
        %v981 = vld [vmem:[%s298 + $0x3] sm:$0x1]
        %v982 = vld [vmem:[%s298 + $0xb] sm:$0x1]
        %v983 = vld [vmem:[%s298 + $0x13] sm:$0x1]
        %v984 = vld [vmem:[%s298 + $0x1b] sm:$0x1]
        %v985 = vld [vmem:[%s298 + $0x4] sm:$0x1]
        %v986 = vld [vmem:[%s298 + $0xc] sm:$0x1]
        %v987 = vld [vmem:[%s298 + $0x14] sm:$0x1]
        %v988 = vld [vmem:[%s298 + $0x1c] sm:$0x1]
        %v993 = vrot.slane %v982, 7
        %v994 = vsel %vm361, %v993, %v981
        %v995 = vrot.slane %v983, 6
        %v996 = vsel %vm364, %v995, %v994
        %v997 = vrot.slane %v984, 5
        %v998 = vsel %vm367, %v997, %v996
        %999 = vrot.lane.b32.xlu0 %v998, 31
        %v1000 = vpop.permute.xlu0 %999
        %vm1002 = vcmask 388352
        %1003 = vst.msk [vmem:[%s343] sm:$0xf] %vm1002, %v1000
        %v1004 = vld [vmem:[%s2] sm:$0xf]
        %v1005 = vld [vmem:[%s375] sm:$0xf]
        %v1010 = vrot.slane %v978, 7
        %v1011 = vsel %vm361, %v1010, %v977
        %v1012 = vrot.slane %v979, 6
        %v1013 = vsel %vm364, %v1012, %v1011
        %v1014 = vrot.slane %v980, 5
        %v1015 = vsel %vm367, %v1014, %v1013
        %1016 = vrot.lane.b32.xlu0 %v1015, 127
        %v1017 = vpop.permute.xlu0 %1016
        %v1019 = vsel %vm389, %v1005, 0
        %v1021 = vsel %vm393, %v1017, 0
        %1023 = vmatpush.msra.mxu0 0.0
        %1024 = vmatpush.msra.mxu0 0.0
        %1025 = vmatpush.msra.mxu0 0.0
        %1026 = vmatpush.msra.mxu0 0.0
        %1027 = vmatpush.msra.mxu0 0.0
        %1028 = vmatpush.msra.mxu0 0.0
        %1029 = vmatpush.msra.mxu0 0.0
        %1030 = vmatpush.msra.mxu0 0.0
        %1031 = vmatpush.msra.mxu0 0.0
        %1032 = vmatpush.msra.mxu0 0.0
        %1033 = vmatpush.msra.mxu0 0.0
        %1034 = vmatpush.msra.mxu0 0.0
        %1035 = vmatpush.msra.mxu0 0.0
        %1036 = vmatpush.msra.mxu0 0.0
        %1037 = vmatpush.msra.mxu0 0.0
        %1038 = vmatpush.msra.mxu0 %v1021
        %1039 = vmatmul.f32.gmra.mxu0 %v1019
        %v1040 = vpop.f32.mrf.mxu0
        %v1041 = vadd.f32 0.0, %v1040
        %1042 = vdwg.mxu0
        %v1044 = vsel %vm389, %v1004, 0
        %v1046 = vsel %vm393, %v1015, 0
        %1048 = vmatpush.msra.mxu0 0.0
        %1049 = vmatpush.msra.mxu0 0.0
        %1050 = vmatpush.msra.mxu0 0.0
        %1051 = vmatpush.msra.mxu0 0.0
        %1052 = vmatpush.msra.mxu0 0.0
        %1053 = vmatpush.msra.mxu0 0.0
        %1054 = vmatpush.msra.mxu0 0.0
        %1055 = vmatpush.msra.mxu0 0.0
        %1056 = vmatpush.msra.mxu0 0.0
        %1057 = vmatpush.msra.mxu0 0.0
        %1058 = vmatpush.msra.mxu0 0.0
        %1059 = vmatpush.msra.mxu0 0.0
        %1060 = vmatpush.msra.mxu0 0.0
        %1061 = vmatpush.msra.mxu0 0.0
        %1062 = vmatpush.msra.mxu0 0.0
        %1063 = vmatpush.msra.mxu0 %v1046
        %1064 = vmatmul.f32.gmra.mxu0 %v1044
        %v1065 = vpop.f32.mrf.mxu0
        %v1066 = vadd.f32 %v1041, %v1065
        %1067 = vdwg.mxu0
        %v1068 = vld [vmem:[%s441] sm:$0xf]
        %1069 = vrot.lane.b32.xlu0 %v1015, 126
        %v1070 = vpop.permute.xlu0 %1069
        %v1072 = vsel %vm389, %v1068, 0
        %v1074 = vsel %vm393, %v1070, 0
        %1076 = vmatpush.msra.mxu0 0.0
        %1077 = vmatpush.msra.mxu0 0.0
        %1078 = vmatpush.msra.mxu0 0.0
        %1079 = vmatpush.msra.mxu0 0.0
        %1080 = vmatpush.msra.mxu0 0.0
        %1081 = vmatpush.msra.mxu0 0.0
        %1082 = vmatpush.msra.mxu0 0.0
        %1083 = vmatpush.msra.mxu0 0.0
        %1084 = vmatpush.msra.mxu0 0.0
        %1085 = vmatpush.msra.mxu0 0.0
        %1086 = vmatpush.msra.mxu0 0.0
        %1087 = vmatpush.msra.mxu0 0.0
        %1088 = vmatpush.msra.mxu0 0.0
        %1089 = vmatpush.msra.mxu0 0.0
        %1090 = vmatpush.msra.mxu0 0.0
        %1091 = vmatpush.msra.mxu0 %v1074
        %1092 = vmatmul.f32.gmra.mxu0 %v1072
        %v1093 = vpop.f32.mrf.mxu0
        %v1094 = vadd.f32 0.0, %v1093
        %1095 = vdwg.mxu0
        %v1096 = vadd.f32 %v1066, %v1094
        %v1097 = vld [vmem:[%s471] sm:$0xf]
        %v1099 = vsel %vm389, %v1097, 0
        %v1101 = vsel %vm393, %v998, 0
        %1103 = vmatpush.msra.mxu0 0.0
        %1104 = vmatpush.msra.mxu0 0.0
        %1105 = vmatpush.msra.mxu0 0.0
        %1106 = vmatpush.msra.mxu0 0.0
        %1107 = vmatpush.msra.mxu0 0.0
        %1108 = vmatpush.msra.mxu0 0.0
        %1109 = vmatpush.msra.mxu0 0.0
        %1110 = vmatpush.msra.mxu0 0.0
        %1111 = vmatpush.msra.mxu0 0.0
        %1112 = vmatpush.msra.mxu0 0.0
        %1113 = vmatpush.msra.mxu0 0.0
        %1114 = vmatpush.msra.mxu0 0.0
        %1115 = vmatpush.msra.mxu0 0.0
        %1116 = vmatpush.msra.mxu0 0.0
        %1117 = vmatpush.msra.mxu0 0.0
        %1118 = vmatpush.msra.mxu0 %v1101
        %1119 = vmatmul.f32.gmra.mxu0 %v1099
        %v1120 = vpop.f32.mrf.mxu0
        %v1121 = vadd.f32 0.0, %v1120
        %1122 = vdwg.mxu0
        %v1123 = vadd.f32 %v1096, %v1121
        %v1124 = vld [vmem:[%s499] sm:$0xf]
        %1125 = vrot.lane.b32.xlu0 %v998, 127
        %v1126 = vpop.permute.xlu0 %1125
        %v1128 = vsel %vm389, %v1124, 0
        %v1130 = vsel %vm393, %v1126, 0
        %1132 = vmatpush.msra.mxu0 0.0
        %1133 = vmatpush.msra.mxu0 0.0
        %1134 = vmatpush.msra.mxu0 0.0
        %1135 = vmatpush.msra.mxu0 0.0
        %1136 = vmatpush.msra.mxu0 0.0
        %1137 = vmatpush.msra.mxu0 0.0
        %1138 = vmatpush.msra.mxu0 0.0
        %1139 = vmatpush.msra.mxu0 0.0
        %1140 = vmatpush.msra.mxu0 0.0
        %1141 = vmatpush.msra.mxu0 0.0
        %1142 = vmatpush.msra.mxu0 0.0
        %1143 = vmatpush.msra.mxu0 0.0
        %1144 = vmatpush.msra.mxu0 0.0
        %1145 = vmatpush.msra.mxu0 0.0
        %1146 = vmatpush.msra.mxu0 0.0
        %1147 = vmatpush.msra.mxu0 %v1130
        %1148 = vmatmul.f32.gmra.mxu0 %v1128
        %v1149 = vpop.f32.mrf.mxu0
        %v1150 = vadd.f32 0.0, %v1149
        %1151 = vdwg.mxu0
        %v1152 = vadd.f32 %v1123, %v1150
        %v1153 = vld [vmem:[%s527] sm:$0xf]
        %1154 = vrot.lane.b32.xlu0 %v998, 126
        %v1155 = vpop.permute.xlu0 %1154
        %v1157 = vsel %vm389, %v1153, 0
        %v1159 = vsel %vm393, %v1155, 0
        %1161 = vmatpush.msra.mxu0 0.0
        %1162 = vmatpush.msra.mxu0 0.0
        %1163 = vmatpush.msra.mxu0 0.0
        %1164 = vmatpush.msra.mxu0 0.0
        %1165 = vmatpush.msra.mxu0 0.0
        %1166 = vmatpush.msra.mxu0 0.0
        %1167 = vmatpush.msra.mxu0 0.0
        %1168 = vmatpush.msra.mxu0 0.0
        %1169 = vmatpush.msra.mxu0 0.0
        %1170 = vmatpush.msra.mxu0 0.0
        %1171 = vmatpush.msra.mxu0 0.0
        %1172 = vmatpush.msra.mxu0 0.0
        %1173 = vmatpush.msra.mxu0 0.0
        %1174 = vmatpush.msra.mxu0 0.0
        %1175 = vmatpush.msra.mxu0 0.0
        %1176 = vmatpush.msra.mxu0 %v1159
        %1177 = vmatmul.f32.gmra.mxu0 %v1157
        %v1178 = vpop.f32.mrf.mxu0
        %v1179 = vadd.f32 0.0, %v1178
        %1180 = vdwg.mxu0
        %v1181 = vadd.f32 %v1152, %v1179
        %v1182 = vld [vmem:[%s557] sm:$0xf]
        %v1187 = vrot.slane %v986, 7
        %v1188 = vsel %vm361, %v1187, %v985
        %v1189 = vrot.slane %v987, 6
        %v1190 = vsel %vm364, %v1189, %v1188
        %v1191 = vrot.slane %v988, 5
        %v1192 = vsel %vm367, %v1191, %v1190
        %v1194 = vsel %vm389, %v1182, 0
        %v1196 = vsel %vm393, %v1192, 0
        %1198 = vmatpush.msra.mxu0 0.0
        %1199 = vmatpush.msra.mxu0 0.0
        %1200 = vmatpush.msra.mxu0 0.0
        %1201 = vmatpush.msra.mxu0 0.0
        %1202 = vmatpush.msra.mxu0 0.0
        %1203 = vmatpush.msra.mxu0 0.0
        %1204 = vmatpush.msra.mxu0 0.0
        %1205 = vmatpush.msra.mxu0 0.0
        %1206 = vmatpush.msra.mxu0 0.0
        %1207 = vmatpush.msra.mxu0 0.0
        %1208 = vmatpush.msra.mxu0 0.0
        %1209 = vmatpush.msra.mxu0 0.0
        %1210 = vmatpush.msra.mxu0 0.0
        %1211 = vmatpush.msra.mxu0 0.0
        %1212 = vmatpush.msra.mxu0 0.0
        %1213 = vmatpush.msra.mxu0 %v1196
        %1214 = vmatmul.f32.gmra.mxu0 %v1194
        %v1215 = vpop.f32.mrf.mxu0
        %v1216 = vadd.f32 0.0, %v1215
        %1217 = vdwg.mxu0
        %v1218 = vadd.f32 %v1181, %v1216
        %v1219 = vld [vmem:[%s595] sm:$0xf]
        %1220 = vrot.lane.b32.xlu0 %v1192, 127
        %v1221 = vpop.permute.xlu0 %1220
        %v1223 = vsel %vm389, %v1219, 0
        %v1225 = vsel %vm393, %v1221, 0
        %1227 = vmatpush.msra.mxu0 0.0
        %1228 = vmatpush.msra.mxu0 0.0
        %1229 = vmatpush.msra.mxu0 0.0
        %1230 = vmatpush.msra.mxu0 0.0
        %1231 = vmatpush.msra.mxu0 0.0
        %1232 = vmatpush.msra.mxu0 0.0
        %1233 = vmatpush.msra.mxu0 0.0
        %1234 = vmatpush.msra.mxu0 0.0
        %1235 = vmatpush.msra.mxu0 0.0
        %1236 = vmatpush.msra.mxu0 0.0
        %1237 = vmatpush.msra.mxu0 0.0
        %1238 = vmatpush.msra.mxu0 0.0
        %1239 = vmatpush.msra.mxu0 0.0
        %1240 = vmatpush.msra.mxu0 0.0
        %1241 = vmatpush.msra.mxu0 0.0
        %1242 = vmatpush.msra.mxu0 %v1225
        %1243 = vmatmul.f32.gmra.mxu0 %v1223
        %v1244 = vpop.f32.mrf.mxu0
        %v1245 = vadd.f32 0.0, %v1244
        %1246 = vdwg.mxu0
        %v1247 = vadd.f32 %v1218, %v1245
        %v1248 = vld [vmem:[%s625] sm:$0xf]
        %1249 = vrot.lane.b32.xlu0 %v1192, 126
        %v1250 = vpop.permute.xlu0 %1249
        %v1252 = vsel %vm389, %v1248, 0
        %v1254 = vsel %vm393, %v1250, 0
        %1256 = vmatpush.msra.mxu0 0.0
        %1257 = vmatpush.msra.mxu0 0.0
        %1258 = vmatpush.msra.mxu0 0.0
        %1259 = vmatpush.msra.mxu0 0.0
        %1260 = vmatpush.msra.mxu0 0.0
        %1261 = vmatpush.msra.mxu0 0.0
        %1262 = vmatpush.msra.mxu0 0.0
        %1263 = vmatpush.msra.mxu0 0.0
        %1264 = vmatpush.msra.mxu0 0.0
        %1265 = vmatpush.msra.mxu0 0.0
        %1266 = vmatpush.msra.mxu0 0.0
        %1267 = vmatpush.msra.mxu0 0.0
        %1268 = vmatpush.msra.mxu0 0.0
        %1269 = vmatpush.msra.mxu0 0.0
        %1270 = vmatpush.msra.mxu0 0.0
        %1271 = vmatpush.msra.mxu0 %v1254
        %1272 = vmatmul.f32.gmra.mxu0 %v1252
        %v1273 = vpop.f32.mrf.mxu0
        %v1274 = vadd.f32 0.0, %v1273
        %1275 = vdwg.mxu0
        %v1276 = vadd.f32 %v1247, %v1274
        %v1277 = vld [vmem:[%s3] sm:$0xf]
        %1279 = vset.pattern.permute.xlu0 0
        %1280 = vperm.xlu0 %1279, %v1277
        %v1281 = vpop.permute.xlu0 %1280
        %v1283 = vadd.f32 %v1276, %v1281
        %v1284 = vmax.f32 %v1283, 0.0
        %1286 = vrot.lane.b32.xlu0 %v1284, 32
        %v1287 = vpop.permute.xlu0 %1286
        %1289 = vst.msk [vmem:[%s343 + $0x4] sm:$0xf] %vm1002, %v1287
        %v1290 = vld [vmem:[%s298 + $0x3] sm:$0x1]
        %v1291 = vld [vmem:[%s298 + $0xb] sm:$0x1]
        %v1292 = vld [vmem:[%s298 + $0x13] sm:$0x1]
        %v1293 = vld [vmem:[%s298 + $0x1b] sm:$0x1]
        %v1294 = vld [vmem:[%s298 + $0x4] sm:$0x1]
        %v1295 = vld [vmem:[%s298 + $0xc] sm:$0x1]
        %v1296 = vld [vmem:[%s298 + $0x14] sm:$0x1]
        %v1297 = vld [vmem:[%s298 + $0x1c] sm:$0x1]
        %v1298 = vld [vmem:[%s298 + $0x5] sm:$0x1]
        %v1299 = vld [vmem:[%s298 + $0xd] sm:$0x1]
        %v1300 = vld [vmem:[%s298 + $0x15] sm:$0x1]
        %v1301 = vld [vmem:[%s298 + $0x1d] sm:$0x1]
        %v1306 = vrot.slane %v1295, 7
        %v1307 = vsel %vm361, %v1306, %v1294
        %v1308 = vrot.slane %v1296, 6
        %v1309 = vsel %vm364, %v1308, %v1307
        %v1310 = vrot.slane %v1297, 5
        %v1311 = vsel %vm367, %v1310, %v1309
        %1312 = vrot.lane.b32.xlu0 %v1311, 47
        %v1313 = vpop.permute.xlu0 %1312
        %vm1315 = vcmask 519552
        %1316 = vst.msk [vmem:[%s343] sm:$0xf] %vm1315, %v1313
        %v1317 = vld [vmem:[%s2] sm:$0xf]
        %v1318 = vld [vmem:[%s375] sm:$0xf]
        %v1323 = vrot.slane %v1291, 7
        %v1324 = vsel %vm361, %v1323, %v1290
        %v1325 = vrot.slane %v1292, 6
        %v1326 = vsel %vm364, %v1325, %v1324
        %v1327 = vrot.slane %v1293, 5
        %v1328 = vsel %vm367, %v1327, %v1326
        %1329 = vrot.lane.b32.xlu0 %v1328, 127
        %v1330 = vpop.permute.xlu0 %1329
        %v1332 = vsel %vm389, %v1318, 0
        %v1334 = vsel %vm393, %v1330, 0
        %1336 = vmatpush.msra.mxu0 0.0
        %1337 = vmatpush.msra.mxu0 0.0
        %1338 = vmatpush.msra.mxu0 0.0
        %1339 = vmatpush.msra.mxu0 0.0
        %1340 = vmatpush.msra.mxu0 0.0
        %1341 = vmatpush.msra.mxu0 0.0
        %1342 = vmatpush.msra.mxu0 0.0
        %1343 = vmatpush.msra.mxu0 0.0
        %1344 = vmatpush.msra.mxu0 0.0
        %1345 = vmatpush.msra.mxu0 0.0
        %1346 = vmatpush.msra.mxu0 0.0
        %1347 = vmatpush.msra.mxu0 0.0
        %1348 = vmatpush.msra.mxu0 0.0
        %1349 = vmatpush.msra.mxu0 0.0
        %1350 = vmatpush.msra.mxu0 0.0
        %1351 = vmatpush.msra.mxu0 %v1334
        %1352 = vmatmul.f32.gmra.mxu0 %v1332
        %v1353 = vpop.f32.mrf.mxu0
        %v1354 = vadd.f32 0.0, %v1353
        %1355 = vdwg.mxu0
        %v1357 = vsel %vm389, %v1317, 0
        %v1359 = vsel %vm393, %v1328, 0
        %1361 = vmatpush.msra.mxu0 0.0
        %1362 = vmatpush.msra.mxu0 0.0
        %1363 = vmatpush.msra.mxu0 0.0
        %1364 = vmatpush.msra.mxu0 0.0
        %1365 = vmatpush.msra.mxu0 0.0
        %1366 = vmatpush.msra.mxu0 0.0
        %1367 = vmatpush.msra.mxu0 0.0
        %1368 = vmatpush.msra.mxu0 0.0
        %1369 = vmatpush.msra.mxu0 0.0
        %1370 = vmatpush.msra.mxu0 0.0
        %1371 = vmatpush.msra.mxu0 0.0
        %1372 = vmatpush.msra.mxu0 0.0
        %1373 = vmatpush.msra.mxu0 0.0
        %1374 = vmatpush.msra.mxu0 0.0
        %1375 = vmatpush.msra.mxu0 0.0
        %1376 = vmatpush.msra.mxu0 %v1359
        %1377 = vmatmul.f32.gmra.mxu0 %v1357
        %v1378 = vpop.f32.mrf.mxu0
        %v1379 = vadd.f32 %v1354, %v1378
        %1380 = vdwg.mxu0
        %v1381 = vld [vmem:[%s441] sm:$0xf]
        %1382 = vrot.lane.b32.xlu0 %v1328, 126
        %v1383 = vpop.permute.xlu0 %1382
        %v1385 = vsel %vm389, %v1381, 0
        %v1387 = vsel %vm393, %v1383, 0
        %1389 = vmatpush.msra.mxu0 0.0
        %1390 = vmatpush.msra.mxu0 0.0
        %1391 = vmatpush.msra.mxu0 0.0
        %1392 = vmatpush.msra.mxu0 0.0
        %1393 = vmatpush.msra.mxu0 0.0
        %1394 = vmatpush.msra.mxu0 0.0
        %1395 = vmatpush.msra.mxu0 0.0
        %1396 = vmatpush.msra.mxu0 0.0
        %1397 = vmatpush.msra.mxu0 0.0
        %1398 = vmatpush.msra.mxu0 0.0
        %1399 = vmatpush.msra.mxu0 0.0
        %1400 = vmatpush.msra.mxu0 0.0
        %1401 = vmatpush.msra.mxu0 0.0
        %1402 = vmatpush.msra.mxu0 0.0
        %1403 = vmatpush.msra.mxu0 0.0
        %1404 = vmatpush.msra.mxu0 %v1387
        %1405 = vmatmul.f32.gmra.mxu0 %v1385
        %v1406 = vpop.f32.mrf.mxu0
        %v1407 = vadd.f32 0.0, %v1406
        %1408 = vdwg.mxu0
        %v1409 = vadd.f32 %v1379, %v1407
        %v1410 = vld [vmem:[%s471] sm:$0xf]
        %v1412 = vsel %vm389, %v1410, 0
        %v1414 = vsel %vm393, %v1311, 0
        %1416 = vmatpush.msra.mxu0 0.0
        %1417 = vmatpush.msra.mxu0 0.0
        %1418 = vmatpush.msra.mxu0 0.0
        %1419 = vmatpush.msra.mxu0 0.0
        %1420 = vmatpush.msra.mxu0 0.0
        %1421 = vmatpush.msra.mxu0 0.0
        %1422 = vmatpush.msra.mxu0 0.0
        %1423 = vmatpush.msra.mxu0 0.0
        %1424 = vmatpush.msra.mxu0 0.0
        %1425 = vmatpush.msra.mxu0 0.0
        %1426 = vmatpush.msra.mxu0 0.0
        %1427 = vmatpush.msra.mxu0 0.0
        %1428 = vmatpush.msra.mxu0 0.0
        %1429 = vmatpush.msra.mxu0 0.0
        %1430 = vmatpush.msra.mxu0 0.0
        %1431 = vmatpush.msra.mxu0 %v1414
        %1432 = vmatmul.f32.gmra.mxu0 %v1412
        %v1433 = vpop.f32.mrf.mxu0
        %v1434 = vadd.f32 0.0, %v1433
        %1435 = vdwg.mxu0
        %v1436 = vadd.f32 %v1409, %v1434
        %v1437 = vld [vmem:[%s499] sm:$0xf]
        %1438 = vrot.lane.b32.xlu0 %v1311, 127
        %v1439 = vpop.permute.xlu0 %1438
        %v1441 = vsel %vm389, %v1437, 0
        %v1443 = vsel %vm393, %v1439, 0
        %1445 = vmatpush.msra.mxu0 0.0
        %1446 = vmatpush.msra.mxu0 0.0
        %1447 = vmatpush.msra.mxu0 0.0
        %1448 = vmatpush.msra.mxu0 0.0
        %1449 = vmatpush.msra.mxu0 0.0
        %1450 = vmatpush.msra.mxu0 0.0
        %1451 = vmatpush.msra.mxu0 0.0
        %1452 = vmatpush.msra.mxu0 0.0
        %1453 = vmatpush.msra.mxu0 0.0
        %1454 = vmatpush.msra.mxu0 0.0
        %1455 = vmatpush.msra.mxu0 0.0
        %1456 = vmatpush.msra.mxu0 0.0
        %1457 = vmatpush.msra.mxu0 0.0
        %1458 = vmatpush.msra.mxu0 0.0
        %1459 = vmatpush.msra.mxu0 0.0
        %1460 = vmatpush.msra.mxu0 %v1443
        %1461 = vmatmul.f32.gmra.mxu0 %v1441
        %v1462 = vpop.f32.mrf.mxu0
        %v1463 = vadd.f32 0.0, %v1462
        %1464 = vdwg.mxu0
        %v1465 = vadd.f32 %v1436, %v1463
        %v1466 = vld [vmem:[%s527] sm:$0xf]
        %1467 = vrot.lane.b32.xlu0 %v1311, 126
        %v1468 = vpop.permute.xlu0 %1467
        %v1470 = vsel %vm389, %v1466, 0
        %v1472 = vsel %vm393, %v1468, 0
        %1474 = vmatpush.msra.mxu0 0.0
        %1475 = vmatpush.msra.mxu0 0.0
        %1476 = vmatpush.msra.mxu0 0.0
        %1477 = vmatpush.msra.mxu0 0.0
        %1478 = vmatpush.msra.mxu0 0.0
        %1479 = vmatpush.msra.mxu0 0.0
        %1480 = vmatpush.msra.mxu0 0.0
        %1481 = vmatpush.msra.mxu0 0.0
        %1482 = vmatpush.msra.mxu0 0.0
        %1483 = vmatpush.msra.mxu0 0.0
        %1484 = vmatpush.msra.mxu0 0.0
        %1485 = vmatpush.msra.mxu0 0.0
        %1486 = vmatpush.msra.mxu0 0.0
        %1487 = vmatpush.msra.mxu0 0.0
        %1488 = vmatpush.msra.mxu0 0.0
        %1489 = vmatpush.msra.mxu0 %v1472
        %1490 = vmatmul.f32.gmra.mxu0 %v1470
        %v1491 = vpop.f32.mrf.mxu0
        %v1492 = vadd.f32 0.0, %v1491
        %1493 = vdwg.mxu0
        %v1494 = vadd.f32 %v1465, %v1492
        %v1495 = vld [vmem:[%s557] sm:$0xf]
        %v1500 = vrot.slane %v1299, 7
        %v1501 = vsel %vm361, %v1500, %v1298
        %v1502 = vrot.slane %v1300, 6
        %v1503 = vsel %vm364, %v1502, %v1501
        %v1504 = vrot.slane %v1301, 5
        %v1505 = vsel %vm367, %v1504, %v1503
        %v1507 = vsel %vm389, %v1495, 0
        %v1509 = vsel %vm393, %v1505, 0
        %1511 = vmatpush.msra.mxu0 0.0
        %1512 = vmatpush.msra.mxu0 0.0
        %1513 = vmatpush.msra.mxu0 0.0
        %1514 = vmatpush.msra.mxu0 0.0
        %1515 = vmatpush.msra.mxu0 0.0
        %1516 = vmatpush.msra.mxu0 0.0
        %1517 = vmatpush.msra.mxu0 0.0
        %1518 = vmatpush.msra.mxu0 0.0
        %1519 = vmatpush.msra.mxu0 0.0
        %1520 = vmatpush.msra.mxu0 0.0
        %1521 = vmatpush.msra.mxu0 0.0
        %1522 = vmatpush.msra.mxu0 0.0
        %1523 = vmatpush.msra.mxu0 0.0
        %1524 = vmatpush.msra.mxu0 0.0
        %1525 = vmatpush.msra.mxu0 0.0
        %1526 = vmatpush.msra.mxu0 %v1509
        %1527 = vmatmul.f32.gmra.mxu0 %v1507
        %v1528 = vpop.f32.mrf.mxu0
        %v1529 = vadd.f32 0.0, %v1528
        %1530 = vdwg.mxu0
        %v1531 = vadd.f32 %v1494, %v1529
        %v1532 = vld [vmem:[%s595] sm:$0xf]
        %1533 = vrot.lane.b32.xlu0 %v1505, 127
        %v1534 = vpop.permute.xlu0 %1533
        %v1536 = vsel %vm389, %v1532, 0
        %v1538 = vsel %vm393, %v1534, 0
        %1540 = vmatpush.msra.mxu0 0.0
        %1541 = vmatpush.msra.mxu0 0.0
        %1542 = vmatpush.msra.mxu0 0.0
        %1543 = vmatpush.msra.mxu0 0.0
        %1544 = vmatpush.msra.mxu0 0.0
        %1545 = vmatpush.msra.mxu0 0.0
        %1546 = vmatpush.msra.mxu0 0.0
        %1547 = vmatpush.msra.mxu0 0.0
        %1548 = vmatpush.msra.mxu0 0.0
        %1549 = vmatpush.msra.mxu0 0.0
        %1550 = vmatpush.msra.mxu0 0.0
        %1551 = vmatpush.msra.mxu0 0.0
        %1552 = vmatpush.msra.mxu0 0.0
        %1553 = vmatpush.msra.mxu0 0.0
        %1554 = vmatpush.msra.mxu0 0.0
        %1555 = vmatpush.msra.mxu0 %v1538
        %1556 = vmatmul.f32.gmra.mxu0 %v1536
        %v1557 = vpop.f32.mrf.mxu0
        %v1558 = vadd.f32 0.0, %v1557
        %1559 = vdwg.mxu0
        %v1560 = vadd.f32 %v1531, %v1558
        %v1561 = vld [vmem:[%s625] sm:$0xf]
        %1562 = vrot.lane.b32.xlu0 %v1505, 126
        %v1563 = vpop.permute.xlu0 %1562
        %v1565 = vsel %vm389, %v1561, 0
        %v1567 = vsel %vm393, %v1563, 0
        %1569 = vmatpush.msra.mxu0 0.0
        %1570 = vmatpush.msra.mxu0 0.0
        %1571 = vmatpush.msra.mxu0 0.0
        %1572 = vmatpush.msra.mxu0 0.0
        %1573 = vmatpush.msra.mxu0 0.0
        %1574 = vmatpush.msra.mxu0 0.0
        %1575 = vmatpush.msra.mxu0 0.0
        %1576 = vmatpush.msra.mxu0 0.0
        %1577 = vmatpush.msra.mxu0 0.0
        %1578 = vmatpush.msra.mxu0 0.0
        %1579 = vmatpush.msra.mxu0 0.0
        %1580 = vmatpush.msra.mxu0 0.0
        %1581 = vmatpush.msra.mxu0 0.0
        %1582 = vmatpush.msra.mxu0 0.0
        %1583 = vmatpush.msra.mxu0 0.0
        %1584 = vmatpush.msra.mxu0 %v1567
        %1585 = vmatmul.f32.gmra.mxu0 %v1565
        %v1586 = vpop.f32.mrf.mxu0
        %v1587 = vadd.f32 0.0, %v1586
        %1588 = vdwg.mxu0
        %v1589 = vadd.f32 %v1560, %v1587
        %v1590 = vld [vmem:[%s3] sm:$0xf]
        %1592 = vset.pattern.permute.xlu0 0
        %1593 = vperm.xlu0 %1592, %v1590
        %v1594 = vpop.permute.xlu0 %1593
        %v1596 = vadd.f32 %v1589, %v1594
        %v1597 = vmax.f32 %v1596, 0.0
        %1599 = vrot.lane.b32.xlu0 %v1597, 48
        %v1600 = vpop.permute.xlu0 %1599
        %1602 = vst.msk [vmem:[%s343 + $0x4] sm:$0xf] %vm1315, %v1600
        %v1603 = vld [vmem:[%s298 + $0x4] sm:$0x1]
        %v1604 = vld [vmem:[%s298 + $0xc] sm:$0x1]
        %v1605 = vld [vmem:[%s298 + $0x14] sm:$0x1]
        %v1606 = vld [vmem:[%s298 + $0x1c] sm:$0x1]
        %v1607 = vld [vmem:[%s298 + $0x5] sm:$0x1]
        %v1608 = vld [vmem:[%s298 + $0xd] sm:$0x1]
        %v1609 = vld [vmem:[%s298 + $0x15] sm:$0x1]
        %v1610 = vld [vmem:[%s298 + $0x1d] sm:$0x1]
        %v1611 = vld [vmem:[%s298 + $0x6] sm:$0x1]
        %v1612 = vld [vmem:[%s298 + $0xe] sm:$0x1]
        %v1613 = vld [vmem:[%s298 + $0x16] sm:$0x1]
        %v1614 = vld [vmem:[%s298 + $0x1e] sm:$0x1]
        %v1619 = vrot.slane %v1608, 7
        %v1620 = vsel %vm361, %v1619, %v1607
        %v1621 = vrot.slane %v1609, 6
        %v1622 = vsel %vm364, %v1621, %v1620
        %v1623 = vrot.slane %v1610, 5
        %v1624 = vsel %vm367, %v1623, %v1622
        %1625 = vrot.lane.b32.xlu0 %v1624, 63
        %v1626 = vpop.permute.xlu0 %1625
        %vm1628 = vcmask 650752
        %1629 = vst.msk [vmem:[%s343] sm:$0xf] %vm1628, %v1626
        %v1630 = vld [vmem:[%s2] sm:$0xf]
        %v1631 = vld [vmem:[%s375] sm:$0xf]
        %v1636 = vrot.slane %v1604, 7
        %v1637 = vsel %vm361, %v1636, %v1603
        %v1638 = vrot.slane %v1605, 6
        %v1639 = vsel %vm364, %v1638, %v1637
        %v1640 = vrot.slane %v1606, 5
        %v1641 = vsel %vm367, %v1640, %v1639
        %1642 = vrot.lane.b32.xlu0 %v1641, 127
        %v1643 = vpop.permute.xlu0 %1642
        %v1645 = vsel %vm389, %v1631, 0
        %v1647 = vsel %vm393, %v1643, 0
        %1649 = vmatpush.msra.mxu0 0.0
        %1650 = vmatpush.msra.mxu0 0.0
        %1651 = vmatpush.msra.mxu0 0.0
        %1652 = vmatpush.msra.mxu0 0.0
        %1653 = vmatpush.msra.mxu0 0.0
        %1654 = vmatpush.msra.mxu0 0.0
        %1655 = vmatpush.msra.mxu0 0.0
        %1656 = vmatpush.msra.mxu0 0.0
        %1657 = vmatpush.msra.mxu0 0.0
        %1658 = vmatpush.msra.mxu0 0.0
        %1659 = vmatpush.msra.mxu0 0.0
        %1660 = vmatpush.msra.mxu0 0.0
        %1661 = vmatpush.msra.mxu0 0.0
        %1662 = vmatpush.msra.mxu0 0.0
        %1663 = vmatpush.msra.mxu0 0.0
        %1664 = vmatpush.msra.mxu0 %v1647
        %1665 = vmatmul.f32.gmra.mxu0 %v1645
        %v1666 = vpop.f32.mrf.mxu0
        %v1667 = vadd.f32 0.0, %v1666
        %1668 = vdwg.mxu0
        %v1670 = vsel %vm389, %v1630, 0
        %v1672 = vsel %vm393, %v1641, 0
        %1674 = vmatpush.msra.mxu0 0.0
        %1675 = vmatpush.msra.mxu0 0.0
        %1676 = vmatpush.msra.mxu0 0.0
        %1677 = vmatpush.msra.mxu0 0.0
        %1678 = vmatpush.msra.mxu0 0.0
        %1679 = vmatpush.msra.mxu0 0.0
        %1680 = vmatpush.msra.mxu0 0.0
        %1681 = vmatpush.msra.mxu0 0.0
        %1682 = vmatpush.msra.mxu0 0.0
        %1683 = vmatpush.msra.mxu0 0.0
        %1684 = vmatpush.msra.mxu0 0.0
        %1685 = vmatpush.msra.mxu0 0.0
        %1686 = vmatpush.msra.mxu0 0.0
        %1687 = vmatpush.msra.mxu0 0.0
        %1688 = vmatpush.msra.mxu0 0.0
        %1689 = vmatpush.msra.mxu0 %v1672
        %1690 = vmatmul.f32.gmra.mxu0 %v1670
        %v1691 = vpop.f32.mrf.mxu0
        %v1692 = vadd.f32 %v1667, %v1691
        %1693 = vdwg.mxu0
        %v1694 = vld [vmem:[%s441] sm:$0xf]
        %1695 = vrot.lane.b32.xlu0 %v1641, 126
        %v1696 = vpop.permute.xlu0 %1695
        %v1698 = vsel %vm389, %v1694, 0
        %v1700 = vsel %vm393, %v1696, 0
        %1702 = vmatpush.msra.mxu0 0.0
        %1703 = vmatpush.msra.mxu0 0.0
        %1704 = vmatpush.msra.mxu0 0.0
        %1705 = vmatpush.msra.mxu0 0.0
        %1706 = vmatpush.msra.mxu0 0.0
        %1707 = vmatpush.msra.mxu0 0.0
        %1708 = vmatpush.msra.mxu0 0.0
        %1709 = vmatpush.msra.mxu0 0.0
        %1710 = vmatpush.msra.mxu0 0.0
        %1711 = vmatpush.msra.mxu0 0.0
        %1712 = vmatpush.msra.mxu0 0.0
        %1713 = vmatpush.msra.mxu0 0.0
        %1714 = vmatpush.msra.mxu0 0.0
        %1715 = vmatpush.msra.mxu0 0.0
        %1716 = vmatpush.msra.mxu0 0.0
        %1717 = vmatpush.msra.mxu0 %v1700
        %1718 = vmatmul.f32.gmra.mxu0 %v1698
        %v1719 = vpop.f32.mrf.mxu0
        %v1720 = vadd.f32 0.0, %v1719
        %1721 = vdwg.mxu0
        %v1722 = vadd.f32 %v1692, %v1720
        %v1723 = vld [vmem:[%s471] sm:$0xf]
        %v1725 = vsel %vm389, %v1723, 0
        %v1727 = vsel %vm393, %v1624, 0
        %1729 = vmatpush.msra.mxu0 0.0
        %1730 = vmatpush.msra.mxu0 0.0
        %1731 = vmatpush.msra.mxu0 0.0
        %1732 = vmatpush.msra.mxu0 0.0
        %1733 = vmatpush.msra.mxu0 0.0
        %1734 = vmatpush.msra.mxu0 0.0
        %1735 = vmatpush.msra.mxu0 0.0
        %1736 = vmatpush.msra.mxu0 0.0
        %1737 = vmatpush.msra.mxu0 0.0
        %1738 = vmatpush.msra.mxu0 0.0
        %1739 = vmatpush.msra.mxu0 0.0
        %1740 = vmatpush.msra.mxu0 0.0
        %1741 = vmatpush.msra.mxu0 0.0
        %1742 = vmatpush.msra.mxu0 0.0
        %1743 = vmatpush.msra.mxu0 0.0
        %1744 = vmatpush.msra.mxu0 %v1727
        %1745 = vmatmul.f32.gmra.mxu0 %v1725
        %v1746 = vpop.f32.mrf.mxu0
        %v1747 = vadd.f32 0.0, %v1746
        %1748 = vdwg.mxu0
        %v1749 = vadd.f32 %v1722, %v1747
        %v1750 = vld [vmem:[%s499] sm:$0xf]
        %1751 = vrot.lane.b32.xlu0 %v1624, 127
        %v1752 = vpop.permute.xlu0 %1751
        %v1754 = vsel %vm389, %v1750, 0
        %v1756 = vsel %vm393, %v1752, 0
        %1758 = vmatpush.msra.mxu0 0.0
        %1759 = vmatpush.msra.mxu0 0.0
        %1760 = vmatpush.msra.mxu0 0.0
        %1761 = vmatpush.msra.mxu0 0.0
        %1762 = vmatpush.msra.mxu0 0.0
        %1763 = vmatpush.msra.mxu0 0.0
        %1764 = vmatpush.msra.mxu0 0.0
        %1765 = vmatpush.msra.mxu0 0.0
        %1766 = vmatpush.msra.mxu0 0.0
        %1767 = vmatpush.msra.mxu0 0.0
        %1768 = vmatpush.msra.mxu0 0.0
        %1769 = vmatpush.msra.mxu0 0.0
        %1770 = vmatpush.msra.mxu0 0.0
        %1771 = vmatpush.msra.mxu0 0.0
        %1772 = vmatpush.msra.mxu0 0.0
        %1773 = vmatpush.msra.mxu0 %v1756
        %1774 = vmatmul.f32.gmra.mxu0 %v1754
        %v1775 = vpop.f32.mrf.mxu0
        %v1776 = vadd.f32 0.0, %v1775
        %1777 = vdwg.mxu0
        %v1778 = vadd.f32 %v1749, %v1776
        %v1779 = vld [vmem:[%s527] sm:$0xf]
        %1780 = vrot.lane.b32.xlu0 %v1624, 126
        %v1781 = vpop.permute.xlu0 %1780
        %v1783 = vsel %vm389, %v1779, 0
        %v1785 = vsel %vm393, %v1781, 0
        %1787 = vmatpush.msra.mxu0 0.0
        %1788 = vmatpush.msra.mxu0 0.0
        %1789 = vmatpush.msra.mxu0 0.0
        %1790 = vmatpush.msra.mxu0 0.0
        %1791 = vmatpush.msra.mxu0 0.0
        %1792 = vmatpush.msra.mxu0 0.0
        %1793 = vmatpush.msra.mxu0 0.0
        %1794 = vmatpush.msra.mxu0 0.0
        %1795 = vmatpush.msra.mxu0 0.0
        %1796 = vmatpush.msra.mxu0 0.0
        %1797 = vmatpush.msra.mxu0 0.0
        %1798 = vmatpush.msra.mxu0 0.0
        %1799 = vmatpush.msra.mxu0 0.0
        %1800 = vmatpush.msra.mxu0 0.0
        %1801 = vmatpush.msra.mxu0 0.0
        %1802 = vmatpush.msra.mxu0 %v1785
        %1803 = vmatmul.f32.gmra.mxu0 %v1783
        %v1804 = vpop.f32.mrf.mxu0
        %v1805 = vadd.f32 0.0, %v1804
        %1806 = vdwg.mxu0
        %v1807 = vadd.f32 %v1778, %v1805
        %v1808 = vld [vmem:[%s557] sm:$0xf]
        %v1813 = vrot.slane %v1612, 7
        %v1814 = vsel %vm361, %v1813, %v1611
        %v1815 = vrot.slane %v1613, 6
        %v1816 = vsel %vm364, %v1815, %v1814
        %v1817 = vrot.slane %v1614, 5
        %v1818 = vsel %vm367, %v1817, %v1816
        %v1820 = vsel %vm389, %v1808, 0
        %v1822 = vsel %vm393, %v1818, 0
        %1824 = vmatpush.msra.mxu0 0.0
        %1825 = vmatpush.msra.mxu0 0.0
        %1826 = vmatpush.msra.mxu0 0.0
        %1827 = vmatpush.msra.mxu0 0.0
        %1828 = vmatpush.msra.mxu0 0.0
        %1829 = vmatpush.msra.mxu0 0.0
        %1830 = vmatpush.msra.mxu0 0.0
        %1831 = vmatpush.msra.mxu0 0.0
        %1832 = vmatpush.msra.mxu0 0.0
        %1833 = vmatpush.msra.mxu0 0.0
        %1834 = vmatpush.msra.mxu0 0.0
        %1835 = vmatpush.msra.mxu0 0.0
        %1836 = vmatpush.msra.mxu0 0.0
        %1837 = vmatpush.msra.mxu0 0.0
        %1838 = vmatpush.msra.mxu0 0.0
        %1839 = vmatpush.msra.mxu0 %v1822
        %1840 = vmatmul.f32.gmra.mxu0 %v1820
        %v1841 = vpop.f32.mrf.mxu0
        %v1842 = vadd.f32 0.0, %v1841
        %1843 = vdwg.mxu0
        %v1844 = vadd.f32 %v1807, %v1842
        %v1845 = vld [vmem:[%s595] sm:$0xf]
        %1846 = vrot.lane.b32.xlu0 %v1818, 127
        %v1847 = vpop.permute.xlu0 %1846
        %v1849 = vsel %vm389, %v1845, 0
        %v1851 = vsel %vm393, %v1847, 0
        %1853 = vmatpush.msra.mxu0 0.0
        %1854 = vmatpush.msra.mxu0 0.0
        %1855 = vmatpush.msra.mxu0 0.0
        %1856 = vmatpush.msra.mxu0 0.0
        %1857 = vmatpush.msra.mxu0 0.0
        %1858 = vmatpush.msra.mxu0 0.0
        %1859 = vmatpush.msra.mxu0 0.0
        %1860 = vmatpush.msra.mxu0 0.0
        %1861 = vmatpush.msra.mxu0 0.0
        %1862 = vmatpush.msra.mxu0 0.0
        %1863 = vmatpush.msra.mxu0 0.0
        %1864 = vmatpush.msra.mxu0 0.0
        %1865 = vmatpush.msra.mxu0 0.0
        %1866 = vmatpush.msra.mxu0 0.0
        %1867 = vmatpush.msra.mxu0 0.0
        %1868 = vmatpush.msra.mxu0 %v1851
        %1869 = vmatmul.f32.gmra.mxu0 %v1849
        %v1870 = vpop.f32.mrf.mxu0
        %v1871 = vadd.f32 0.0, %v1870
        %1872 = vdwg.mxu0
        %v1873 = vadd.f32 %v1844, %v1871
        %v1874 = vld [vmem:[%s625] sm:$0xf]
        %1875 = vrot.lane.b32.xlu0 %v1818, 126
        %v1876 = vpop.permute.xlu0 %1875
        %v1878 = vsel %vm389, %v1874, 0
        %v1880 = vsel %vm393, %v1876, 0
        %1882 = vmatpush.msra.mxu0 0.0
        %1883 = vmatpush.msra.mxu0 0.0
        %1884 = vmatpush.msra.mxu0 0.0
        %1885 = vmatpush.msra.mxu0 0.0
        %1886 = vmatpush.msra.mxu0 0.0
        %1887 = vmatpush.msra.mxu0 0.0
        %1888 = vmatpush.msra.mxu0 0.0
        %1889 = vmatpush.msra.mxu0 0.0
        %1890 = vmatpush.msra.mxu0 0.0
        %1891 = vmatpush.msra.mxu0 0.0
        %1892 = vmatpush.msra.mxu0 0.0
        %1893 = vmatpush.msra.mxu0 0.0
        %1894 = vmatpush.msra.mxu0 0.0
        %1895 = vmatpush.msra.mxu0 0.0
        %1896 = vmatpush.msra.mxu0 0.0
        %1897 = vmatpush.msra.mxu0 %v1880
        %1898 = vmatmul.f32.gmra.mxu0 %v1878
        %v1899 = vpop.f32.mrf.mxu0
        %v1900 = vadd.f32 0.0, %v1899
        %1901 = vdwg.mxu0
        %v1902 = vadd.f32 %v1873, %v1900
        %v1903 = vld [vmem:[%s3] sm:$0xf]
        %1905 = vset.pattern.permute.xlu0 0
        %1906 = vperm.xlu0 %1905, %v1903
        %v1907 = vpop.permute.xlu0 %1906
        %v1909 = vadd.f32 %v1902, %v1907
        %v1910 = vmax.f32 %v1909, 0.0
        %1912 = vrot.lane.b32.xlu0 %v1910, 64
        %v1913 = vpop.permute.xlu0 %1912
        %1915 = vst.msk [vmem:[%s343 + $0x4] sm:$0xf] %vm1628, %v1913
        %v1916 = vld [vmem:[%s298 + $0x5] sm:$0x1]
        %v1917 = vld [vmem:[%s298 + $0xd] sm:$0x1]
        %v1918 = vld [vmem:[%s298 + $0x15] sm:$0x1]
        %v1919 = vld [vmem:[%s298 + $0x1d] sm:$0x1]
        %v1920 = vld [vmem:[%s298 + $0x6] sm:$0x1]
        %v1921 = vld [vmem:[%s298 + $0xe] sm:$0x1]
        %v1922 = vld [vmem:[%s298 + $0x16] sm:$0x1]
        %v1923 = vld [vmem:[%s298 + $0x1e] sm:$0x1]
        %v1924 = vld [vmem:[%s298 + $0x7] sm:$0x1]
        %v1925 = vld [vmem:[%s298 + $0xf] sm:$0x1]
        %v1926 = vld [vmem:[%s298 + $0x17] sm:$0x1]
        %v1927 = vld [vmem:[%s298 + $0x1f] sm:$0x1]
        %v1932 = vrot.slane %v1921, 7
        %v1933 = vsel %vm361, %v1932, %v1920
        %v1934 = vrot.slane %v1922, 6
        %v1935 = vsel %vm364, %v1934, %v1933
        %v1936 = vrot.slane %v1923, 5
        %v1937 = vsel %vm367, %v1936, %v1935
        %1938 = vrot.lane.b32.xlu0 %v1937, 79
        %v1939 = vpop.permute.xlu0 %1938
        %vm1941 = vcmask 781952
        %1942 = vst.msk [vmem:[%s343] sm:$0xf] %vm1941, %v1939
        %v1943 = vld [vmem:[%s2] sm:$0xf]
        %v1944 = vld [vmem:[%s375] sm:$0xf]
        %v1949 = vrot.slane %v1917, 7
        %v1950 = vsel %vm361, %v1949, %v1916
        %v1951 = vrot.slane %v1918, 6
        %v1952 = vsel %vm364, %v1951, %v1950
        %v1953 = vrot.slane %v1919, 5
        %v1954 = vsel %vm367, %v1953, %v1952
        %1955 = vrot.lane.b32.xlu0 %v1954, 127
        %v1956 = vpop.permute.xlu0 %1955
        %v1958 = vsel %vm389, %v1944, 0
        %v1960 = vsel %vm393, %v1956, 0
        %1962 = vmatpush.msra.mxu0 0.0
        %1963 = vmatpush.msra.mxu0 0.0
        %1964 = vmatpush.msra.mxu0 0.0
        %1965 = vmatpush.msra.mxu0 0.0
        %1966 = vmatpush.msra.mxu0 0.0
        %1967 = vmatpush.msra.mxu0 0.0
        %1968 = vmatpush.msra.mxu0 0.0
        %1969 = vmatpush.msra.mxu0 0.0
        %1970 = vmatpush.msra.mxu0 0.0
        %1971 = vmatpush.msra.mxu0 0.0
        %1972 = vmatpush.msra.mxu0 0.0
        %1973 = vmatpush.msra.mxu0 0.0
        %1974 = vmatpush.msra.mxu0 0.0
        %1975 = vmatpush.msra.mxu0 0.0
        %1976 = vmatpush.msra.mxu0 0.0
        %1977 = vmatpush.msra.mxu0 %v1960
        %1978 = vmatmul.f32.gmra.mxu0 %v1958
        %v1979 = vpop.f32.mrf.mxu0
        %v1980 = vadd.f32 0.0, %v1979
        %1981 = vdwg.mxu0
        %v1983 = vsel %vm389, %v1943, 0
        %v1985 = vsel %vm393, %v1954, 0
        %1987 = vmatpush.msra.mxu0 0.0
        %1988 = vmatpush.msra.mxu0 0.0
        %1989 = vmatpush.msra.mxu0 0.0
        %1990 = vmatpush.msra.mxu0 0.0
        %1991 = vmatpush.msra.mxu0 0.0
        %1992 = vmatpush.msra.mxu0 0.0
        %1993 = vmatpush.msra.mxu0 0.0
        %1994 = vmatpush.msra.mxu0 0.0
        %1995 = vmatpush.msra.mxu0 0.0
        %1996 = vmatpush.msra.mxu0 0.0
        %1997 = vmatpush.msra.mxu0 0.0
        %1998 = vmatpush.msra.mxu0 0.0
        %1999 = vmatpush.msra.mxu0 0.0
        %2000 = vmatpush.msra.mxu0 0.0
        %2001 = vmatpush.msra.mxu0 0.0
        %2002 = vmatpush.msra.mxu0 %v1985
        %2003 = vmatmul.f32.gmra.mxu0 %v1983
        %v2004 = vpop.f32.mrf.mxu0
        %v2005 = vadd.f32 %v1980, %v2004
        %2006 = vdwg.mxu0
        %v2007 = vld [vmem:[%s441] sm:$0xf]
        %2008 = vrot.lane.b32.xlu0 %v1954, 126
        %v2009 = vpop.permute.xlu0 %2008
        %v2011 = vsel %vm389, %v2007, 0
        %v2013 = vsel %vm393, %v2009, 0
        %2015 = vmatpush.msra.mxu0 0.0
        %2016 = vmatpush.msra.mxu0 0.0
        %2017 = vmatpush.msra.mxu0 0.0
        %2018 = vmatpush.msra.mxu0 0.0
        %2019 = vmatpush.msra.mxu0 0.0
        %2020 = vmatpush.msra.mxu0 0.0
        %2021 = vmatpush.msra.mxu0 0.0
        %2022 = vmatpush.msra.mxu0 0.0
        %2023 = vmatpush.msra.mxu0 0.0
        %2024 = vmatpush.msra.mxu0 0.0
        %2025 = vmatpush.msra.mxu0 0.0
        %2026 = vmatpush.msra.mxu0 0.0
        %2027 = vmatpush.msra.mxu0 0.0
        %2028 = vmatpush.msra.mxu0 0.0
        %2029 = vmatpush.msra.mxu0 0.0
        %2030 = vmatpush.msra.mxu0 %v2013
        %2031 = vmatmul.f32.gmra.mxu0 %v2011
        %v2032 = vpop.f32.mrf.mxu0
        %v2033 = vadd.f32 0.0, %v2032
        %2034 = vdwg.mxu0
        %v2035 = vadd.f32 %v2005, %v2033
        %v2036 = vld [vmem:[%s471] sm:$0xf]
        %v2038 = vsel %vm389, %v2036, 0
        %v2040 = vsel %vm393, %v1937, 0
        %2042 = vmatpush.msra.mxu0 0.0
        %2043 = vmatpush.msra.mxu0 0.0
        %2044 = vmatpush.msra.mxu0 0.0
        %2045 = vmatpush.msra.mxu0 0.0
        %2046 = vmatpush.msra.mxu0 0.0
        %2047 = vmatpush.msra.mxu0 0.0
        %2048 = vmatpush.msra.mxu0 0.0
        %2049 = vmatpush.msra.mxu0 0.0
        %2050 = vmatpush.msra.mxu0 0.0
        %2051 = vmatpush.msra.mxu0 0.0
        %2052 = vmatpush.msra.mxu0 0.0
        %2053 = vmatpush.msra.mxu0 0.0
        %2054 = vmatpush.msra.mxu0 0.0
        %2055 = vmatpush.msra.mxu0 0.0
        %2056 = vmatpush.msra.mxu0 0.0
        %2057 = vmatpush.msra.mxu0 %v2040
        %2058 = vmatmul.f32.gmra.mxu0 %v2038
        %v2059 = vpop.f32.mrf.mxu0
        %v2060 = vadd.f32 0.0, %v2059
        %2061 = vdwg.mxu0
        %v2062 = vadd.f32 %v2035, %v2060
        %v2063 = vld [vmem:[%s499] sm:$0xf]
        %2064 = vrot.lane.b32.xlu0 %v1937, 127
        %v2065 = vpop.permute.xlu0 %2064
        %v2067 = vsel %vm389, %v2063, 0
        %v2069 = vsel %vm393, %v2065, 0
        %2071 = vmatpush.msra.mxu0 0.0
        %2072 = vmatpush.msra.mxu0 0.0
        %2073 = vmatpush.msra.mxu0 0.0
        %2074 = vmatpush.msra.mxu0 0.0
        %2075 = vmatpush.msra.mxu0 0.0
        %2076 = vmatpush.msra.mxu0 0.0
        %2077 = vmatpush.msra.mxu0 0.0
        %2078 = vmatpush.msra.mxu0 0.0
        %2079 = vmatpush.msra.mxu0 0.0
        %2080 = vmatpush.msra.mxu0 0.0
        %2081 = vmatpush.msra.mxu0 0.0
        %2082 = vmatpush.msra.mxu0 0.0
        %2083 = vmatpush.msra.mxu0 0.0
        %2084 = vmatpush.msra.mxu0 0.0
        %2085 = vmatpush.msra.mxu0 0.0
        %2086 = vmatpush.msra.mxu0 %v2069
        %2087 = vmatmul.f32.gmra.mxu0 %v2067
        %v2088 = vpop.f32.mrf.mxu0
        %v2089 = vadd.f32 0.0, %v2088
        %2090 = vdwg.mxu0
        %v2091 = vadd.f32 %v2062, %v2089
        %v2092 = vld [vmem:[%s527] sm:$0xf]
        %2093 = vrot.lane.b32.xlu0 %v1937, 126
        %v2094 = vpop.permute.xlu0 %2093
        %v2096 = vsel %vm389, %v2092, 0
        %v2098 = vsel %vm393, %v2094, 0
        %2100 = vmatpush.msra.mxu0 0.0
        %2101 = vmatpush.msra.mxu0 0.0
        %2102 = vmatpush.msra.mxu0 0.0
        %2103 = vmatpush.msra.mxu0 0.0
        %2104 = vmatpush.msra.mxu0 0.0
        %2105 = vmatpush.msra.mxu0 0.0
        %2106 = vmatpush.msra.mxu0 0.0
        %2107 = vmatpush.msra.mxu0 0.0
        %2108 = vmatpush.msra.mxu0 0.0
        %2109 = vmatpush.msra.mxu0 0.0
        %2110 = vmatpush.msra.mxu0 0.0
        %2111 = vmatpush.msra.mxu0 0.0
        %2112 = vmatpush.msra.mxu0 0.0
        %2113 = vmatpush.msra.mxu0 0.0
        %2114 = vmatpush.msra.mxu0 0.0
        %2115 = vmatpush.msra.mxu0 %v2098
        %2116 = vmatmul.f32.gmra.mxu0 %v2096
        %v2117 = vpop.f32.mrf.mxu0
        %v2118 = vadd.f32 0.0, %v2117
        %2119 = vdwg.mxu0
        %v2120 = vadd.f32 %v2091, %v2118
        %v2121 = vld [vmem:[%s557] sm:$0xf]
        %v2126 = vrot.slane %v1925, 7
        %v2127 = vsel %vm361, %v2126, %v1924
        %v2128 = vrot.slane %v1926, 6
        %v2129 = vsel %vm364, %v2128, %v2127
        %v2130 = vrot.slane %v1927, 5
        %v2131 = vsel %vm367, %v2130, %v2129
        %v2133 = vsel %vm389, %v2121, 0
        %v2135 = vsel %vm393, %v2131, 0
        %2137 = vmatpush.msra.mxu0 0.0
        %2138 = vmatpush.msra.mxu0 0.0
        %2139 = vmatpush.msra.mxu0 0.0
        %2140 = vmatpush.msra.mxu0 0.0
        %2141 = vmatpush.msra.mxu0 0.0
        %2142 = vmatpush.msra.mxu0 0.0
        %2143 = vmatpush.msra.mxu0 0.0
        %2144 = vmatpush.msra.mxu0 0.0
        %2145 = vmatpush.msra.mxu0 0.0
        %2146 = vmatpush.msra.mxu0 0.0
        %2147 = vmatpush.msra.mxu0 0.0
        %2148 = vmatpush.msra.mxu0 0.0
        %2149 = vmatpush.msra.mxu0 0.0
        %2150 = vmatpush.msra.mxu0 0.0
        %2151 = vmatpush.msra.mxu0 0.0
        %2152 = vmatpush.msra.mxu0 %v2135
        %2153 = vmatmul.f32.gmra.mxu0 %v2133
        %v2154 = vpop.f32.mrf.mxu0
        %v2155 = vadd.f32 0.0, %v2154
        %2156 = vdwg.mxu0
        %v2157 = vadd.f32 %v2120, %v2155
        %v2158 = vld [vmem:[%s595] sm:$0xf]
        %2159 = vrot.lane.b32.xlu0 %v2131, 127
        %v2160 = vpop.permute.xlu0 %2159
        %v2162 = vsel %vm389, %v2158, 0
        %v2164 = vsel %vm393, %v2160, 0
        %2166 = vmatpush.msra.mxu0 0.0
        %2167 = vmatpush.msra.mxu0 0.0
        %2168 = vmatpush.msra.mxu0 0.0
        %2169 = vmatpush.msra.mxu0 0.0
        %2170 = vmatpush.msra.mxu0 0.0
        %2171 = vmatpush.msra.mxu0 0.0
        %2172 = vmatpush.msra.mxu0 0.0
        %2173 = vmatpush.msra.mxu0 0.0
        %2174 = vmatpush.msra.mxu0 0.0
        %2175 = vmatpush.msra.mxu0 0.0
        %2176 = vmatpush.msra.mxu0 0.0
        %2177 = vmatpush.msra.mxu0 0.0
        %2178 = vmatpush.msra.mxu0 0.0
        %2179 = vmatpush.msra.mxu0 0.0
        %2180 = vmatpush.msra.mxu0 0.0
        %2181 = vmatpush.msra.mxu0 %v2164
        %2182 = vmatmul.f32.gmra.mxu0 %v2162
        %v2183 = vpop.f32.mrf.mxu0
        %v2184 = vadd.f32 0.0, %v2183
        %2185 = vdwg.mxu0
        %v2186 = vadd.f32 %v2157, %v2184
        %v2187 = vld [vmem:[%s625] sm:$0xf]
        %2188 = vrot.lane.b32.xlu0 %v2131, 126
        %v2189 = vpop.permute.xlu0 %2188
        %v2191 = vsel %vm389, %v2187, 0
        %v2193 = vsel %vm393, %v2189, 0
        %2195 = vmatpush.msra.mxu0 0.0
        %2196 = vmatpush.msra.mxu0 0.0
        %2197 = vmatpush.msra.mxu0 0.0
        %2198 = vmatpush.msra.mxu0 0.0
        %2199 = vmatpush.msra.mxu0 0.0
        %2200 = vmatpush.msra.mxu0 0.0
        %2201 = vmatpush.msra.mxu0 0.0
        %2202 = vmatpush.msra.mxu0 0.0
        %2203 = vmatpush.msra.mxu0 0.0
        %2204 = vmatpush.msra.mxu0 0.0
        %2205 = vmatpush.msra.mxu0 0.0
        %2206 = vmatpush.msra.mxu0 0.0
        %2207 = vmatpush.msra.mxu0 0.0
        %2208 = vmatpush.msra.mxu0 0.0
        %2209 = vmatpush.msra.mxu0 0.0
        %2210 = vmatpush.msra.mxu0 %v2193
        %2211 = vmatmul.f32.gmra.mxu0 %v2191
        %v2212 = vpop.f32.mrf.mxu0
        %v2213 = vadd.f32 0.0, %v2212
        %2214 = vdwg.mxu0
        %v2215 = vadd.f32 %v2186, %v2213
        %v2216 = vld [vmem:[%s3] sm:$0xf]
        %2218 = vset.pattern.permute.xlu0 0
        %2219 = vperm.xlu0 %2218, %v2216
        %v2220 = vpop.permute.xlu0 %2219
        %v2222 = vadd.f32 %v2215, %v2220
        %v2223 = vmax.f32 %v2222, 0.0
        %2225 = vrot.lane.b32.xlu0 %v2223, 80
        %v2226 = vpop.permute.xlu0 %2225
        %2228 = vst.msk [vmem:[%s343 + $0x4] sm:$0xf] %vm1941, %v2226
        %v2229 = vld [vmem:[%s298 + $0x6] sm:$0x1]
        %v2230 = vld [vmem:[%s298 + $0xe] sm:$0x1]
        %v2231 = vld [vmem:[%s298 + $0x16] sm:$0x1]
        %v2232 = vld [vmem:[%s298 + $0x1e] sm:$0x1]
        %v2233 = vld [vmem:[%s298 + $0x7] sm:$0x1]
        %v2234 = vld [vmem:[%s298 + $0xf] sm:$0x1]
        %v2235 = vld [vmem:[%s298 + $0x17] sm:$0x1]
        %v2236 = vld [vmem:[%s298 + $0x1f] sm:$0x1]
        %v2237 = vld [vmem:[%s305] sm:$0x1]
        %v2238 = vld [vmem:[%s305 + $0x8] sm:$0x1]
        %v2239 = vld [vmem:[%s305 + $0x10] sm:$0x1]
        %v2240 = vld [vmem:[%s305 + $0x18] sm:$0x1]
        %v2245 = vrot.slane %v2234, 7
        %v2246 = vsel %vm361, %v2245, %v2233
        %v2247 = vrot.slane %v2235, 6
        %v2248 = vsel %vm364, %v2247, %v2246
        %v2249 = vrot.slane %v2236, 5
        %v2250 = vsel %vm367, %v2249, %v2248
        %2251 = vrot.lane.b32.xlu0 %v2250, 95
        %v2252 = vpop.permute.xlu0 %2251
        %vm2254 = vcmask 913152
        %2255 = vst.msk [vmem:[%s343] sm:$0xf] %vm2254, %v2252
        %v2256 = vld [vmem:[%s2] sm:$0xf]
        %v2257 = vld [vmem:[%s375] sm:$0xf]
        %v2262 = vrot.slane %v2230, 7
        %v2263 = vsel %vm361, %v2262, %v2229
        %v2264 = vrot.slane %v2231, 6
        %v2265 = vsel %vm364, %v2264, %v2263
        %v2266 = vrot.slane %v2232, 5
        %v2267 = vsel %vm367, %v2266, %v2265
        %2268 = vrot.lane.b32.xlu0 %v2267, 127
        %v2269 = vpop.permute.xlu0 %2268
        %v2271 = vsel %vm389, %v2257, 0
        %v2273 = vsel %vm393, %v2269, 0
        %2275 = vmatpush.msra.mxu0 0.0
        %2276 = vmatpush.msra.mxu0 0.0
        %2277 = vmatpush.msra.mxu0 0.0
        %2278 = vmatpush.msra.mxu0 0.0
        %2279 = vmatpush.msra.mxu0 0.0
        %2280 = vmatpush.msra.mxu0 0.0
        %2281 = vmatpush.msra.mxu0 0.0
        %2282 = vmatpush.msra.mxu0 0.0
        %2283 = vmatpush.msra.mxu0 0.0
        %2284 = vmatpush.msra.mxu0 0.0
        %2285 = vmatpush.msra.mxu0 0.0
        %2286 = vmatpush.msra.mxu0 0.0
        %2287 = vmatpush.msra.mxu0 0.0
        %2288 = vmatpush.msra.mxu0 0.0
        %2289 = vmatpush.msra.mxu0 0.0
        %2290 = vmatpush.msra.mxu0 %v2273
        %2291 = vmatmul.f32.gmra.mxu0 %v2271
        %v2292 = vpop.f32.mrf.mxu0
        %v2293 = vadd.f32 0.0, %v2292
        %2294 = vdwg.mxu0
        %v2296 = vsel %vm389, %v2256, 0
        %v2298 = vsel %vm393, %v2267, 0
        %2300 = vmatpush.msra.mxu0 0.0
        %2301 = vmatpush.msra.mxu0 0.0
        %2302 = vmatpush.msra.mxu0 0.0
        %2303 = vmatpush.msra.mxu0 0.0
        %2304 = vmatpush.msra.mxu0 0.0
        %2305 = vmatpush.msra.mxu0 0.0
        %2306 = vmatpush.msra.mxu0 0.0
        %2307 = vmatpush.msra.mxu0 0.0
        %2308 = vmatpush.msra.mxu0 0.0
        %2309 = vmatpush.msra.mxu0 0.0
        %2310 = vmatpush.msra.mxu0 0.0
        %2311 = vmatpush.msra.mxu0 0.0
        %2312 = vmatpush.msra.mxu0 0.0
        %2313 = vmatpush.msra.mxu0 0.0
        %2314 = vmatpush.msra.mxu0 0.0
        %2315 = vmatpush.msra.mxu0 %v2298
        %2316 = vmatmul.f32.gmra.mxu0 %v2296
        %v2317 = vpop.f32.mrf.mxu0
        %v2318 = vadd.f32 %v2293, %v2317
        %2319 = vdwg.mxu0
        %v2320 = vld [vmem:[%s441] sm:$0xf]
        %2321 = vrot.lane.b32.xlu0 %v2267, 126
        %v2322 = vpop.permute.xlu0 %2321
        %v2324 = vsel %vm389, %v2320, 0
        %v2326 = vsel %vm393, %v2322, 0
        %2328 = vmatpush.msra.mxu0 0.0
        %2329 = vmatpush.msra.mxu0 0.0
        %2330 = vmatpush.msra.mxu0 0.0
        %2331 = vmatpush.msra.mxu0 0.0
        %2332 = vmatpush.msra.mxu0 0.0
        %2333 = vmatpush.msra.mxu0 0.0
        %2334 = vmatpush.msra.mxu0 0.0
        %2335 = vmatpush.msra.mxu0 0.0
        %2336 = vmatpush.msra.mxu0 0.0
        %2337 = vmatpush.msra.mxu0 0.0
        %2338 = vmatpush.msra.mxu0 0.0
        %2339 = vmatpush.msra.mxu0 0.0
        %2340 = vmatpush.msra.mxu0 0.0
        %2341 = vmatpush.msra.mxu0 0.0
        %2342 = vmatpush.msra.mxu0 0.0
        %2343 = vmatpush.msra.mxu0 %v2326
        %2344 = vmatmul.f32.gmra.mxu0 %v2324
        %v2345 = vpop.f32.mrf.mxu0
        %v2346 = vadd.f32 0.0, %v2345
        %2347 = vdwg.mxu0
        %v2348 = vadd.f32 %v2318, %v2346
        %v2349 = vld [vmem:[%s471] sm:$0xf]
        %v2351 = vsel %vm389, %v2349, 0
        %v2353 = vsel %vm393, %v2250, 0
        %2355 = vmatpush.msra.mxu0 0.0
        %2356 = vmatpush.msra.mxu0 0.0
        %2357 = vmatpush.msra.mxu0 0.0
        %2358 = vmatpush.msra.mxu0 0.0
        %2359 = vmatpush.msra.mxu0 0.0
        %2360 = vmatpush.msra.mxu0 0.0
        %2361 = vmatpush.msra.mxu0 0.0
        %2362 = vmatpush.msra.mxu0 0.0
        %2363 = vmatpush.msra.mxu0 0.0
        %2364 = vmatpush.msra.mxu0 0.0
        %2365 = vmatpush.msra.mxu0 0.0
        %2366 = vmatpush.msra.mxu0 0.0
        %2367 = vmatpush.msra.mxu0 0.0
        %2368 = vmatpush.msra.mxu0 0.0
        %2369 = vmatpush.msra.mxu0 0.0
        %2370 = vmatpush.msra.mxu0 %v2353
        %2371 = vmatmul.f32.gmra.mxu0 %v2351
        %v2372 = vpop.f32.mrf.mxu0
        %v2373 = vadd.f32 0.0, %v2372
        %2374 = vdwg.mxu0
        %v2375 = vadd.f32 %v2348, %v2373
        %v2376 = vld [vmem:[%s499] sm:$0xf]
        %2377 = vrot.lane.b32.xlu0 %v2250, 127
        %v2378 = vpop.permute.xlu0 %2377
        %v2380 = vsel %vm389, %v2376, 0
        %v2382 = vsel %vm393, %v2378, 0
        %2384 = vmatpush.msra.mxu0 0.0
        %2385 = vmatpush.msra.mxu0 0.0
        %2386 = vmatpush.msra.mxu0 0.0
        %2387 = vmatpush.msra.mxu0 0.0
        %2388 = vmatpush.msra.mxu0 0.0
        %2389 = vmatpush.msra.mxu0 0.0
        %2390 = vmatpush.msra.mxu0 0.0
        %2391 = vmatpush.msra.mxu0 0.0
        %2392 = vmatpush.msra.mxu0 0.0
        %2393 = vmatpush.msra.mxu0 0.0
        %2394 = vmatpush.msra.mxu0 0.0
        %2395 = vmatpush.msra.mxu0 0.0
        %2396 = vmatpush.msra.mxu0 0.0
        %2397 = vmatpush.msra.mxu0 0.0
        %2398 = vmatpush.msra.mxu0 0.0
        %2399 = vmatpush.msra.mxu0 %v2382
        %2400 = vmatmul.f32.gmra.mxu0 %v2380
        %v2401 = vpop.f32.mrf.mxu0
        %v2402 = vadd.f32 0.0, %v2401
        %2403 = vdwg.mxu0
        %v2404 = vadd.f32 %v2375, %v2402
        %v2405 = vld [vmem:[%s527] sm:$0xf]
        %2406 = vrot.lane.b32.xlu0 %v2250, 126
        %v2407 = vpop.permute.xlu0 %2406
        %v2409 = vsel %vm389, %v2405, 0
        %v2411 = vsel %vm393, %v2407, 0
        %2413 = vmatpush.msra.mxu0 0.0
        %2414 = vmatpush.msra.mxu0 0.0
        %2415 = vmatpush.msra.mxu0 0.0
        %2416 = vmatpush.msra.mxu0 0.0
        %2417 = vmatpush.msra.mxu0 0.0
        %2418 = vmatpush.msra.mxu0 0.0
        %2419 = vmatpush.msra.mxu0 0.0
        %2420 = vmatpush.msra.mxu0 0.0
        %2421 = vmatpush.msra.mxu0 0.0
        %2422 = vmatpush.msra.mxu0 0.0
        %2423 = vmatpush.msra.mxu0 0.0
        %2424 = vmatpush.msra.mxu0 0.0
        %2425 = vmatpush.msra.mxu0 0.0
        %2426 = vmatpush.msra.mxu0 0.0
        %2427 = vmatpush.msra.mxu0 0.0
        %2428 = vmatpush.msra.mxu0 %v2411
        %2429 = vmatmul.f32.gmra.mxu0 %v2409
        %v2430 = vpop.f32.mrf.mxu0
        %v2431 = vadd.f32 0.0, %v2430
        %2432 = vdwg.mxu0
        %v2433 = vadd.f32 %v2404, %v2431
        %v2434 = vld [vmem:[%s557] sm:$0xf]
        %v2439 = vrot.slane %v2238, 7
        %v2440 = vsel %vm361, %v2439, %v2237
        %v2441 = vrot.slane %v2239, 6
        %v2442 = vsel %vm364, %v2441, %v2440
        %v2443 = vrot.slane %v2240, 5
        %v2444 = vsel %vm367, %v2443, %v2442
        %v2446 = vsel %vm389, %v2434, 0
        %v2448 = vsel %vm393, %v2444, 0
        %2450 = vmatpush.msra.mxu0 0.0
        %2451 = vmatpush.msra.mxu0 0.0
        %2452 = vmatpush.msra.mxu0 0.0
        %2453 = vmatpush.msra.mxu0 0.0
        %2454 = vmatpush.msra.mxu0 0.0
        %2455 = vmatpush.msra.mxu0 0.0
        %2456 = vmatpush.msra.mxu0 0.0
        %2457 = vmatpush.msra.mxu0 0.0
        %2458 = vmatpush.msra.mxu0 0.0
        %2459 = vmatpush.msra.mxu0 0.0
        %2460 = vmatpush.msra.mxu0 0.0
        %2461 = vmatpush.msra.mxu0 0.0
        %2462 = vmatpush.msra.mxu0 0.0
        %2463 = vmatpush.msra.mxu0 0.0
        %2464 = vmatpush.msra.mxu0 0.0
        %2465 = vmatpush.msra.mxu0 %v2448
        %2466 = vmatmul.f32.gmra.mxu0 %v2446
        %v2467 = vpop.f32.mrf.mxu0
        %v2468 = vadd.f32 0.0, %v2467
        %2469 = vdwg.mxu0
        %v2470 = vadd.f32 %v2433, %v2468
        %v2471 = vld [vmem:[%s595] sm:$0xf]
        %2472 = vrot.lane.b32.xlu0 %v2444, 127
        %v2473 = vpop.permute.xlu0 %2472
        %v2475 = vsel %vm389, %v2471, 0
        %v2477 = vsel %vm393, %v2473, 0
        %2479 = vmatpush.msra.mxu0 0.0
        %2480 = vmatpush.msra.mxu0 0.0
        %2481 = vmatpush.msra.mxu0 0.0
        %2482 = vmatpush.msra.mxu0 0.0
        %2483 = vmatpush.msra.mxu0 0.0
        %2484 = vmatpush.msra.mxu0 0.0
        %2485 = vmatpush.msra.mxu0 0.0
        %2486 = vmatpush.msra.mxu0 0.0
        %2487 = vmatpush.msra.mxu0 0.0
        %2488 = vmatpush.msra.mxu0 0.0
        %2489 = vmatpush.msra.mxu0 0.0
        %2490 = vmatpush.msra.mxu0 0.0
        %2491 = vmatpush.msra.mxu0 0.0
        %2492 = vmatpush.msra.mxu0 0.0
        %2493 = vmatpush.msra.mxu0 0.0
        %2494 = vmatpush.msra.mxu0 %v2477
        %2495 = vmatmul.f32.gmra.mxu0 %v2475
        %v2496 = vpop.f32.mrf.mxu0
        %v2497 = vadd.f32 0.0, %v2496
        %2498 = vdwg.mxu0
        %v2499 = vadd.f32 %v2470, %v2497
        %v2500 = vld [vmem:[%s625] sm:$0xf]
        %2501 = vrot.lane.b32.xlu0 %v2444, 126
        %v2502 = vpop.permute.xlu0 %2501
        %v2504 = vsel %vm389, %v2500, 0
        %v2506 = vsel %vm393, %v2502, 0
        %2508 = vmatpush.msra.mxu0 0.0
        %2509 = vmatpush.msra.mxu0 0.0
        %2510 = vmatpush.msra.mxu0 0.0
        %2511 = vmatpush.msra.mxu0 0.0
        %2512 = vmatpush.msra.mxu0 0.0
        %2513 = vmatpush.msra.mxu0 0.0
        %2514 = vmatpush.msra.mxu0 0.0
        %2515 = vmatpush.msra.mxu0 0.0
        %2516 = vmatpush.msra.mxu0 0.0
        %2517 = vmatpush.msra.mxu0 0.0
        %2518 = vmatpush.msra.mxu0 0.0
        %2519 = vmatpush.msra.mxu0 0.0
        %2520 = vmatpush.msra.mxu0 0.0
        %2521 = vmatpush.msra.mxu0 0.0
        %2522 = vmatpush.msra.mxu0 0.0
        %2523 = vmatpush.msra.mxu0 %v2506
        %2524 = vmatmul.f32.gmra.mxu0 %v2504
        %v2525 = vpop.f32.mrf.mxu0
        %v2526 = vadd.f32 0.0, %v2525
        %2527 = vdwg.mxu0
        %v2528 = vadd.f32 %v2499, %v2526
        %v2529 = vld [vmem:[%s3] sm:$0xf]
        %2531 = vset.pattern.permute.xlu0 0
        %2532 = vperm.xlu0 %2531, %v2529
        %v2533 = vpop.permute.xlu0 %2532
        %v2535 = vadd.f32 %v2528, %v2533
        %v2536 = vmax.f32 %v2535, 0.0
        %2538 = vrot.lane.b32.xlu0 %v2536, 96
        %v2539 = vpop.permute.xlu0 %2538
        %2541 = vst.msk [vmem:[%s343 + $0x4] sm:$0xf] %vm2254, %v2539
        %v2542 = vld [vmem:[%s298 + $0x7] sm:$0x1]
        %v2543 = vld [vmem:[%s298 + $0xf] sm:$0x1]
        %v2544 = vld [vmem:[%s298 + $0x17] sm:$0x1]
        %v2545 = vld [vmem:[%s298 + $0x1f] sm:$0x1]
        %v2546 = vld [vmem:[%s305] sm:$0x1]
        %v2547 = vld [vmem:[%s305 + $0x8] sm:$0x1]
        %v2548 = vld [vmem:[%s305 + $0x10] sm:$0x1]
        %v2549 = vld [vmem:[%s305 + $0x18] sm:$0x1]
        %v2550 = vld [vmem:[%s305 + $0x1] sm:$0x1]
        %v2551 = vld [vmem:[%s305 + $0x9] sm:$0x1]
        %v2552 = vld [vmem:[%s305 + $0x11] sm:$0x1]
        %v2553 = vld [vmem:[%s305 + $0x19] sm:$0x1]
        %v2558 = vrot.slane %v2547, 7
        %v2559 = vsel %vm361, %v2558, %v2546
        %v2560 = vrot.slane %v2548, 6
        %v2561 = vsel %vm364, %v2560, %v2559
        %v2562 = vrot.slane %v2549, 5
        %v2563 = vsel %vm367, %v2562, %v2561
        %2564 = vrot.lane.b32.xlu0 %v2563, 111
        %v2565 = vpop.permute.xlu0 %2564
        %vm2567 = vcmask 1044352
        %2568 = vst.msk [vmem:[%s343] sm:$0xf] %vm2567, %v2565
        %v2569 = vld [vmem:[%s2] sm:$0xf]
        %v2570 = vld [vmem:[%s375] sm:$0xf]
        %v2575 = vrot.slane %v2543, 7
        %v2576 = vsel %vm361, %v2575, %v2542
        %v2577 = vrot.slane %v2544, 6
        %v2578 = vsel %vm364, %v2577, %v2576
        %v2579 = vrot.slane %v2545, 5
        %v2580 = vsel %vm367, %v2579, %v2578
        %2581 = vrot.lane.b32.xlu0 %v2580, 127
        %v2582 = vpop.permute.xlu0 %2581
        %v2584 = vsel %vm389, %v2570, 0
        %v2586 = vsel %vm393, %v2582, 0
        %2588 = vmatpush.msra.mxu0 0.0
        %2589 = vmatpush.msra.mxu0 0.0
        %2590 = vmatpush.msra.mxu0 0.0
        %2591 = vmatpush.msra.mxu0 0.0
        %2592 = vmatpush.msra.mxu0 0.0
        %2593 = vmatpush.msra.mxu0 0.0
        %2594 = vmatpush.msra.mxu0 0.0
        %2595 = vmatpush.msra.mxu0 0.0
        %2596 = vmatpush.msra.mxu0 0.0
        %2597 = vmatpush.msra.mxu0 0.0
        %2598 = vmatpush.msra.mxu0 0.0
        %2599 = vmatpush.msra.mxu0 0.0
        %2600 = vmatpush.msra.mxu0 0.0
        %2601 = vmatpush.msra.mxu0 0.0
        %2602 = vmatpush.msra.mxu0 0.0
        %2603 = vmatpush.msra.mxu0 %v2586
        %2604 = vmatmul.f32.gmra.mxu0 %v2584
        %v2605 = vpop.f32.mrf.mxu0
        %v2606 = vadd.f32 0.0, %v2605
        %2607 = vdwg.mxu0
        %v2609 = vsel %vm389, %v2569, 0
        %v2611 = vsel %vm393, %v2580, 0
        %2613 = vmatpush.msra.mxu0 0.0
        %2614 = vmatpush.msra.mxu0 0.0
        %2615 = vmatpush.msra.mxu0 0.0
        %2616 = vmatpush.msra.mxu0 0.0
        %2617 = vmatpush.msra.mxu0 0.0
        %2618 = vmatpush.msra.mxu0 0.0
        %2619 = vmatpush.msra.mxu0 0.0
        %2620 = vmatpush.msra.mxu0 0.0
        %2621 = vmatpush.msra.mxu0 0.0
        %2622 = vmatpush.msra.mxu0 0.0
        %2623 = vmatpush.msra.mxu0 0.0
        %2624 = vmatpush.msra.mxu0 0.0
        %2625 = vmatpush.msra.mxu0 0.0
        %2626 = vmatpush.msra.mxu0 0.0
        %2627 = vmatpush.msra.mxu0 0.0
        %2628 = vmatpush.msra.mxu0 %v2611
        %2629 = vmatmul.f32.gmra.mxu0 %v2609
        %v2630 = vpop.f32.mrf.mxu0
        %v2631 = vadd.f32 %v2606, %v2630
        %2632 = vdwg.mxu0
        %v2633 = vld [vmem:[%s441] sm:$0xf]
        %2634 = vrot.lane.b32.xlu0 %v2580, 126
        %v2635 = vpop.permute.xlu0 %2634
        %v2637 = vsel %vm389, %v2633, 0
        %v2639 = vsel %vm393, %v2635, 0
        %2641 = vmatpush.msra.mxu0 0.0
        %2642 = vmatpush.msra.mxu0 0.0
        %2643 = vmatpush.msra.mxu0 0.0
        %2644 = vmatpush.msra.mxu0 0.0
        %2645 = vmatpush.msra.mxu0 0.0
        %2646 = vmatpush.msra.mxu0 0.0
        %2647 = vmatpush.msra.mxu0 0.0
        %2648 = vmatpush.msra.mxu0 0.0
        %2649 = vmatpush.msra.mxu0 0.0
        %2650 = vmatpush.msra.mxu0 0.0
        %2651 = vmatpush.msra.mxu0 0.0
        %2652 = vmatpush.msra.mxu0 0.0
        %2653 = vmatpush.msra.mxu0 0.0
        %2654 = vmatpush.msra.mxu0 0.0
        %2655 = vmatpush.msra.mxu0 0.0
        %2656 = vmatpush.msra.mxu0 %v2639
        %2657 = vmatmul.f32.gmra.mxu0 %v2637
        %v2658 = vpop.f32.mrf.mxu0
        %v2659 = vadd.f32 0.0, %v2658
        %2660 = vdwg.mxu0
        %v2661 = vadd.f32 %v2631, %v2659
        %v2662 = vld [vmem:[%s471] sm:$0xf]
        %v2664 = vsel %vm389, %v2662, 0
        %v2666 = vsel %vm393, %v2563, 0
        %2668 = vmatpush.msra.mxu0 0.0
        %2669 = vmatpush.msra.mxu0 0.0
        %2670 = vmatpush.msra.mxu0 0.0
        %2671 = vmatpush.msra.mxu0 0.0
        %2672 = vmatpush.msra.mxu0 0.0
        %2673 = vmatpush.msra.mxu0 0.0
        %2674 = vmatpush.msra.mxu0 0.0
        %2675 = vmatpush.msra.mxu0 0.0
        %2676 = vmatpush.msra.mxu0 0.0
        %2677 = vmatpush.msra.mxu0 0.0
        %2678 = vmatpush.msra.mxu0 0.0
        %2679 = vmatpush.msra.mxu0 0.0
        %2680 = vmatpush.msra.mxu0 0.0
        %2681 = vmatpush.msra.mxu0 0.0
        %2682 = vmatpush.msra.mxu0 0.0
        %2683 = vmatpush.msra.mxu0 %v2666
        %2684 = vmatmul.f32.gmra.mxu0 %v2664
        %v2685 = vpop.f32.mrf.mxu0
        %v2686 = vadd.f32 0.0, %v2685
        %2687 = vdwg.mxu0
        %v2688 = vadd.f32 %v2661, %v2686
        %v2689 = vld [vmem:[%s499] sm:$0xf]
        %2690 = vrot.lane.b32.xlu0 %v2563, 127
        %v2691 = vpop.permute.xlu0 %2690
        %v2693 = vsel %vm389, %v2689, 0
        %v2695 = vsel %vm393, %v2691, 0
        %2697 = vmatpush.msra.mxu0 0.0
        %2698 = vmatpush.msra.mxu0 0.0
        %2699 = vmatpush.msra.mxu0 0.0
        %2700 = vmatpush.msra.mxu0 0.0
        %2701 = vmatpush.msra.mxu0 0.0
        %2702 = vmatpush.msra.mxu0 0.0
        %2703 = vmatpush.msra.mxu0 0.0
        %2704 = vmatpush.msra.mxu0 0.0
        %2705 = vmatpush.msra.mxu0 0.0
        %2706 = vmatpush.msra.mxu0 0.0
        %2707 = vmatpush.msra.mxu0 0.0
        %2708 = vmatpush.msra.mxu0 0.0
        %2709 = vmatpush.msra.mxu0 0.0
        %2710 = vmatpush.msra.mxu0 0.0
        %2711 = vmatpush.msra.mxu0 0.0
        %2712 = vmatpush.msra.mxu0 %v2695
        %2713 = vmatmul.f32.gmra.mxu0 %v2693
        %v2714 = vpop.f32.mrf.mxu0
        %v2715 = vadd.f32 0.0, %v2714
        %2716 = vdwg.mxu0
        %v2717 = vadd.f32 %v2688, %v2715
        %v2718 = vld [vmem:[%s527] sm:$0xf]
        %2719 = vrot.lane.b32.xlu0 %v2563, 126
        %v2720 = vpop.permute.xlu0 %2719
        %v2722 = vsel %vm389, %v2718, 0
        %v2724 = vsel %vm393, %v2720, 0
        %2726 = vmatpush.msra.mxu0 0.0
        %2727 = vmatpush.msra.mxu0 0.0
        %2728 = vmatpush.msra.mxu0 0.0
        %2729 = vmatpush.msra.mxu0 0.0
        %2730 = vmatpush.msra.mxu0 0.0
        %2731 = vmatpush.msra.mxu0 0.0
        %2732 = vmatpush.msra.mxu0 0.0
        %2733 = vmatpush.msra.mxu0 0.0
        %2734 = vmatpush.msra.mxu0 0.0
        %2735 = vmatpush.msra.mxu0 0.0
        %2736 = vmatpush.msra.mxu0 0.0
        %2737 = vmatpush.msra.mxu0 0.0
        %2738 = vmatpush.msra.mxu0 0.0
        %2739 = vmatpush.msra.mxu0 0.0
        %2740 = vmatpush.msra.mxu0 0.0
        %2741 = vmatpush.msra.mxu0 %v2724
        %2742 = vmatmul.f32.gmra.mxu0 %v2722
        %v2743 = vpop.f32.mrf.mxu0
        %v2744 = vadd.f32 0.0, %v2743
        %2745 = vdwg.mxu0
        %v2746 = vadd.f32 %v2717, %v2744
        %v2747 = vld [vmem:[%s557] sm:$0xf]
        %v2752 = vrot.slane %v2551, 7
        %v2753 = vsel %vm361, %v2752, %v2550
        %v2754 = vrot.slane %v2552, 6
        %v2755 = vsel %vm364, %v2754, %v2753
        %v2756 = vrot.slane %v2553, 5
        %v2757 = vsel %vm367, %v2756, %v2755
        %v2759 = vsel %vm389, %v2747, 0
        %v2761 = vsel %vm393, %v2757, 0
        %2763 = vmatpush.msra.mxu0 0.0
        %2764 = vmatpush.msra.mxu0 0.0
        %2765 = vmatpush.msra.mxu0 0.0
        %2766 = vmatpush.msra.mxu0 0.0
        %2767 = vmatpush.msra.mxu0 0.0
        %2768 = vmatpush.msra.mxu0 0.0
        %2769 = vmatpush.msra.mxu0 0.0
        %2770 = vmatpush.msra.mxu0 0.0
        %2771 = vmatpush.msra.mxu0 0.0
        %2772 = vmatpush.msra.mxu0 0.0
        %2773 = vmatpush.msra.mxu0 0.0
        %2774 = vmatpush.msra.mxu0 0.0
        %2775 = vmatpush.msra.mxu0 0.0
        %2776 = vmatpush.msra.mxu0 0.0
        %2777 = vmatpush.msra.mxu0 0.0
        %2778 = vmatpush.msra.mxu0 %v2761
        %2779 = vmatmul.f32.gmra.mxu0 %v2759
        %v2780 = vpop.f32.mrf.mxu0
        %v2781 = vadd.f32 0.0, %v2780
        %2782 = vdwg.mxu0
        %v2783 = vadd.f32 %v2746, %v2781
        %v2784 = vld [vmem:[%s595] sm:$0xf]
        %2785 = vrot.lane.b32.xlu0 %v2757, 127
        %v2786 = vpop.permute.xlu0 %2785
        %v2788 = vsel %vm389, %v2784, 0
        %v2790 = vsel %vm393, %v2786, 0
        %2792 = vmatpush.msra.mxu0 0.0
        %2793 = vmatpush.msra.mxu0 0.0
        %2794 = vmatpush.msra.mxu0 0.0
        %2795 = vmatpush.msra.mxu0 0.0
        %2796 = vmatpush.msra.mxu0 0.0
        %2797 = vmatpush.msra.mxu0 0.0
        %2798 = vmatpush.msra.mxu0 0.0
        %2799 = vmatpush.msra.mxu0 0.0
        %2800 = vmatpush.msra.mxu0 0.0
        %2801 = vmatpush.msra.mxu0 0.0
        %2802 = vmatpush.msra.mxu0 0.0
        %2803 = vmatpush.msra.mxu0 0.0
        %2804 = vmatpush.msra.mxu0 0.0
        %2805 = vmatpush.msra.mxu0 0.0
        %2806 = vmatpush.msra.mxu0 0.0
        %2807 = vmatpush.msra.mxu0 %v2790
        %2808 = vmatmul.f32.gmra.mxu0 %v2788
        %v2809 = vpop.f32.mrf.mxu0
        %v2810 = vadd.f32 0.0, %v2809
        %2811 = vdwg.mxu0
        %v2812 = vadd.f32 %v2783, %v2810
        %v2813 = vld [vmem:[%s625] sm:$0xf]
        %2814 = vrot.lane.b32.xlu0 %v2757, 126
        %v2815 = vpop.permute.xlu0 %2814
        %v2817 = vsel %vm389, %v2813, 0
        %v2819 = vsel %vm393, %v2815, 0
        %2821 = vmatpush.msra.mxu0 0.0
        %2822 = vmatpush.msra.mxu0 0.0
        %2823 = vmatpush.msra.mxu0 0.0
        %2824 = vmatpush.msra.mxu0 0.0
        %2825 = vmatpush.msra.mxu0 0.0
        %2826 = vmatpush.msra.mxu0 0.0
        %2827 = vmatpush.msra.mxu0 0.0
        %2828 = vmatpush.msra.mxu0 0.0
        %2829 = vmatpush.msra.mxu0 0.0
        %2830 = vmatpush.msra.mxu0 0.0
        %2831 = vmatpush.msra.mxu0 0.0
        %2832 = vmatpush.msra.mxu0 0.0
        %2833 = vmatpush.msra.mxu0 0.0
        %2834 = vmatpush.msra.mxu0 0.0
        %2835 = vmatpush.msra.mxu0 0.0
        %2836 = vmatpush.msra.mxu0 %v2819
        %2837 = vmatmul.f32.gmra.mxu0 %v2817
        %v2838 = vpop.f32.mrf.mxu0
        %v2839 = vadd.f32 0.0, %v2838
        %2840 = vdwg.mxu0
        %v2841 = vadd.f32 %v2812, %v2839
        %v2842 = vld [vmem:[%s3] sm:$0xf]
        %2844 = vset.pattern.permute.xlu0 0
        %2845 = vperm.xlu0 %2844, %v2842
        %v2846 = vpop.permute.xlu0 %2845
        %v2848 = vadd.f32 %v2841, %v2846
        %v2849 = vmax.f32 %v2848, 0.0
        %2851 = vrot.lane.b32.xlu0 %v2849, 112
        %v2852 = vpop.permute.xlu0 %2851
        %2854 = vst.msk [vmem:[%s343 + $0x4] sm:$0xf] %vm2567, %v2852
        %p2855 = scmp.lt.s32.totalorder %s19, 1
        %s2856 = scalar_select %p2855, %s19, 1
        %p2857 = scmp.lt.s32.totalorder %s20, 1
        %s2858 = scalar_select %p2857, %s20, 1
        %s2859 = smul.addr %s2856, 2
        %s2860 = sadd.s32 %s2858, %s2859
        %s2861 = smul.addr %s2860, 8
        %s2862 = scalar_lea.vmem %s4, %s2861
        // Predicated region
        $region113: #{pass2nd_skip_connection.1} parent=103 // pred_check
          %p2863 = pneg %p147
        $region114: #{pass2nd_skip_connection.1} parent=103 // pred_check_branch
          %2865 = sbr.rel (%p2863) target = $region116
        $region115: #{pass2nd_skip_connection.1} parent=103 // pred_region
          _
        $region116: #{pass2nd_skip_connection.1} parent=103 // pred_fallthru
          _
      $region104: #{pass2nd_skip_connection.1} parent=5 // pred_fallthru
        _
      %p2866 = scmp.le.s32.totalorder 2, %s10
      // Predicated region
      $region117: #{pass2nd_skip_connection.1} parent=5 // pred_check
        %p2867 = pneg %p2866
      $region118: #{pass2nd_skip_connection.1} parent=5 // pred_check_branch
        %2869 = sbr.rel (%p2867) target = $region120
      $region119: #{pass2nd_skip_connection.1} parent=5 // pred_region
        %s2870 = ssub.s32 %s10, 2
        // Predicated region
        $region121: #{pass2nd_skip_connection.1} parent=119 // pred_check
          %p2871 = pneg %p153
        $region122: #{pass2nd_skip_connection.1} parent=119 // pred_check_branch
          %2873 = sbr.rel (%p2871) target = $region124
        $region123: #{pass2nd_skip_connection.1} parent=119 // pred_region
          %p2874 = scmp.lt.s32.totalorder %s21, 1
          %s2875 = scalar_select %p2874, %s21, 1
          %p2876 = scmp.lt.s32.totalorder %s22, 1
          %s2877 = scalar_select %p2876, %s22, 1
          %s2878 = smul.addr %s2875, 2
          %s2879 = sadd.s32 %s2877, %s2878
          %s2880 = smul.addr %s2879, 8
          %s2881 = scalar_lea.vmem %s4, %s2880
        $region124: #{pass2nd_skip_connection.1} parent=119 // pred_fallthru
          _
      $region120: #{pass2nd_skip_connection.1} parent=5 // pred_fallthru
        _
    $region6: #{pass2nd_skip_connection.1} parent=1 // loop_footer
      %s14 = sadd.s32 1, %s10
    $region7: #{pass2nd_skip_connection.1} parent=1 // loop_footer_branch
      %9 = sbr.rel target = $region3
    $region8: #{pass2nd_skip_connection.1} parent=1 // loop_exit
      _

</llo_original>
